<compile_context>
chip_gen: v7x
topology: tpu7x:2x2x1
jax: 0.10.0
libtpu: 0.0.40
codegen_flags: <defaults>
</compile_context>

<pallas_src>
import jax
import jax.numpy as jnp
from jax import lax
from jax.experimental import pallas as pl
from jax.experimental.pallas import tpu as pltpu


def _round_width(width, multiplier, min_width=8, divisor=8):
    """Same as SEModule._round_width."""
    width *= multiplier
    min_width = min_width or divisor
    width_out = max(min_width, int(width + divisor / 2) // divisor * divisor)
    if width_out < 0.9 * width:
        width_out += divisor
    return int(width_out)


def block_x3d_kernel(x_ref, w1_ref, b1_ref, w2_ref, b2_ref,
                     sew1t_ref, seb1_ref, sew2_ref, seb2_ref,
                     w3_ref, b3_ref, out_ref, pad_ref):
    T, H, W, Cin = x_ref.shape
    Cp = w1_ref.shape[1]
    Cout = w3_ref.shape[1]
    THW = T * H * W

    x2d = x_ref[...].reshape(THW, Cin)

    # ---- conv1: 1x1x1 conv == channel matmul (BN1 scale pre-folded), ReLU ----
    # Channels stay in lanes for the MXU mapping: under-filled at demo channel
    # counts but correct/efficient for real X3D widths (24..432 channels).
    y = jnp.dot(x2d, w1_ref[...], preferred_element_type=jnp.float32)
    y = jnp.maximum(y + b1_ref[...], 0.0)

    # ---- conv2: depthwise 3x3x3, stride 1, pad 1 (BN2 scale pre-folded) ----
    # Zero only the 6 halo faces, then write the interior once (instead of
    # zero-filling the whole scratch and overwriting it: ~halves store traffic
    # in the conv2 prologue; vst is the scarcest slot on v5e).
    zt = jnp.zeros((1, H + 2, W + 2, Cp), jnp.float32)
    pad_ref[0:1, :, :, :] = zt
    pad_ref[T + 1:T + 2, :, :, :] = zt
    zh = jnp.zeros((T + 2, 1, W + 2, Cp), jnp.float32)
    pad_ref[:, 0:1, :, :] = zh
    pad_ref[:, H + 1:H + 2, :, :] = zh
    zw = jnp.zeros((T + 2, H + 2, 1, Cp), jnp.float32)
    pad_ref[:, :, 0:1, :] = zw
    pad_ref[:, :, W + 1:W + 2, :] = zw
    pad_ref[1:1 + T, 1:1 + H, 1:1 + W, :] = y.reshape(T, H, W, Cp)

    w2 = w2_ref[...]                                   # (27, Cp), BN2 folded
    acc = jnp.zeros((T, H, W, Cp), jnp.float32)
    # 27 taps; liveness is bounded by the sequential dependence through `acc`
    # (one window live at a time at this per-sample tile size).
    # TODO(synk): for large tiles, lane-pack W*Cp and express the kw shift with
    #   pltpu.roll so the sublane-unaligned window loads disappear.
    for kt in range(3):
        for kh in range(3):
            for kw in range(3):
                idx = (kt * 3 + kh) * 3 + kw
                win = pad_ref[kt:kt + T, kh:kh + H, kw:kw + W, :]
                acc = acc + win * w2[idx:idx + 1]      # (1, Cp) broadcast
    out2 = acc.reshape(THW, Cp) + b2_ref[...]          # BN2 shift

    # ---- SE module (VPU-only: broadcast-MAC + reduces; no MXU push/pop) ----
    s = jnp.mean(out2, axis=0, keepdims=True)                     # (1, Cp)
    h = jnp.sum(sew1t_ref[...] * s, axis=1, keepdims=True)        # (cb, 1)
    h = jnp.maximum(h + seb1_ref[...], 0.0)
    g = jnp.sum(sew2_ref[...] * h, axis=0, keepdims=True)         # (1, Cp)
    gate = jax.nn.sigmoid(g + seb2_ref[...])
    out2 = out2 * gate

    # ---- swish ----
    out2 = out2 * jax.nn.sigmoid(out2)

    # ---- conv3: 1x1x1 conv (BN3 scale pre-folded), shift, residual, ReLU ----
    out3 = jnp.dot(out2, w3_ref[...], preferred_element_type=jnp.float32)
    out3 = jnp.maximum(out3 + b3_ref[...] + x2d, 0.0)
    # TODO(synk): Cout < 128 makes the store lane-sparse (masked vst); a
    #   lane-dense (T, H*W*Cout) repack would speed the epilogue but costs an
    #   in-kernel relayout at these channel counts.
    out_ref[...] = out3.reshape(T, H, W, Cout)


def block_x3d(x, params):
    """BlockX3D forward (eval mode). spatial_stride=1, downsample=None only."""
    N, T, H, W, Cin = x.shape
    Cp = params["w1"].shape[1]
    Cout = params["w3"].shape[1]
    if Cout != Cin:
        raise ValueError(
            "identity residual requires outplanes == inplanes "
            f"(got Cin={Cin}, Cout={Cout}); downsample is not implemented")
    # TODO(synk): spatial_stride > 1 and the optional `downsample` module are
    # not implemented (identity residual path only), matching downsample=None.

    # Fold eval-mode BN scales into the conv weights (one-off, wrapper-side);
    # only the per-channel shifts remain as in-kernel adds.
    w1 = params["w1"] * params["bn1_scale"]            # (Cin, Cp)
    b1 = params["bn1_shift"]                           # (1, Cp)
    w2 = params["w2"] * params["bn2_scale"]            # (27, Cp)
    b2 = params["bn2_shift"]                           # (1, Cp)
    w3 = params["w3"] * params["bn3_scale"]            # (Cp, Cout)
    b3 = params["bn3_shift"]                           # (1, Cout)
    se_w1t = params["se_w1"].T                         # (cb, Cp)  VPU layout
    se_b1 = params["se_b1"].reshape(-1, 1)             # (cb, 1)
    se_w2 = params["se_w2"]                            # (cb, Cp)
    se_b2 = params["se_b2"]                            # (1, Cp)

    def resident(a):
        # Small weight/bias: whole array in VMEM, constant block index across
        # the grid (not re-fetched per step).
        nd = a.ndim
        return pl.BlockSpec(a.shape, lambda n: (0,) * nd)

    x_spec = pl.BlockSpec((None, T, H, W, Cin), lambda n: (n, 0, 0, 0, 0))
    out_spec = pl.BlockSpec((None, T, H, W, Cout), lambda n: (n, 0, 0, 0, 0))
    weights = (w1, b1, w2, b2, se_w1t, se_b1, se_w2, se_b2, w3, b3)

    return pl.pallas_call(
        block_x3d_kernel,
        out_shape=jax.ShapeDtypeStruct((N, T, H, W, Cout), jnp.float32),
        grid_spec=pltpu.PrefetchScalarGridSpec(
            num_scalar_prefetch=0,
            grid=(N,),                                   # one sample per step
            in_specs=[x_spec] + [resident(a) for a in weights],
            out_specs=out_spec,
            scratch_shapes=[
                pltpu.VMEM((T + 2, H + 2, W + 2, Cp), jnp.float32)],
        ),
        compiler_params=pltpu.CompilerParams(
            # batch axis is embarrassingly parallel -> v7x megacore shards it
            dimension_semantics=("parallel",),
            # fits under v7x's 64 MiB physical VMEM (previously 96 MiB)
            vmem_limit_bytes=48 * 1024 * 1024,
        ),
    )(x, *weights)


def init_params(key, inplanes, planes, outplanes, se_ratio):
    cb = _round_width(planes, se_ratio)
    keys = jax.random.split(key, 19)
    ki = iter(range(19))

    def nrm(shape, scale=0.1):
        return scale * jax.random.normal(keys[next(ki)], shape, jnp.float32)

    def bn_fold(c, eps=1e-5):
        gamma = 1.0 + 0.1 * jax.random.normal(keys[next(ki)], (c,), jnp.float32)
        beta = 0.1 * jax.random.normal(keys[next(ki)], (c,), jnp.float32)
        mean = 0.1 * jax.random.normal(keys[next(ki)], (c,), jnp.float32)
        var = jax.random.uniform(keys[next(ki)], (c,), jnp.float32, 0.5, 1.5)
        scale = gamma / jnp.sqrt(var + eps)
        shift = beta - mean * scale
        return scale[None, :], shift[None, :]

    p = {}
    p["w1"] = nrm((inplanes, planes))                 # conv1 (Cin,Cout)
    p["bn1_scale"], p["bn1_shift"] = bn_fold(planes)
    p["w2"] = nrm((27, planes))                       # depthwise 3x3x3 flattened
    p["bn2_scale"], p["bn2_shift"] = bn_fold(planes)
    p["se_w1"] = nrm((planes, cb))
    p["se_b1"] = nrm((1, cb))
    p["se_w2"] = nrm((cb, planes))
    p["se_b2"] = nrm((1, planes))
    p["w3"] = nrm((planes, outplanes))
    p["bn3_scale"], p["bn3_shift"] = bn_fold(outplanes)
    return p


def reference(x, params):
    """Pure-JAX reference of the same (eval-mode) forward."""
    N, T, H, W, Cin = x.shape
    Cp = params["w1"].shape[1]
    y = jnp.einsum("nthwc,cd->nthwd", x, params["w1"])
    y = jnp.maximum(y * params["bn1_scale"][0] + params["bn1_shift"][0], 0.0)
    wdw = params["w2"].reshape(3, 3, 3, 1, Cp)
    y2 = lax.conv_general_dilated(
        y, wdw, window_strides=(1, 1, 1), padding=((1, 1), (1, 1), (1, 1)),
        dimension_numbers=("NDHWC", "DHWIO", "NDHWC"), feature_group_count=Cp)
    y2 = y2 * params["bn2_scale"][0] + params["bn2_shift"][0]
    s = y2.mean(axis=(1, 2, 3))
    s = jnp.maximum(s @ params["se_w1"] + params["se_b1"][0], 0.0)
    gate = jax.nn.sigmoid(s @ params["se_w2"] + params["se_b2"][0])
    y2 = y2 * gate[:, None, None, None, :]
    y2 = y2 * jax.nn.sigmoid(y2)
    y3 = jnp.einsum("nthwc,co->nthwo", y2, params["w3"])
    y3 = y3 * params["bn3_scale"][0] + params["bn3_shift"][0]
    return jnp.maximum(y3 + x, 0.0)


if __name__ == "__main__":
    N, T, H, W = 2, 4, 8, 8
    inplanes, planes, outplanes = 8, 16, 8    # outplanes == inplanes (identity)
    se_ratio = 1.0 / 16

    key = jax.random.PRNGKey(0)
    kx, kp = jax.random.split(key)
    x = jax.random.normal(kx, (N, T, H, W, inplanes), jnp.float32)   # NDHWC
    params = init_params(kp, inplanes, planes, outplanes, se_ratio)

    out = jax.block_until_ready(block_x3d(x, params))
    assert out.shape == (N, T, H, W, outplanes)

    ref = jax.block_until_ready(reference(x, params))
    err = float(jnp.max(jnp.abs(out - ref)))
    assert jnp.allclose(out, ref, atol=1e-3, rtol=1e-3), f"max abs err {err}"

    print("KERNEL_OK")
</pallas_src>

<mosaic_0001>
module attributes {stable_mosaic.version = 11 : i64} {
  func.func @block_x3d_kernel(%arg0: i32, %arg1: memref<1x4x8x8x8xf32, #tpu.memory_space<vmem>>, %arg2: memref<8x16xf32, #tpu.memory_space<vmem>>, %arg3: memref<1x16xf32, #tpu.memory_space<vmem>>, %arg4: memref<27x16xf32, #tpu.memory_space<vmem>>, %arg5: memref<1x16xf32, #tpu.memory_space<vmem>>, %arg6: memref<8x16xf32, #tpu.memory_space<vmem>>, %arg7: memref<8x1xf32, #tpu.memory_space<vmem>>, %arg8: memref<8x16xf32, #tpu.memory_space<vmem>>, %arg9: memref<1x16xf32, #tpu.memory_space<vmem>>, %arg10: memref<16x8xf32, #tpu.memory_space<vmem>>, %arg11: memref<1x8xf32, #tpu.memory_space<vmem>>, %arg12: memref<1x4x8x8x8xf32, #tpu.memory_space<vmem>>, %arg13: memref<6x10x10x16xf32, #tpu.memory_space<vmem>>) attributes {dimension_semantics = [#tpu.dimension_semantics<parallel>], iteration_bounds = array<i64: 2>, scalar_prefetch = 0 : i64, scratch_operands = 1 : i64, tpu.core_type = #tpu.core_type<tc>, window_params = [{transform_indices = @transform_0, window_bounds = array<i64: 1, 4, 8, 8, 8>}, {pipeline_mode = #tpu.pipeline_mode<synchronous>, transform_indices = @transform_1, window_bounds = array<i64: 8, 16>}, {pipeline_mode = #tpu.pipeline_mode<synchronous>, transform_indices = @transform_2, window_bounds = array<i64: 1, 16>}, {pipeline_mode = #tpu.pipeline_mode<synchronous>, transform_indices = @transform_3, window_bounds = array<i64: 27, 16>}, {pipeline_mode = #tpu.pipeline_mode<synchronous>, transform_indices = @transform_4, window_bounds = array<i64: 1, 16>}, {pipeline_mode = #tpu.pipeline_mode<synchronous>, transform_indices = @transform_5, window_bounds = array<i64: 8, 16>}, {pipeline_mode = #tpu.pipeline_mode<synchronous>, transform_indices = @transform_6, window_bounds = array<i64: 8, 1>}, {pipeline_mode = #tpu.pipeline_mode<synchronous>, transform_indices = @transform_7, window_bounds = array<i64: 8, 16>}, {pipeline_mode = #tpu.pipeline_mode<synchronous>, transform_indices = @transform_8, window_bounds = array<i64: 1, 16>}, {pipeline_mode = #tpu.pipeline_mode<synchronous>, transform_indices = @transform_9, window_bounds = array<i64: 16, 8>}, {pipeline_mode = #tpu.pipeline_mode<synchronous>, transform_indices = @transform_10, window_bounds = array<i64: 1, 8>}, {transform_indices = @transform_11, window_bounds = array<i64: 1, 4, 8, 8, 8>}]} {
    %c0 = arith.constant 0 : index
    %c0_0 = arith.constant 0 : index
    %c0_1 = arith.constant 0 : index
    %c0_2 = arith.constant 0 : index
    %c0_3 = arith.constant 0 : index
    %0 = vector.load %arg1[%c0, %c0_0, %c0_1, %c0_2, %c0_3] : memref<1x4x8x8x8xf32, #tpu.memory_space<vmem>>, vector<1x4x8x8x8xf32>
    %1 = vector.shape_cast %0 : vector<1x4x8x8x8xf32> to vector<4x8x8x8xf32>
    %2 = vector.shape_cast %1 : vector<4x8x8x8xf32> to vector<256x8xf32>
    %c0_4 = arith.constant 0 : index
    %c0_5 = arith.constant 0 : index
    %3 = vector.load %arg2[%c0_4, %c0_5] : memref<8x16xf32, #tpu.memory_space<vmem>>, vector<8x16xf32>
    %cst = arith.constant dense<0.000000e+00> : vector<256x16xf32>
    %4 = tpu.matmul %2, %3, %cst {dimension_numbers = #tpu.dot_dimension_numbers<[1], [0], [0], [1], [0, 0, 1, 1], [], []>} : vector<256x8xf32>, vector<8x16xf32>, vector<256x16xf32> -> vector<256x16xf32>
    %c0_6 = arith.constant 0 : index
    %c0_7 = arith.constant 0 : index
    %5 = vector.load %arg3[%c0_6, %c0_7] : memref<1x16xf32, #tpu.memory_space<vmem>>, vector<1x16xf32>
    %6 = vector.broadcast %5 : vector<1x16xf32> to vector<256x16xf32>
    %7 = arith.addf %4, %6 : vector<256x16xf32>
    %cst_8 = arith.constant 0.000000e+00 : f32
    %8 = vector.broadcast %cst_8 : f32 to vector<256x16xf32>
    %9 = arith.maximumf %7, %8 : vector<256x16xf32>
    %cst_9 = arith.constant 0.000000e+00 : f32
    %10 = vector.broadcast %cst_9 : f32 to vector<1x10x10x16xf32>
    %c0_10 = arith.constant 0 : index
    %c0_11 = arith.constant 0 : index
    %c0_12 = arith.constant 0 : index
    %c0_13 = arith.constant 0 : index
    %11 = vector.load %arg13[%c0_10, %c0_11, %c0_12, %c0_13] : memref<6x10x10x16xf32, #tpu.memory_space<vmem>>, vector<1x10x10x16xf32>
    tpu.vector_store %arg13[%c0_10, %c0_11, %c0_12, %c0_13], %10 {strides = array<i32>} : memref<6x10x10x16xf32, #tpu.memory_space<vmem>>, vector<1x10x10x16xf32>,
    %c5 = arith.constant 5 : index
    %c0_14 = arith.constant 0 : index
    %c0_15 = arith.constant 0 : index
    %c0_16 = arith.constant 0 : index
    %12 = vector.load %arg13[%c5, %c0_14, %c0_15, %c0_16] : memref<6x10x10x16xf32, #tpu.memory_space<vmem>>, vector<1x10x10x16xf32>
    tpu.vector_store %arg13[%c5, %c0_14, %c0_15, %c0_16], %10 {strides = array<i32>} : memref<6x10x10x16xf32, #tpu.memory_space<vmem>>, vector<1x10x10x16xf32>,
    %cst_17 = arith.constant 0.000000e+00 : f32
    %13 = vector.broadcast %cst_17 : f32 to vector<6x1x10x16xf32>
    %c0_18 = arith.constant 0 : index
    %c0_19 = arith.constant 0 : index
    %c0_20 = arith.constant 0 : index
    %c0_21 = arith.constant 0 : index
    %14 = vector.load %arg13[%c0_18, %c0_19, %c0_20, %c0_21] : memref<6x10x10x16xf32, #tpu.memory_space<vmem>>, vector<6x1x10x16xf32>
    tpu.vector_store %arg13[%c0_18, %c0_19, %c0_20, %c0_21], %13 {strides = array<i32>} : memref<6x10x10x16xf32, #tpu.memory_space<vmem>>, vector<6x1x10x16xf32>,
    %c0_22 = arith.constant 0 : index
    %c9 = arith.constant 9 : index
    %c0_23 = arith.constant 0 : index
    %c0_24 = arith.constant 0 : index
    %15 = vector.load %arg13[%c0_22, %c9, %c0_23, %c0_24] : memref<6x10x10x16xf32, #tpu.memory_space<vmem>>, vector<6x1x10x16xf32>
    tpu.vector_store %arg13[%c0_22, %c9, %c0_23, %c0_24], %13 {strides = array<i32>} : memref<6x10x10x16xf32, #tpu.memory_space<vmem>>, vector<6x1x10x16xf32>,
    %cst_25 = arith.constant 0.000000e+00 : f32
    %16 = vector.broadcast %cst_25 : f32 to vector<6x10x1x16xf32>
    %c0_26 = arith.constant 0 : index
    %c0_27 = arith.constant 0 : index
    %c0_28 = arith.constant 0 : index
    %c0_29 = arith.constant 0 : index
    %17 = vector.load %arg13[%c0_26, %c0_27, %c0_28, %c0_29] : memref<6x10x10x16xf32, #tpu.memory_space<vmem>>, vector<6x10x1x16xf32>
    tpu.vector_store %arg13[%c0_26, %c0_27, %c0_28, %c0_29], %16 {strides = array<i32>} : memref<6x10x10x16xf32, #tpu.memory_space<vmem>>, vector<6x10x1x16xf32>,
    %c0_30 = arith.constant 0 : index
    %c0_31 = arith.constant 0 : index
    %c9_32 = arith.constant 9 : index
    %c0_33 = arith.constant 0 : index
    %18 = vector.load %arg13[%c0_30, %c0_31, %c9_32, %c0_33] : memref<6x10x10x16xf32, #tpu.memory_space<vmem>>, vector<6x10x1x16xf32>
    tpu.vector_store %arg13[%c0_30, %c0_31, %c9_32, %c0_33], %16 {strides = array<i32>} : memref<6x10x10x16xf32, #tpu.memory_space<vmem>>, vector<6x10x1x16xf32>,
    %19 = vector.shape_cast %9 : vector<256x16xf32> to vector<4x8x8x16xf32>
    %c1 = arith.constant 1 : index
    %c1_34 = arith.constant 1 : index
    %c1_35 = arith.constant 1 : index
    %c0_36 = arith.constant 0 : index
    %20 = vector.load %arg13[%c1, %c1_34, %c1_35, %c0_36] : memref<6x10x10x16xf32, #tpu.memory_space<vmem>>, vector<4x8x8x16xf32>
    tpu.vector_store %arg13[%c1, %c1_34, %c1_35, %c0_36], %19 {strides = array<i32>} : memref<6x10x10x16xf32, #tpu.memory_space<vmem>>, vector<4x8x8x16xf32>,
    %c0_37 = arith.constant 0 : index
    %c0_38 = arith.constant 0 : index
    %21 = vector.load %arg4[%c0_37, %c0_38] : memref<27x16xf32, #tpu.memory_space<vmem>>, vector<27x16xf32>
    %cst_39 = arith.constant 0.000000e+00 : f32
    %22 = vector.broadcast %cst_39 : f32 to vector<4x8x8x16xf32>
    %c0_40 = arith.constant 0 : index
    %c0_41 = arith.constant 0 : index
    %c0_42 = arith.constant 0 : index
    %c0_43 = arith.constant 0 : index
    %23 = vector.load %arg13[%c0_40, %c0_41, %c0_42, %c0_43] : memref<6x10x10x16xf32, #tpu.memory_space<vmem>>, vector<4x8x8x16xf32>
    %24 = vector.extract_strided_slice %21 {offsets = [0, 0], sizes = [1, 16], strides = [1, 1]} : vector<27x16xf32> to vector<1x16xf32>
    %25 = vector.shape_cast %24 : vector<1x16xf32> to vector<1x1x1x16xf32>
    %26 = vector.broadcast %25 : vector<1x1x1x16xf32> to vector<4x8x8x16xf32>
    %27 = arith.mulf %23, %26 : vector<4x8x8x16xf32>
    %28 = arith.addf %22, %27 : vector<4x8x8x16xf32>
    %c0_44 = arith.constant 0 : index
    %c0_45 = arith.constant 0 : index
    %c1_46 = arith.constant 1 : index
    %c0_47 = arith.constant 0 : index
    %29 = vector.load %arg13[%c0_44, %c0_45, %c1_46, %c0_47] : memref<6x10x10x16xf32, #tpu.memory_space<vmem>>, vector<4x8x8x16xf32>
    %30 = vector.extract_strided_slice %21 {offsets = [1, 0], sizes = [1, 16], strides = [1, 1]} : vector<27x16xf32> to vector<1x16xf32>
    %31 = vector.shape_cast %30 : vector<1x16xf32> to vector<1x1x1x16xf32>
    %32 = vector.broadcast %31 : vector<1x1x1x16xf32> to vector<4x8x8x16xf32>
    %33 = arith.mulf %29, %32 : vector<4x8x8x16xf32>
    %34 = arith.addf %28, %33 : vector<4x8x8x16xf32>
    %c0_48 = arith.constant 0 : index
    %c0_49 = arith.constant 0 : index
    %c2 = arith.constant 2 : index
    %c0_50 = arith.constant 0 : index
    %35 = vector.load %arg13[%c0_48, %c0_49, %c2, %c0_50] : memref<6x10x10x16xf32, #tpu.memory_space<vmem>>, vector<4x8x8x16xf32>
    %36 = vector.extract_strided_slice %21 {offsets = [2, 0], sizes = [1, 16], strides = [1, 1]} : vector<27x16xf32> to vector<1x16xf32>
    %37 = vector.shape_cast %36 : vector<1x16xf32> to vector<1x1x1x16xf32>
    %38 = vector.broadcast %37 : vector<1x1x1x16xf32> to vector<4x8x8x16xf32>
    %39 = arith.mulf %35, %38 : vector<4x8x8x16xf32>
    %40 = arith.addf %34, %39 : vector<4x8x8x16xf32>
    %c0_51 = arith.constant 0 : index
    %c1_52 = arith.constant 1 : index
    %c0_53 = arith.constant 0 : index
    %c0_54 = arith.constant 0 : index
    %41 = vector.load %arg13[%c0_51, %c1_52, %c0_53, %c0_54] : memref<6x10x10x16xf32, #tpu.memory_space<vmem>>, vector<4x8x8x16xf32>
    %42 = vector.extract_strided_slice %21 {offsets = [3, 0], sizes = [1, 16], strides = [1, 1]} : vector<27x16xf32> to vector<1x16xf32>
    %43 = vector.shape_cast %42 : vector<1x16xf32> to vector<1x1x1x16xf32>
    %44 = vector.broadcast %43 : vector<1x1x1x16xf32> to vector<4x8x8x16xf32>
    %45 = arith.mulf %41, %44 : vector<4x8x8x16xf32>
    %46 = arith.addf %40, %45 : vector<4x8x8x16xf32>
    %c0_55 = arith.constant 0 : index
    %c1_56 = arith.constant 1 : index
    %c1_57 = arith.constant 1 : index
    %c0_58 = arith.constant 0 : index
    %47 = vector.load %arg13[%c0_55, %c1_56, %c1_57, %c0_58] : memref<6x10x10x16xf32, #tpu.memory_space<vmem>>, vector<4x8x8x16xf32>
    %48 = vector.extract_strided_slice %21 {offsets = [4, 0], sizes = [1, 16], strides = [1, 1]} : vector<27x16xf32> to vector<1x16xf32>
    %49 = vector.shape_cast %48 : vector<1x16xf32> to vector<1x1x1x16xf32>
    %50 = vector.broadcast %49 : vector<1x1x1x16xf32> to vector<4x8x8x16xf32>
    %51 = arith.mulf %47, %50 : vector<4x8x8x16xf32>
    %52 = arith.addf %46, %51 : vector<4x8x8x16xf32>
    %c0_59 = arith.constant 0 : index
    %c1_60 = arith.constant 1 : index
    %c2_61 = arith.constant 2 : index
    %c0_62 = arith.constant 0 : index
    %53 = vector.load %arg13[%c0_59, %c1_60, %c2_61, %c0_62] : memref<6x10x10x16xf32, #tpu.memory_space<vmem>>, vector<4x8x8x16xf32>
    %54 = vector.extract_strided_slice %21 {offsets = [5, 0], sizes = [1, 16], strides = [1, 1]} : vector<27x16xf32> to vector<1x16xf32>
    %55 = vector.shape_cast %54 : vector<1x16xf32> to vector<1x1x1x16xf32>
    %56 = vector.broadcast %55 : vector<1x1x1x16xf32> to vector<4x8x8x16xf32>
    %57 = arith.mulf %53, %56 : vector<4x8x8x16xf32>
    %58 = arith.addf %52, %57 : vector<4x8x8x16xf32>
    %c0_63 = arith.constant 0 : index
    %c2_64 = arith.constant 2 : index
    %c0_65 = arith.constant 0 : index
    %c0_66 = arith.constant 0 : index
    %59 = vector.load %arg13[%c0_63, %c2_64, %c0_65, %c0_66] : memref<6x10x10x16xf32, #tpu.memory_space<vmem>>, vector<4x8x8x16xf32>
    %60 = vector.extract_strided_slice %21 {offsets = [6, 0], sizes = [1, 16], strides = [1, 1]} : vector<27x16xf32> to vector<1x16xf32>
    %61 = vector.shape_cast %60 : vector<1x16xf32> to vector<1x1x1x16xf32>
    %62 = vector.broadcast %61 : vector<1x1x1x16xf32> to vector<4x8x8x16xf32>
    %63 = arith.mulf %59, %62 : vector<4x8x8x16xf32>
    %64 = arith.addf %58, %63 : vector<4x8x8x16xf32>
    %c0_67 = arith.constant 0 : index
    %c2_68 = arith.constant 2 : index
    %c1_69 = arith.constant 1 : index
    %c0_70 = arith.constant 0 : index
    %65 = vector.load %arg13[%c0_67, %c2_68, %c1_69, %c0_70] : memref<6x10x10x16xf32, #tpu.memory_space<vmem>>, vector<4x8x8x16xf32>
    %66 = vector.extract_strided_slice %21 {offsets = [7, 0], sizes = [1, 16], strides = [1, 1]} : vector<27x16xf32> to vector<1x16xf32>
    %67 = vector.shape_cast %66 : vector<1x16xf32> to vector<1x1x1x16xf32>
    %68 = vector.broadcast %67 : vector<1x1x1x16xf32> to vector<4x8x8x16xf32>
    %69 = arith.mulf %65, %68 : vector<4x8x8x16xf32>
    %70 = arith.addf %64, %69 : vector<4x8x8x16xf32>
    %c0_71 = arith.constant 0 : index
    %c2_72 = arith.constant 2 : index
    %c2_73 = arith.constant 2 : index
    %c0_74 = arith.constant 0 : index
    %71 = vector.load %arg13[%c0_71, %c2_72, %c2_73, %c0_74] : memref<6x10x10x16xf32, #tpu.memory_space<vmem>>, vector<4x8x8x16xf32>
    %72 = vector.extract_strided_slice %21 {offsets = [8, 0], sizes = [1, 16], strides = [1, 1]} : vector<27x16xf32> to vector<1x16xf32>
    %73 = vector.shape_cast %72 : vector<1x16xf32> to vector<1x1x1x16xf32>
    %74 = vector.broadcast %73 : vector<1x1x1x16xf32> to vector<4x8x8x16xf32>
    %75 = arith.mulf %71, %74 : vector<4x8x8x16xf32>
    %76 = arith.addf %70, %75 : vector<4x8x8x16xf32>
    %c1_75 = arith.constant 1 : index
    %c0_76 = arith.constant 0 : index
    %c0_77 = arith.constant 0 : index
    %c0_78 = arith.constant 0 : index
    %77 = vector.load %arg13[%c1_75, %c0_76, %c0_77, %c0_78] : memref<6x10x10x16xf32, #tpu.memory_space<vmem>>, vector<4x8x8x16xf32>
    %78 = vector.extract_strided_slice %21 {offsets = [9, 0], sizes = [1, 16], strides = [1, 1]} : vector<27x16xf32> to vector<1x16xf32>
    %79 = vector.shape_cast %78 : vector<1x16xf32> to vector<1x1x1x16xf32>
    %80 = vector.broadcast %79 : vector<1x1x1x16xf32> to vector<4x8x8x16xf32>
    %81 = arith.mulf %77, %80 : vector<4x8x8x16xf32>
    %82 = arith.addf %76, %81 : vector<4x8x8x16xf32>
    %c1_79 = arith.constant 1 : index
    %c0_80 = arith.constant 0 : index
    %c1_81 = arith.constant 1 : index
    %c0_82 = arith.constant 0 : index
    %83 = vector.load %arg13[%c1_79, %c0_80, %c1_81, %c0_82] : memref<6x10x10x16xf32, #tpu.memory_space<vmem>>, vector<4x8x8x16xf32>
    %84 = vector.extract_strided_slice %21 {offsets = [10, 0], sizes = [1, 16], strides = [1, 1]} : vector<27x16xf32> to vector<1x16xf32>
    %85 = vector.shape_cast %84 : vector<1x16xf32> to vector<1x1x1x16xf32>
    %86 = vector.broadcast %85 : vector<1x1x1x16xf32> to vector<4x8x8x16xf32>
    %87 = arith.mulf %83, %86 : vector<4x8x8x16xf32>
    %88 = arith.addf %82, %87 : vector<4x8x8x16xf32>
    %c1_83 = arith.constant 1 : index
    %c0_84 = arith.constant 0 : index
    %c2_85 = arith.constant 2 : index
    %c0_86 = arith.constant 0 : index
    %89 = vector.load %arg13[%c1_83, %c0_84, %c2_85, %c0_86] : memref<6x10x10x16xf32, #tpu.memory_space<vmem>>, vector<4x8x8x16xf32>
    %90 = vector.extract_strided_slice %21 {offsets = [11, 0], sizes = [1, 16], strides = [1, 1]} : vector<27x16xf32> to vector<1x16xf32>
    %91 = vector.shape_cast %90 : vector<1x16xf32> to vector<1x1x1x16xf32>
    %92 = vector.broadcast %91 : vector<1x1x1x16xf32> to vector<4x8x8x16xf32>
    %93 = arith.mulf %89, %92 : vector<4x8x8x16xf32>
    %94 = arith.addf %88, %93 : vector<4x8x8x16xf32>
    %c1_87 = arith.constant 1 : index
    %c1_88 = arith.constant 1 : index
    %c0_89 = arith.constant 0 : index
    %c0_90 = arith.constant 0 : index
    %95 = vector.load %arg13[%c1_87, %c1_88, %c0_89, %c0_90] : memref<6x10x10x16xf32, #tpu.memory_space<vmem>>, vector<4x8x8x16xf32>
    %96 = vector.extract_strided_slice %21 {offsets = [12, 0], sizes = [1, 16], strides = [1, 1]} : vector<27x16xf32> to vector<1x16xf32>
    %97 = vector.shape_cast %96 : vector<1x16xf32> to vector<1x1x1x16xf32>
    %98 = vector.broadcast %97 : vector<1x1x1x16xf32> to vector<4x8x8x16xf32>
    %99 = arith.mulf %95, %98 : vector<4x8x8x16xf32>
    %100 = arith.addf %94, %99 : vector<4x8x8x16xf32>
    %c1_91 = arith.constant 1 : index
    %c1_92 = arith.constant 1 : index
    %c1_93 = arith.constant 1 : index
    %c0_94 = arith.constant 0 : index
    %101 = vector.load %arg13[%c1_91, %c1_92, %c1_93, %c0_94] : memref<6x10x10x16xf32, #tpu.memory_space<vmem>>, vector<4x8x8x16xf32>
    %102 = vector.extract_strided_slice %21 {offsets = [13, 0], sizes = [1, 16], strides = [1, 1]} : vector<27x16xf32> to vector<1x16xf32>
    %103 = vector.shape_cast %102 : vector<1x16xf32> to vector<1x1x1x16xf32>
    %104 = vector.broadcast %103 : vector<1x1x1x16xf32> to vector<4x8x8x16xf32>
    %105 = arith.mulf %101, %104 : vector<4x8x8x16xf32>
    %106 = arith.addf %100, %105 : vector<4x8x8x16xf32>
    %c1_95 = arith.constant 1 : index
    %c1_96 = arith.constant 1 : index
    %c2_97 = arith.constant 2 : index
    %c0_98 = arith.constant 0 : index
    %107 = vector.load %arg13[%c1_95, %c1_96, %c2_97, %c0_98] : memref<6x10x10x16xf32, #tpu.memory_space<vmem>>, vector<4x8x8x16xf32>
    %108 = vector.extract_strided_slice %21 {offsets = [14, 0], sizes = [1, 16], strides = [1, 1]} : vector<27x16xf32> to vector<1x16xf32>
    %109 = vector.shape_cast %108 : vector<1x16xf32> to vector<1x1x1x16xf32>
    %110 = vector.broadcast %109 : vector<1x1x1x16xf32> to vector<4x8x8x16xf32>
    %111 = arith.mulf %107, %110 : vector<4x8x8x16xf32>
    %112 = arith.addf %106, %111 : vector<4x8x8x16xf32>
    %c1_99 = arith.constant 1 : index
    %c2_100 = arith.constant 2 : index
    %c0_101 = arith.constant 0 : index
    %c0_102 = arith.constant 0 : index
    %113 = vector.load %arg13[%c1_99, %c2_100, %c0_101, %c0_102] : memref<6x10x10x16xf32, #tpu.memory_space<vmem>>, vector<4x8x8x16xf32>
    %114 = vector.extract_strided_slice %21 {offsets = [15, 0], sizes = [1, 16], strides = [1, 1]} : vector<27x16xf32> to vector<1x16xf32>
    %115 = vector.shape_cast %114 : vector<1x16xf32> to vector<1x1x1x16xf32>
    %116 = vector.broadcast %115 : vector<1x1x1x16xf32> to vector<4x8x8x16xf32>
    %117 = arith.mulf %113, %116 : vector<4x8x8x16xf32>
    %118 = arith.addf %112, %117 : vector<4x8x8x16xf32>
    %c1_103 = arith.constant 1 : index
    %c2_104 = arith.constant 2 : index
    %c1_105 = arith.constant 1 : index
    %c0_106 = arith.constant 0 : index
    %119 = vector.load %arg13[%c1_103, %c2_104, %c1_105, %c0_106] : memref<6x10x10x16xf32, #tpu.memory_space<vmem>>, vector<4x8x8x16xf32>
    %120 = vector.extract_strided_slice %21 {offsets = [16, 0], sizes = [1, 16], strides = [1, 1]} : vector<27x16xf32> to vector<1x16xf32>
    %121 = vector.shape_cast %120 : vector<1x16xf32> to vector<1x1x1x16xf32>
    %122 = vector.broadcast %121 : vector<1x1x1x16xf32> to vector<4x8x8x16xf32>
    %123 = arith.mulf %119, %122 : vector<4x8x8x16xf32>
    %124 = arith.addf %118, %123 : vector<4x8x8x16xf32>
    %c1_107 = arith.constant 1 : index
    %c2_108 = arith.constant 2 : index
    %c2_109 = arith.constant 2 : index
    %c0_110 = arith.constant 0 : index
    %125 = vector.load %arg13[%c1_107, %c2_108, %c2_109, %c0_110] : memref<6x10x10x16xf32, #tpu.memory_space<vmem>>, vector<4x8x8x16xf32>
    %126 = vector.extract_strided_slice %21 {offsets = [17, 0], sizes = [1, 16], strides = [1, 1]} : vector<27x16xf32> to vector<1x16xf32>
    %127 = vector.shape_cast %126 : vector<1x16xf32> to vector<1x1x1x16xf32>
    %128 = vector.broadcast %127 : vector<1x1x1x16xf32> to vector<4x8x8x16xf32>
    %129 = arith.mulf %125, %128 : vector<4x8x8x16xf32>
    %130 = arith.addf %124, %129 : vector<4x8x8x16xf32>
    %c2_111 = arith.constant 2 : index
    %c0_112 = arith.constant 0 : index
    %c0_113 = arith.constant 0 : index
    %c0_114 = arith.constant 0 : index
    %131 = vector.load %arg13[%c2_111, %c0_112, %c0_113, %c0_114] : memref<6x10x10x16xf32, #tpu.memory_space<vmem>>, vector<4x8x8x16xf32>
    %132 = vector.extract_strided_slice %21 {offsets = [18, 0], sizes = [1, 16], strides = [1, 1]} : vector<27x16xf32> to vector<1x16xf32>
    %133 = vector.shape_cast %132 : vector<1x16xf32> to vector<1x1x1x16xf32>
    %134 = vector.broadcast %133 : vector<1x1x1x16xf32> to vector<4x8x8x16xf32>
    %135 = arith.mulf %131, %134 : vector<4x8x8x16xf32>
    %136 = arith.addf %130, %135 : vector<4x8x8x16xf32>
    %c2_115 = arith.constant 2 : index
    %c0_116 = arith.constant 0 : index
    %c1_117 = arith.constant 1 : index
    %c0_118 = arith.constant 0 : index
    %137 = vector.load %arg13[%c2_115, %c0_116, %c1_117, %c0_118] : memref<6x10x10x16xf32, #tpu.memory_space<vmem>>, vector<4x8x8x16xf32>
    %138 = vector.extract_strided_slice %21 {offsets = [19, 0], sizes = [1, 16], strides = [1, 1]} : vector<27x16xf32> to vector<1x16xf32>
    %139 = vector.shape_cast %138 : vector<1x16xf32> to vector<1x1x1x16xf32>
    %140 = vector.broadcast %139 : vector<1x1x1x16xf32> to vector<4x8x8x16xf32>
    %141 = arith.mulf %137, %140 : vector<4x8x8x16xf32>
    %142 = arith.addf %136, %141 : vector<4x8x8x16xf32>
    %c2_119 = arith.constant 2 : index
    %c0_120 = arith.constant 0 : index
    %c2_121 = arith.constant 2 : index
    %c0_122 = arith.constant 0 : index
    %143 = vector.load %arg13[%c2_119, %c0_120, %c2_121, %c0_122] : memref<6x10x10x16xf32, #tpu.memory_space<vmem>>, vector<4x8x8x16xf32>
    %144 = vector.extract_strided_slice %21 {offsets = [20, 0], sizes = [1, 16], strides = [1, 1]} : vector<27x16xf32> to vector<1x16xf32>
    %145 = vector.shape_cast %144 : vector<1x16xf32> to vector<1x1x1x16xf32>
    %146 = vector.broadcast %145 : vector<1x1x1x16xf32> to vector<4x8x8x16xf32>
    %147 = arith.mulf %143, %146 : vector<4x8x8x16xf32>
    %148 = arith.addf %142, %147 : vector<4x8x8x16xf32>
    %c2_123 = arith.constant 2 : index
    %c1_124 = arith.constant 1 : index
    %c0_125 = arith.constant 0 : index
    %c0_126 = arith.constant 0 : index
    %149 = vector.load %arg13[%c2_123, %c1_124, %c0_125, %c0_126] : memref<6x10x10x16xf32, #tpu.memory_space<vmem>>, vector<4x8x8x16xf32>
    %150 = vector.extract_strided_slice %21 {offsets = [21, 0], sizes = [1, 16], strides = [1, 1]} : vector<27x16xf32> to vector<1x16xf32>
    %151 = vector.shape_cast %150 : vector<1x16xf32> to vector<1x1x1x16xf32>
    %152 = vector.broadcast %151 : vector<1x1x1x16xf32> to vector<4x8x8x16xf32>
    %153 = arith.mulf %149, %152 : vector<4x8x8x16xf32>
    %154 = arith.addf %148, %153 : vector<4x8x8x16xf32>
    %c2_127 = arith.constant 2 : index
    %c1_128 = arith.constant 1 : index
    %c1_129 = arith.constant 1 : index
    %c0_130 = arith.constant 0 : index
    %155 = vector.load %arg13[%c2_127, %c1_128, %c1_129, %c0_130] : memref<6x10x10x16xf32, #tpu.memory_space<vmem>>, vector<4x8x8x16xf32>
    %156 = vector.extract_strided_slice %21 {offsets = [22, 0], sizes = [1, 16], strides = [1, 1]} : vector<27x16xf32> to vector<1x16xf32>
    %157 = vector.shape_cast %156 : vector<1x16xf32> to vector<1x1x1x16xf32>
    %158 = vector.broadcast %157 : vector<1x1x1x16xf32> to vector<4x8x8x16xf32>
    %159 = arith.mulf %155, %158 : vector<4x8x8x16xf32>
    %160 = arith.addf %154, %159 : vector<4x8x8x16xf32>
    %c2_131 = arith.constant 2 : index
    %c1_132 = arith.constant 1 : index
    %c2_133 = arith.constant 2 : index
    %c0_134 = arith.constant 0 : index
    %161 = vector.load %arg13[%c2_131, %c1_132, %c2_133, %c0_134] : memref<6x10x10x16xf32, #tpu.memory_space<vmem>>, vector<4x8x8x16xf32>
    %162 = vector.extract_strided_slice %21 {offsets = [23, 0], sizes = [1, 16], strides = [1, 1]} : vector<27x16xf32> to vector<1x16xf32>
    %163 = vector.shape_cast %162 : vector<1x16xf32> to vector<1x1x1x16xf32>
    %164 = vector.broadcast %163 : vector<1x1x1x16xf32> to vector<4x8x8x16xf32>
    %165 = arith.mulf %161, %164 : vector<4x8x8x16xf32>
    %166 = arith.addf %160, %165 : vector<4x8x8x16xf32>
    %c2_135 = arith.constant 2 : index
    %c2_136 = arith.constant 2 : index
    %c0_137 = arith.constant 0 : index
    %c0_138 = arith.constant 0 : index
    %167 = vector.load %arg13[%c2_135, %c2_136, %c0_137, %c0_138] : memref<6x10x10x16xf32, #tpu.memory_space<vmem>>, vector<4x8x8x16xf32>
    %168 = vector.extract_strided_slice %21 {offsets = [24, 0], sizes = [1, 16], strides = [1, 1]} : vector<27x16xf32> to vector<1x16xf32>
    %169 = vector.shape_cast %168 : vector<1x16xf32> to vector<1x1x1x16xf32>
    %170 = vector.broadcast %169 : vector<1x1x1x16xf32> to vector<4x8x8x16xf32>
    %171 = arith.mulf %167, %170 : vector<4x8x8x16xf32>
    %172 = arith.addf %166, %171 : vector<4x8x8x16xf32>
    %c2_139 = arith.constant 2 : index
    %c2_140 = arith.constant 2 : index
    %c1_141 = arith.constant 1 : index
    %c0_142 = arith.constant 0 : index
    %173 = vector.load %arg13[%c2_139, %c2_140, %c1_141, %c0_142] : memref<6x10x10x16xf32, #tpu.memory_space<vmem>>, vector<4x8x8x16xf32>
    %174 = vector.extract_strided_slice %21 {offsets = [25, 0], sizes = [1, 16], strides = [1, 1]} : vector<27x16xf32> to vector<1x16xf32>
    %175 = vector.shape_cast %174 : vector<1x16xf32> to vector<1x1x1x16xf32>
    %176 = vector.broadcast %175 : vector<1x1x1x16xf32> to vector<4x8x8x16xf32>
    %177 = arith.mulf %173, %176 : vector<4x8x8x16xf32>
    %178 = arith.addf %172, %177 : vector<4x8x8x16xf32>
    %c2_143 = arith.constant 2 : index
    %c2_144 = arith.constant 2 : index
    %c2_145 = arith.constant 2 : index
    %c0_146 = arith.constant 0 : index
    %179 = vector.load %arg13[%c2_143, %c2_144, %c2_145, %c0_146] : memref<6x10x10x16xf32, #tpu.memory_space<vmem>>, vector<4x8x8x16xf32>
    %180 = vector.extract_strided_slice %21 {offsets = [26, 0], sizes = [1, 16], strides = [1, 1]} : vector<27x16xf32> to vector<1x16xf32>
    %181 = vector.shape_cast %180 : vector<1x16xf32> to vector<1x1x1x16xf32>
    %182 = vector.broadcast %181 : vector<1x1x1x16xf32> to vector<4x8x8x16xf32>
    %183 = arith.mulf %179, %182 : vector<4x8x8x16xf32>
    %184 = arith.addf %178, %183 : vector<4x8x8x16xf32>
    %185 = vector.shape_cast %184 : vector<4x8x8x16xf32> to vector<256x16xf32>
    %c0_147 = arith.constant 0 : index
    %c0_148 = arith.constant 0 : index
    %186 = vector.load %arg5[%c0_147, %c0_148] : memref<1x16xf32, #tpu.memory_space<vmem>>, vector<1x16xf32>
    %187 = vector.broadcast %186 : vector<1x16xf32> to vector<256x16xf32>
    %188 = arith.addf %185, %187 : vector<256x16xf32>
    %cst_149 = arith.constant dense<0.000000e+00> : vector<16xf32>
    %189 = vector.multi_reduction <add>, %188, %cst_149 [0] : vector<256x16xf32> to vector<16xf32>
    %190 = vector.shape_cast %189 : vector<16xf32> to vector<1x16xf32>
    %cst_150 = arith.constant 2.560000e+02 : f32
    %191 = vector.broadcast %cst_150 : f32 to vector<1x16xf32>
    %192 = arith.divf %190, %191 : vector<1x16xf32>
    %c0_151 = arith.constant 0 : index
    %c0_152 = arith.constant 0 : index
    %193 = vector.load %arg6[%c0_151, %c0_152] : memref<8x16xf32, #tpu.memory_space<vmem>>, vector<8x16xf32>
    %194 = vector.broadcast %192 : vector<1x16xf32> to vector<8x16xf32>
    %195 = arith.mulf %193, %194 : vector<8x16xf32>
    %cst_153 = arith.constant dense<0.000000e+00> : vector<8xf32>
    %196 = vector.multi_reduction <add>, %195, %cst_153 [1] : vector<8x16xf32> to vector<8xf32>
    %197 = vector.shape_cast %196 : vector<8xf32> to vector<8x1xf32>
    %c0_154 = arith.constant 0 : index
    %c0_155 = arith.constant 0 : index
    %198 = vector.load %arg7[%c0_154, %c0_155] : memref<8x1xf32, #tpu.memory_space<vmem>>, vector<8x1xf32>
    %199 = arith.addf %197, %198 : vector<8x1xf32>
    %cst_156 = arith.constant 0.000000e+00 : f32
    %200 = vector.broadcast %cst_156 : f32 to vector<8x1xf32>
    %201 = arith.maximumf %199, %200 : vector<8x1xf32>
    %c0_157 = arith.constant 0 : index
    %c0_158 = arith.constant 0 : index
    %202 = vector.load %arg8[%c0_157, %c0_158] : memref<8x16xf32, #tpu.memory_space<vmem>>, vector<8x16xf32>
    %203 = vector.broadcast %201 : vector<8x1xf32> to vector<8x16xf32>
    %204 = arith.mulf %202, %203 : vector<8x16xf32>
    %cst_159 = arith.constant dense<0.000000e+00> : vector<16xf32>
    %205 = vector.multi_reduction <add>, %204, %cst_159 [0] : vector<8x16xf32> to vector<16xf32>
    %206 = vector.shape_cast %205 : vector<16xf32> to vector<1x16xf32>
    %c0_160 = arith.constant 0 : index
    %c0_161 = arith.constant 0 : index
    %207 = vector.load %arg9[%c0_160, %c0_161] : memref<1x16xf32, #tpu.memory_space<vmem>>, vector<1x16xf32>
    %208 = arith.addf %206, %207 : vector<1x16xf32>
    %209 = arith.negf %208 : vector<1x16xf32>
    %210 = math.exp %209 : vector<1x16xf32>
    %cst_162 = arith.constant 1.000000e+00 : f32
    %211 = vector.broadcast %cst_162 : f32 to vector<1x16xf32>
    %212 = arith.addf %211, %210 : vector<1x16xf32>
    %213 = arith.divf %211, %212 : vector<1x16xf32>
    %214 = vector.broadcast %213 : vector<1x16xf32> to vector<256x16xf32>
    %215 = arith.mulf %188, %214 : vector<256x16xf32>
    %216 = arith.negf %215 : vector<256x16xf32>
    %217 = math.exp %216 : vector<256x16xf32>
    %cst_163 = arith.constant 1.000000e+00 : f32
    %218 = vector.broadcast %cst_163 : f32 to vector<256x16xf32>
    %219 = arith.addf %218, %217 : vector<256x16xf32>
    %220 = arith.divf %218, %219 : vector<256x16xf32>
    %221 = arith.mulf %215, %220 : vector<256x16xf32>
    %c0_164 = arith.constant 0 : index
    %c0_165 = arith.constant 0 : index
    %222 = vector.load %arg10[%c0_164, %c0_165] : memref<16x8xf32, #tpu.memory_space<vmem>>, vector<16x8xf32>
    %cst_166 = arith.constant dense<0.000000e+00> : vector<256x8xf32>
    %223 = tpu.matmul %221, %222, %cst_166 {dimension_numbers = #tpu.dot_dimension_numbers<[1], [0], [0], [1], [0, 0, 1, 1], [], []>} : vector<256x16xf32>, vector<16x8xf32>, vector<256x8xf32> -> vector<256x8xf32>
    %c0_167 = arith.constant 0 : index
    %c0_168 = arith.constant 0 : index
    %224 = vector.load %arg11[%c0_167, %c0_168] : memref<1x8xf32, #tpu.memory_space<vmem>>, vector<1x8xf32>
    %225 = vector.broadcast %224 : vector<1x8xf32> to vector<256x8xf32>
    %226 = arith.addf %223, %225 : vector<256x8xf32>
    %227 = arith.addf %226, %2 : vector<256x8xf32>
    %cst_169 = arith.constant 0.000000e+00 : f32
    %228 = vector.broadcast %cst_169 : f32 to vector<256x8xf32>
    %229 = arith.maximumf %227, %228 : vector<256x8xf32>
    %230 = vector.shape_cast %229 : vector<256x8xf32> to vector<4x8x8x8xf32>
    %c0_170 = arith.constant 0 : index
    %c0_171 = arith.constant 0 : index
    %c0_172 = arith.constant 0 : index
    %c0_173 = arith.constant 0 : index
    %c0_174 = arith.constant 0 : index
    %231 = vector.load %arg12[%c0_170, %c0_171, %c0_172, %c0_173, %c0_174] : memref<1x4x8x8x8xf32, #tpu.memory_space<vmem>>, vector<1x4x8x8x8xf32>
    %232 = vector.shape_cast %231 : vector<1x4x8x8x8xf32> to vector<4x8x8x8xf32>
    %233 = vector.shape_cast %230 : vector<4x8x8x8xf32> to vector<1x4x8x8x8xf32>
    tpu.vector_store %arg12[%c0_170, %c0_171, %c0_172, %c0_173, %c0_174], %233 {strides = array<i32>} : memref<1x4x8x8x8xf32, #tpu.memory_space<vmem>>, vector<1x4x8x8x8xf32>,
    return
  }
  func.func @transform_0(%arg0: i32) -> (i32, i32, i32, i32, i32) {
    %c0_i32 = arith.constant 0 : i32
    %c0_i32_0 = arith.constant 0 : i32
    %c0_i32_1 = arith.constant 0 : i32
    %c0_i32_2 = arith.constant 0 : i32
    %c0_i32_3 = arith.constant 0 : i32
    return %arg0, %c0_i32, %c0_i32_0, %c0_i32_1, %c0_i32_2 : i32, i32, i32, i32, i32
  }
  func.func @transform_1(%arg0: i32) -> (i32, i32) {
    %c0_i32 = arith.constant 0 : i32
    %c0_i32_0 = arith.constant 0 : i32
    %c0_i32_1 = arith.constant 0 : i32
    return %c0_i32, %c0_i32_0 : i32, i32
  }
  func.func @transform_2(%arg0: i32) -> (i32, i32) {
    %c0_i32 = arith.constant 0 : i32
    %c0_i32_0 = arith.constant 0 : i32
    %c0_i32_1 = arith.constant 0 : i32
    return %c0_i32, %c0_i32_0 : i32, i32
  }
  func.func @transform_3(%arg0: i32) -> (i32, i32) {
    %c0_i32 = arith.constant 0 : i32
    %c0_i32_0 = arith.constant 0 : i32
    %c0_i32_1 = arith.constant 0 : i32
    return %c0_i32, %c0_i32_0 : i32, i32
  }
  func.func @transform_4(%arg0: i32) -> (i32, i32) {
    %c0_i32 = arith.constant 0 : i32
    %c0_i32_0 = arith.constant 0 : i32
    %c0_i32_1 = arith.constant 0 : i32
    return %c0_i32, %c0_i32_0 : i32, i32
  }
  func.func @transform_5(%arg0: i32) -> (i32, i32) {
    %c0_i32 = arith.constant 0 : i32
    %c0_i32_0 = arith.constant 0 : i32
    %c0_i32_1 = arith.constant 0 : i32
    return %c0_i32, %c0_i32_0 : i32, i32
  }
  func.func @transform_6(%arg0: i32) -> (i32, i32) {
    %c0_i32 = arith.constant 0 : i32
    %c0_i32_0 = arith.constant 0 : i32
    %c0_i32_1 = arith.constant 0 : i32
    return %c0_i32, %c0_i32_0 : i32, i32
  }
  func.func @transform_7(%arg0: i32) -> (i32, i32) {
    %c0_i32 = arith.constant 0 : i32
    %c0_i32_0 = arith.constant 0 : i32
    %c0_i32_1 = arith.constant 0 : i32
    return %c0_i32, %c0_i32_0 : i32, i32
  }
  func.func @transform_8(%arg0: i32) -> (i32, i32) {
    %c0_i32 = arith.constant 0 : i32
    %c0_i32_0 = arith.constant 0 : i32
    %c0_i32_1 = arith.constant 0 : i32
    return %c0_i32, %c0_i32_0 : i32, i32
  }
  func.func @transform_9(%arg0: i32) -> (i32, i32) {
    %c0_i32 = arith.constant 0 : i32
    %c0_i32_0 = arith.constant 0 : i32
    %c0_i32_1 = arith.constant 0 : i32
    return %c0_i32, %c0_i32_0 : i32, i32
  }
  func.func @transform_10(%arg0: i32) -> (i32, i32) {
    %c0_i32 = arith.constant 0 : i32
    %c0_i32_0 = arith.constant 0 : i32
    %c0_i32_1 = arith.constant 0 : i32
    return %c0_i32, %c0_i32_0 : i32, i32
  }
  func.func @transform_11(%arg0: i32) -> (i32, i32, i32, i32, i32) {
    %c0_i32 = arith.constant 0 : i32
    %c0_i32_0 = arith.constant 0 : i32
    %c0_i32_1 = arith.constant 0 : i32
    %c0_i32_2 = arith.constant 0 : i32
    %c0_i32_3 = arith.constant 0 : i32
    return %arg0, %c0_i32, %c0_i32_0, %c0_i32_1, %c0_i32_2 : i32, i32, i32, i32, i32
  }
}

</mosaic_0001>

<llo_original>
// kernel: tpu_custom_call.1
$region0: #{tpu_custom_call.1}
  #allocation0 [shape = 'u32[]', space=smem, size = 0x4, offset = 0x4, fixed_abs, tag = 'smem constant byte address 0x4 - core index']
  #allocation1 [shape = 'u32[144,128]{1,0:T(1,128)}', space=vmem, size = 0x12000, scoped, tag = 'internal scratch']
  #allocation2 [shape = 'f32[6,10,10,16]{3,2,1,0:T(8,128)}', space=vmem, size = 0x78000, scoped, tag = 'scratch operand']
  %s0 = inlined_call_operand.hbm [shape: f32[2,4,8,8,8], index: 0, kind: input, shape index: {}]
  %s1 = inlined_call_operand.vmem [shape: f32[8,16], index: 1, kind: input, shape index: {}]
  %s2 = inlined_call_operand.vmem [shape: f32[1,16], index: 2, kind: input, shape index: {}]
  %s3 = inlined_call_operand.vmem [shape: f32[27,16], index: 3, kind: input, shape index: {}]
  %s4 = inlined_call_operand.vmem [shape: f32[1,16], index: 4, kind: input, shape index: {}]
  %s5 = inlined_call_operand.vmem [shape: f32[8,16], index: 5, kind: input, shape index: {}]
  %s6 = inlined_call_operand.vmem [shape: f32[8,1], index: 6, kind: input, shape index: {}]
  %s7 = inlined_call_operand.vmem [shape: f32[8,16], index: 7, kind: input, shape index: {}]
  %s8 = inlined_call_operand.vmem [shape: f32[1,16], index: 8, kind: input, shape index: {}]
  %s9 = inlined_call_operand.vmem [shape: f32[16,8], index: 9, kind: input, shape index: {}]
  %s10 = inlined_call_operand.vmem [shape: f32[1,8], index: 10, kind: input, shape index: {}]
  %s11 = inlined_call_operand.hbm [shape: f32[2,4,8,8,8], index: 11, kind: output, shape index: {}]
  %s12 = sld [smem:[#allocation0]]
  $region81: #{tpu_custom_call.1} parent=0
    _
  %s14 = ssub.s32 1, %s12
  %s15 = scalar_select 0, %s14, %s12
  $region1: #{tpu_custom_call.1} parent=0
    #allocation3 [shape = 'u8[262144]{0}', space=vmem, size = 0x40000, scoped, tag = 'input window, operand 0']
    #allocation4 [shape = 's32[2]{0}', space=sflag, size = 0x8, scoped, tag = 'scoped memory for tpu_custom_call.1']
    #allocation5 [shape = 's32[2]{0}', space=sflag, size = 0x8, scoped, tag = 'scoped memory for tpu_custom_call.1']
    #allocation6 [shape = 'u8[262144]{0}', space=vmem, size = 0x40000, scoped, tag = 'output window, operand 0']
    %16 = vsyncpa [#allocation4], 0
    %s17 = scalar_lea.sflag [#allocation4], 1
    %18 = vsyncpa %s17, 0
    %19 = vsyncpa [#allocation5], 0
    %s20 = scalar_lea.sflag [#allocation5], 1
    %21 = vsyncpa %s20, 0
    loop: start=0, step=1, limit=4
    $region2: #{tpu_custom_call.1} parent=1 // loop_pre_header
      _
    $region3: #{tpu_custom_call.1} parent=1 // loop_header
      %s23 = sphi 0, %s27
      %p24 = scmp.ge.s32.totalorder %s23, 4
      %s33 = sphi 0, %s35
      %s36 = sphi 0, %s33
      %s37 = sphi 0, %s36
      %s53 = sphi 0, %s37
      %s57 = sphi 0, %s57
      %s59 = sphi 0, %s57
      %s60 = sphi 0, %s59
      %s74 = sphi 0, %s60
      %s78 = sphi 0, %s78
      %s80 = sphi 0, %s78
      %s81 = sphi 0, %s80
      %s95 = sphi 0, %s81
      %s99 = sphi 0, %s99
      %s101 = sphi 0, %s99
      %s102 = sphi 0, %s101
      %s116 = sphi 0, %s102
      %s120 = sphi 0, %s120
      %s122 = sphi 0, %s120
      %s123 = sphi 0, %s122
      %s137 = sphi 0, %s123
      %s141 = sphi 0, %s141
      %s143 = sphi 0, %s141
      %s144 = sphi 0, %s143
      %s158 = sphi 0, %s144
      %s162 = sphi 0, %s162
      %s164 = sphi 0, %s162
      %s165 = sphi 0, %s164
      %s179 = sphi 0, %s165
      %s183 = sphi 0, %s183
      %s185 = sphi 0, %s183
      %s186 = sphi 0, %s185
      %s200 = sphi 0, %s186
      %s204 = sphi 0, %s204
      %s206 = sphi 0, %s204
      %s207 = sphi 0, %s206
      %s221 = sphi 0, %s207
      %s225 = sphi 0, %s225
      %s227 = sphi 0, %s225
      %s228 = sphi 0, %s227
      %s242 = sphi 0, %s228
      %s246 = sphi 0, %s246
      %s248 = sphi 0, %s246
      %s249 = sphi 0, %s248
      %s263 = sphi 0, %s249
      %s269 = sphi 0, %s271
      %s272 = sphi 0, %s269
      %s273 = sphi 0, %s272
      %s289 = sphi 0, %s273
    $region4: #{tpu_custom_call.1} parent=1 // loop_header_branch
      %26 = sbr.rel (%p24) target = $region8
    $region5: #{tpu_custom_call.1} parent=1 // loop_body
      %s28 = ssub.s32 %s23, 1
      %s29 = ssub.s32 %s23, 2
      %s30 = sadd.s32 %s23, 1
      %s31 = ssub.s32 %s23, %s30
      %p32 = scmp.eq.s32.totalorder %s31, 0
      %s34 = sadd.s32 %s33, 1
      %s35 = scalar_select %p32, %s33, %s34
      %p38 = pneg %p32
      %p39 = scmp.eq.s32.totalorder %s23, 1
      %p40 = por %p38, %p39
      %p41 = scmp.ne.s32.totalorder %s33, %s36
      %p42 = scmp.eq.s32.totalorder %s23, 0
      %p43 = por %p41, %p42
      %p44 = scmp.ne.s32.totalorder %s33, %s36
      %p45 = scmp.eq.s32.totalorder %s28, 1
      %p46 = por %p44, %p45
      %p47 = scmp.ne.s32.totalorder %s36, %s37
      %p48 = scmp.eq.s32.totalorder %s28, 0
      %p49 = por %p47, %p48
      %p50 = scmp.ne.s32.totalorder %s36, %s37
      %p51 = scmp.eq.s32.totalorder %s29, 1
      %p52 = por %p50, %p51
      %p54 = scmp.ne.s32.totalorder %s37, %s53
      %p55 = scmp.eq.s32.totalorder %s29, 0
      %p56 = por %p54, %p55
      %s58 = sadd.s32 %s57, 1
      %p61 = scmp.eq.s32.totalorder %s23, 1
      %p62 = scmp.ne.s32.totalorder %s57, %s59
      %p63 = scmp.eq.s32.totalorder %s23, 0
      %p64 = por %p62, %p63
      %p65 = scmp.ne.s32.totalorder %s57, %s59
      %p66 = scmp.eq.s32.totalorder %s28, 1
      %p67 = por %p65, %p66
      %p68 = scmp.ne.s32.totalorder %s59, %s60
      %p69 = scmp.eq.s32.totalorder %s28, 0
      %p70 = por %p68, %p69
      %p71 = scmp.ne.s32.totalorder %s59, %s60
      %p72 = scmp.eq.s32.totalorder %s29, 1
      %p73 = por %p71, %p72
      %p75 = scmp.ne.s32.totalorder %s60, %s74
      %p76 = scmp.eq.s32.totalorder %s29, 0
      %p77 = por %p75, %p76
      %s79 = sadd.s32 %s78, 1
      %p82 = scmp.eq.s32.totalorder %s23, 1
      %p83 = scmp.ne.s32.totalorder %s78, %s80
      %p84 = scmp.eq.s32.totalorder %s23, 0
      %p85 = por %p83, %p84
      %p86 = scmp.ne.s32.totalorder %s78, %s80
      %p87 = scmp.eq.s32.totalorder %s28, 1
      %p88 = por %p86, %p87
      %p89 = scmp.ne.s32.totalorder %s80, %s81
      %p90 = scmp.eq.s32.totalorder %s28, 0
      %p91 = por %p89, %p90
      %p92 = scmp.ne.s32.totalorder %s80, %s81
      %p93 = scmp.eq.s32.totalorder %s29, 1
      %p94 = por %p92, %p93
      %p96 = scmp.ne.s32.totalorder %s81, %s95
      %p97 = scmp.eq.s32.totalorder %s29, 0
      %p98 = por %p96, %p97
      %s100 = sadd.s32 %s99, 1
      %p103 = scmp.eq.s32.totalorder %s23, 1
      %p104 = scmp.ne.s32.totalorder %s99, %s101
      %p105 = scmp.eq.s32.totalorder %s23, 0
      %p106 = por %p104, %p105
      %p107 = scmp.ne.s32.totalorder %s99, %s101
      %p108 = scmp.eq.s32.totalorder %s28, 1
      %p109 = por %p107, %p108
      %p110 = scmp.ne.s32.totalorder %s101, %s102
      %p111 = scmp.eq.s32.totalorder %s28, 0
      %p112 = por %p110, %p111
      %p113 = scmp.ne.s32.totalorder %s101, %s102
      %p114 = scmp.eq.s32.totalorder %s29, 1
      %p115 = por %p113, %p114
      %p117 = scmp.ne.s32.totalorder %s102, %s116
      %p118 = scmp.eq.s32.totalorder %s29, 0
      %p119 = por %p117, %p118
      %s121 = sadd.s32 %s120, 1
      %p124 = scmp.eq.s32.totalorder %s23, 1
      %p125 = scmp.ne.s32.totalorder %s120, %s122
      %p126 = scmp.eq.s32.totalorder %s23, 0
      %p127 = por %p125, %p126
      %p128 = scmp.ne.s32.totalorder %s120, %s122
      %p129 = scmp.eq.s32.totalorder %s28, 1
      %p130 = por %p128, %p129
      %p131 = scmp.ne.s32.totalorder %s122, %s123
      %p132 = scmp.eq.s32.totalorder %s28, 0
      %p133 = por %p131, %p132
      %p134 = scmp.ne.s32.totalorder %s122, %s123
      %p135 = scmp.eq.s32.totalorder %s29, 1
      %p136 = por %p134, %p135
      %p138 = scmp.ne.s32.totalorder %s123, %s137
      %p139 = scmp.eq.s32.totalorder %s29, 0
      %p140 = por %p138, %p139
      %s142 = sadd.s32 %s141, 1
      %p145 = scmp.eq.s32.totalorder %s23, 1
      %p146 = scmp.ne.s32.totalorder %s141, %s143
      %p147 = scmp.eq.s32.totalorder %s23, 0
      %p148 = por %p146, %p147
      %p149 = scmp.ne.s32.totalorder %s141, %s143
      %p150 = scmp.eq.s32.totalorder %s28, 1
      %p151 = por %p149, %p150
      %p152 = scmp.ne.s32.totalorder %s143, %s144
      %p153 = scmp.eq.s32.totalorder %s28, 0
      %p154 = por %p152, %p153
      %p155 = scmp.ne.s32.totalorder %s143, %s144
      %p156 = scmp.eq.s32.totalorder %s29, 1
      %p157 = por %p155, %p156
      %p159 = scmp.ne.s32.totalorder %s144, %s158
      %p160 = scmp.eq.s32.totalorder %s29, 0
      %p161 = por %p159, %p160
      %s163 = sadd.s32 %s162, 1
      %p166 = scmp.eq.s32.totalorder %s23, 1
      %p167 = scmp.ne.s32.totalorder %s162, %s164
      %p168 = scmp.eq.s32.totalorder %s23, 0
      %p169 = por %p167, %p168
      %p170 = scmp.ne.s32.totalorder %s162, %s164
      %p171 = scmp.eq.s32.totalorder %s28, 1
      %p172 = por %p170, %p171
      %p173 = scmp.ne.s32.totalorder %s164, %s165
      %p174 = scmp.eq.s32.totalorder %s28, 0
      %p175 = por %p173, %p174
      %p176 = scmp.ne.s32.totalorder %s164, %s165
      %p177 = scmp.eq.s32.totalorder %s29, 1
      %p178 = por %p176, %p177
      %p180 = scmp.ne.s32.totalorder %s165, %s179
      %p181 = scmp.eq.s32.totalorder %s29, 0
      %p182 = por %p180, %p181
      %s184 = sadd.s32 %s183, 1
      %p187 = scmp.eq.s32.totalorder %s23, 1
      %p188 = scmp.ne.s32.totalorder %s183, %s185
      %p189 = scmp.eq.s32.totalorder %s23, 0
      %p190 = por %p188, %p189
      %p191 = scmp.ne.s32.totalorder %s183, %s185
      %p192 = scmp.eq.s32.totalorder %s28, 1
      %p193 = por %p191, %p192
      %p194 = scmp.ne.s32.totalorder %s185, %s186
      %p195 = scmp.eq.s32.totalorder %s28, 0
      %p196 = por %p194, %p195
      %p197 = scmp.ne.s32.totalorder %s185, %s186
      %p198 = scmp.eq.s32.totalorder %s29, 1
      %p199 = por %p197, %p198
      %p201 = scmp.ne.s32.totalorder %s186, %s200
      %p202 = scmp.eq.s32.totalorder %s29, 0
      %p203 = por %p201, %p202
      %s205 = sadd.s32 %s204, 1
      %p208 = scmp.eq.s32.totalorder %s23, 1
      %p209 = scmp.ne.s32.totalorder %s204, %s206
      %p210 = scmp.eq.s32.totalorder %s23, 0
      %p211 = por %p209, %p210
      %p212 = scmp.ne.s32.totalorder %s204, %s206
      %p213 = scmp.eq.s32.totalorder %s28, 1
      %p214 = por %p212, %p213
      %p215 = scmp.ne.s32.totalorder %s206, %s207
      %p216 = scmp.eq.s32.totalorder %s28, 0
      %p217 = por %p215, %p216
      %p218 = scmp.ne.s32.totalorder %s206, %s207
      %p219 = scmp.eq.s32.totalorder %s29, 1
      %p220 = por %p218, %p219
      %p222 = scmp.ne.s32.totalorder %s207, %s221
      %p223 = scmp.eq.s32.totalorder %s29, 0
      %p224 = por %p222, %p223
      %s226 = sadd.s32 %s225, 1
      %p229 = scmp.eq.s32.totalorder %s23, 1
      %p230 = scmp.ne.s32.totalorder %s225, %s227
      %p231 = scmp.eq.s32.totalorder %s23, 0
      %p232 = por %p230, %p231
      %p233 = scmp.ne.s32.totalorder %s225, %s227
      %p234 = scmp.eq.s32.totalorder %s28, 1
      %p235 = por %p233, %p234
      %p236 = scmp.ne.s32.totalorder %s227, %s228
      %p237 = scmp.eq.s32.totalorder %s28, 0
      %p238 = por %p236, %p237
      %p239 = scmp.ne.s32.totalorder %s227, %s228
      %p240 = scmp.eq.s32.totalorder %s29, 1
      %p241 = por %p239, %p240
      %p243 = scmp.ne.s32.totalorder %s228, %s242
      %p244 = scmp.eq.s32.totalorder %s29, 0
      %p245 = por %p243, %p244
      %s247 = sadd.s32 %s246, 1
      %p250 = scmp.eq.s32.totalorder %s23, 1
      %p251 = scmp.ne.s32.totalorder %s246, %s248
      %p252 = scmp.eq.s32.totalorder %s23, 0
      %p253 = por %p251, %p252
      %p254 = scmp.ne.s32.totalorder %s246, %s248
      %p255 = scmp.eq.s32.totalorder %s28, 1
      %p256 = por %p254, %p255
      %p257 = scmp.ne.s32.totalorder %s248, %s249
      %p258 = scmp.eq.s32.totalorder %s28, 0
      %p259 = por %p257, %p258
      %p260 = scmp.ne.s32.totalorder %s248, %s249
      %p261 = scmp.eq.s32.totalorder %s29, 1
      %p262 = por %p260, %p261
      %p264 = scmp.ne.s32.totalorder %s249, %s263
      %p265 = scmp.eq.s32.totalorder %s29, 0
      %p266 = por %p264, %p265
      %s267 = ssub.s32 %s23, %s30
      %p268 = scmp.eq.s32.totalorder %s267, 0
      %s270 = sadd.s32 %s269, 1
      %s271 = scalar_select %p268, %s269, %s270
      %p274 = pneg %p268
      %p275 = scmp.eq.s32.totalorder %s23, 1
      %p276 = por %p274, %p275
      %p277 = scmp.ne.s32.totalorder %s269, %s272
      %p278 = scmp.eq.s32.totalorder %s23, 0
      %p279 = por %p277, %p278
      %p280 = scmp.ne.s32.totalorder %s269, %s272
      %p281 = scmp.eq.s32.totalorder %s28, 1
      %p282 = por %p280, %p281
      %p283 = scmp.ne.s32.totalorder %s272, %s273
      %p284 = scmp.eq.s32.totalorder %s28, 0
      %p285 = por %p283, %p284
      %p286 = scmp.ne.s32.totalorder %s272, %s273
      %p287 = scmp.eq.s32.totalorder %s29, 1
      %p288 = por %p286, %p287
      %p290 = scmp.ne.s32.totalorder %s273, %s289
      %p291 = scmp.eq.s32.totalorder %s29, 0
      %p292 = por %p290, %p291
      %p293 = scmp.le.s32.totalorder 1, %s23
      %p294 = scmp.lt.s32.totalorder %s23, 3
      %p295 = pnand %p293, %p294
      %p296 = pneg %p295
      // Predicated region
      $region9: #{tpu_custom_call.1} parent=5 // pred_check
        _
      $region10: #{tpu_custom_call.1} parent=5 // pred_check_branch
        %298 = sbr.rel (%p295) target = $region12
      $region11: #{tpu_custom_call.1} parent=5 // pred_region
        %s299 = ssub.s32 %s23, 1
        // Predicated region
        $region13: #{tpu_custom_call.1} parent=11 // pred_check
          %p300 = pneg %p70
        $region14: #{tpu_custom_call.1} parent=11 // pred_check_branch
          %302 = sbr.rel (%p300) target = $region16
        $region15: #{tpu_custom_call.1} parent=11 // pred_region
          _
        $region16: #{tpu_custom_call.1} parent=11 // pred_fallthru
          _
        // Predicated region
        $region17: #{tpu_custom_call.1} parent=11 // pred_check
          %p303 = pneg %p91
        $region18: #{tpu_custom_call.1} parent=11 // pred_check_branch
          %305 = sbr.rel (%p303) target = $region20
        $region19: #{tpu_custom_call.1} parent=11 // pred_region
          _
        $region20: #{tpu_custom_call.1} parent=11 // pred_fallthru
          _
        // Predicated region
        $region21: #{tpu_custom_call.1} parent=11 // pred_check
          %p306 = pneg %p112
        $region22: #{tpu_custom_call.1} parent=11 // pred_check_branch
          %308 = sbr.rel (%p306) target = $region24
        $region23: #{tpu_custom_call.1} parent=11 // pred_region
          _
        $region24: #{tpu_custom_call.1} parent=11 // pred_fallthru
          _
        // Predicated region
        $region25: #{tpu_custom_call.1} parent=11 // pred_check
          %p309 = pneg %p133
        $region26: #{tpu_custom_call.1} parent=11 // pred_check_branch
          %311 = sbr.rel (%p309) target = $region28
        $region27: #{tpu_custom_call.1} parent=11 // pred_region
          _
        $region28: #{tpu_custom_call.1} parent=11 // pred_fallthru
          _
        // Predicated region
        $region29: #{tpu_custom_call.1} parent=11 // pred_check
          %p312 = pneg %p154
        $region30: #{tpu_custom_call.1} parent=11 // pred_check_branch
          %314 = sbr.rel (%p312) target = $region32
        $region31: #{tpu_custom_call.1} parent=11 // pred_region
          _
        $region32: #{tpu_custom_call.1} parent=11 // pred_fallthru
          _
        // Predicated region
        $region33: #{tpu_custom_call.1} parent=11 // pred_check
          %p315 = pneg %p175
        $region34: #{tpu_custom_call.1} parent=11 // pred_check_branch
          %317 = sbr.rel (%p315) target = $region36
        $region35: #{tpu_custom_call.1} parent=11 // pred_region
          _
        $region36: #{tpu_custom_call.1} parent=11 // pred_fallthru
          _
        // Predicated region
        $region37: #{tpu_custom_call.1} parent=11 // pred_check
          %p318 = pneg %p196
        $region38: #{tpu_custom_call.1} parent=11 // pred_check_branch
          %320 = sbr.rel (%p318) target = $region40
        $region39: #{tpu_custom_call.1} parent=11 // pred_region
          _
        $region40: #{tpu_custom_call.1} parent=11 // pred_fallthru
          _
        // Predicated region
        $region41: #{tpu_custom_call.1} parent=11 // pred_check
          %p321 = pneg %p217
        $region42: #{tpu_custom_call.1} parent=11 // pred_check_branch
          %323 = sbr.rel (%p321) target = $region44
        $region43: #{tpu_custom_call.1} parent=11 // pred_region
          _
        $region44: #{tpu_custom_call.1} parent=11 // pred_fallthru
          _
        // Predicated region
        $region45: #{tpu_custom_call.1} parent=11 // pred_check
          %p324 = pneg %p238
        $region46: #{tpu_custom_call.1} parent=11 // pred_check_branch
          %326 = sbr.rel (%p324) target = $region48
        $region47: #{tpu_custom_call.1} parent=11 // pred_region
          _
        $region48: #{tpu_custom_call.1} parent=11 // pred_fallthru
          _
        // Predicated region
        $region49: #{tpu_custom_call.1} parent=11 // pred_check
          %p327 = pneg %p259
        $region50: #{tpu_custom_call.1} parent=11 // pred_check_branch
          %329 = sbr.rel (%p327) target = $region52
        $region51: #{tpu_custom_call.1} parent=11 // pred_region
          _
        $region52: #{tpu_custom_call.1} parent=11 // pred_fallthru
          _
      $region12: #{tpu_custom_call.1} parent=5 // pred_fallthru
        _
      %p330 = scmp.lt.s32.totalorder %s23, 2
      // Predicated region
      $region53: #{tpu_custom_call.1} parent=5 // pred_check
        %p331 = pneg %p330
      $region54: #{tpu_custom_call.1} parent=5 // pred_check_branch
        %333 = sbr.rel (%p331) target = $region56
      $region55: #{tpu_custom_call.1} parent=5 // pred_region
        // Predicated region
        $region57: #{tpu_custom_call.1} parent=55 // pred_check
          %p334 = pneg %p43
        $region58: #{tpu_custom_call.1} parent=55 // pred_check_branch
          %336 = sbr.rel (%p334) target = $region60
        $region59: #{tpu_custom_call.1} parent=55 // pred_region
          %s337 = sand.u32 %s33, 1
          %s338 = scalar_lea.sflag [#allocation4], %s337
          %s339 = sand.u32 %s33, 1
          %s340 = smul.addr %s339, 256
          %s341 = scalar_lea.vmem [#allocation3], %s340
          %s343 = ssub.s32 4096, 4096
          %344 = vsyncadd %s338, %s343
          %s345 = smul.addr %s23, 32
          %s346 = smul.addr %s345, 128
          %s347 = scalar_lea.hbm %s0, %s346
          %s348 = sshll.u32 %s341, 4
          %s349 = int_to_ptr.vmem [resolvable:$true] %s348
          %354 = dma.hbm_to_vmem [thread:$0]  %s347, 4096, %s349, %s338, 128, 128, 8
        $region60: #{tpu_custom_call.1} parent=55 // pred_fallthru
          _
      $region56: #{tpu_custom_call.1} parent=5 // pred_fallthru
        _
      %p355 = scmp.le.s32.totalorder 1, %s23
      %p356 = scmp.lt.s32.totalorder %s23, 3
      %p357 = pnand %p355, %p356
      %p358 = pneg %p357
      // Predicated region
      $region61: #{tpu_custom_call.1} parent=5 // pred_check
        _
      $region62: #{tpu_custom_call.1} parent=5 // pred_check_branch
        %360 = sbr.rel (%p357) target = $region64
      $region63: #{tpu_custom_call.1} parent=5 // pred_region
        %s361 = ssub.s32 %s23, 1
        %s362 = sand.u32 %s36, 1
        %s363 = scalar_lea.sflag [#allocation4], %s362
        %s364 = sand.u32 %s36, 1
        %s365 = smul.addr %s364, 256
        %s366 = scalar_lea.vmem [#allocation3], %s365
        // Predicated region
        $region65: #{tpu_custom_call.1} parent=63 // pred_check
          %p367 = pneg %p49
        $region66: #{tpu_custom_call.1} parent=63 // pred_check_branch
          %369 = sbr.rel (%p367) target = $region68
        $region67: #{tpu_custom_call.1} parent=63 // pred_region
          %370 = dma.done %s363, 4096
        $region68: #{tpu_custom_call.1} parent=63 // pred_fallthru
          _
        %s371 = sand.u32 %s36, 1
        %s372 = scalar_lea.sflag [#allocation4], %s371
        %s373 = sand.u32 %s36, 1
        %s374 = smul.addr %s373, 256
        %s375 = scalar_lea.vmem [#allocation3], %s374
        %p376 = pneg %p49
        %p377 = pneg %p46
        %p378 = pneg %p70
        %p379 = pneg %p67
        %p380 = pneg %p91
        %p381 = pneg %p88
        %p382 = pneg %p112
        %p383 = pneg %p109
        %p384 = pneg %p133
        %p385 = pneg %p130
        %p386 = pneg %p154
        %p387 = pneg %p151
        %p388 = pneg %p175
        %p389 = pneg %p172
        %p390 = pneg %p196
        %p391 = pneg %p193
        %p392 = pneg %p217
        %p393 = pneg %p214
        %p394 = pneg %p238
        %p395 = pneg %p235
        %p396 = pneg %p259
        %p397 = pneg %p256
        %p398 = pneg %p285
        %p399 = pneg %p282
        %s400 = sand.u32 %s272, 1
        %s401 = scalar_lea.sflag [#allocation5], %s400
        %s402 = sand.u32 %s272, 1
        %s403 = smul.addr %s402, 256
        %s404 = scalar_lea.vmem [#allocation6], %s403
        %v405 = vld [vmem:[%s366] sm:$0xff]
        %v406 = vld [vmem:[%s366 + $0x8] sm:$0xff]
        %v407 = vld [vmem:[%s366 + $0x10] sm:$0xff]
        %v408 = vld [vmem:[%s366 + $0x18] sm:$0xff]
        %v409 = vld [vmem:[%s366 + $0x20] sm:$0xff]
        %v410 = vld [vmem:[%s366 + $0x28] sm:$0xff]
        %v411 = vld [vmem:[%s366 + $0x30] sm:$0xff]
        %v412 = vld [vmem:[%s366 + $0x38] sm:$0xff]
        %v413 = vld [vmem:[%s366 + $0x40] sm:$0xff]
        %v414 = vld [vmem:[%s366 + $0x48] sm:$0xff]
        %v415 = vld [vmem:[%s366 + $0x50] sm:$0xff]
        %v416 = vld [vmem:[%s366 + $0x58] sm:$0xff]
        %v417 = vld [vmem:[%s366 + $0x60] sm:$0xff]
        %v418 = vld [vmem:[%s366 + $0x68] sm:$0xff]
        %v419 = vld [vmem:[%s366 + $0x70] sm:$0xff]
        %v420 = vld [vmem:[%s366 + $0x78] sm:$0xff]
        %v421 = vld [vmem:[%s366 + $0x80] sm:$0xff]
        %v422 = vld [vmem:[%s366 + $0x88] sm:$0xff]
        %v423 = vld [vmem:[%s366 + $0x90] sm:$0xff]
        %v424 = vld [vmem:[%s366 + $0x98] sm:$0xff]
        %v425 = vld [vmem:[%s366 + $0xa0] sm:$0xff]
        %v426 = vld [vmem:[%s366 + $0xa8] sm:$0xff]
        %v427 = vld [vmem:[%s366 + $0xb0] sm:$0xff]
        %v428 = vld [vmem:[%s366 + $0xb8] sm:$0xff]
        %v429 = vld [vmem:[%s366 + $0xc0] sm:$0xff]
        %v430 = vld [vmem:[%s366 + $0xc8] sm:$0xff]
        %v431 = vld [vmem:[%s366 + $0xd0] sm:$0xff]
        %v432 = vld [vmem:[%s366 + $0xd8] sm:$0xff]
        %v433 = vld [vmem:[%s366 + $0xe0] sm:$0xff]
        %v434 = vld [vmem:[%s366 + $0xe8] sm:$0xff]
        %v435 = vld [vmem:[%s366 + $0xf0] sm:$0xff]
        %v436 = vld [vmem:[%s366 + $0xf8] sm:$0xff]
        %v437 = vld [vmem:[%s1] sm:$0xff]
        %v438 = vld [vmem:[%s2] sm:$0x1]
        %v440 = vlaneseq
        %v441 = vshrl.u32 %v440, 7
        %v442 = vsub.s32 0, %v441
        %v443 = vrot.slane %v438, %v442
        %vm445 = vcmask 64512
        %v447 = vsel %vm445, %v405, 0
        %v450 = vsel %vm445, %v406, 0
        %v453 = vsel %vm445, %v407, 0
        %v456 = vsel %vm445, %v408, 0
        %v459 = vsel %vm445, %v409, 0
        %v462 = vsel %vm445, %v410, 0
        %v465 = vsel %vm445, %v411, 0
        %v468 = vsel %vm445, %v412, 0
        %v471 = vsel %vm445, %v413, 0
        %v474 = vsel %vm445, %v414, 0
        %v477 = vsel %vm445, %v415, 0
        %v480 = vsel %vm445, %v416, 0
        %v483 = vsel %vm445, %v417, 0
        %v486 = vsel %vm445, %v418, 0
        %v489 = vsel %vm445, %v419, 0
        %v492 = vsel %vm445, %v420, 0
        %v495 = vsel %vm445, %v421, 0
        %v498 = vsel %vm445, %v422, 0
        %v501 = vsel %vm445, %v423, 0
        %v504 = vsel %vm445, %v424, 0
        %v507 = vsel %vm445, %v425, 0
        %v510 = vsel %vm445, %v426, 0
        %v513 = vsel %vm445, %v427, 0
        %v516 = vsel %vm445, %v428, 0
        %v519 = vsel %vm445, %v429, 0
        %v522 = vsel %vm445, %v430, 0
        %v525 = vsel %vm445, %v431, 0
        %v528 = vsel %vm445, %v432, 0
        %v531 = vsel %vm445, %v433, 0
        %v534 = vsel %vm445, %v434, 0
        %v537 = vsel %vm445, %v435, 0
        %v540 = vsel %vm445, %v436, 0
        %542 = vmatprep.subr.mxu0 0.0
        %543 = vmatpush1.msra.mxu0 %v437
        %544 = vmatprep.subr.mxu0 0.0
        %545 = vmatpush1.msra.mxu0 0.0
        %546 = vmatprep.subr.mxu0 0.0
        %547 = vmatpush1.msra.mxu0 0.0
        %548 = vmatprep.subr.mxu0 0.0
        %549 = vmatpush1.msra.mxu0 0.0
        %550 = vmatprep.subr.mxu0 0.0
        %551 = vmatpush1.msra.mxu0 0.0
        %552 = vmatprep.subr.mxu0 0.0
        %553 = vmatpush1.msra.mxu0 0.0
        %554 = vmatprep.subr.mxu0 0.0
        %555 = vmatpush1.msra.mxu0 0.0
        %556 = vmatprep.subr.mxu0 0.0
        %557 = vmatpush1.msra.mxu0 0.0
        %558 = vmatprep.subr.mxu0 0.0
        %559 = vmatpush1.msra.mxu0 0.0
        %560 = vmatprep.subr.mxu0 0.0
        %561 = vmatpush1.msra.mxu0 0.0
        %562 = vmatprep.subr.mxu0 0.0
        %563 = vmatpush1.msra.mxu0 0.0
        %564 = vmatprep.subr.mxu0 0.0
        %565 = vmatpush1.msra.mxu0 0.0
        %566 = vmatprep.subr.mxu0 0.0
        %567 = vmatpush1.msra.mxu0 0.0
        %568 = vmatprep.subr.mxu0 0.0
        %569 = vmatpush1.msra.mxu0 0.0
        %570 = vmatprep.subr.mxu0 0.0
        %571 = vmatpush1.msra.mxu0 0.0
        %572 = vmatprep.subr.mxu0 0.0
        %573 = vmatpush1.msra.mxu0 0.0
        %574 = vmatprep.subr.mxu0 0.0
        %575 = vmatpush1.msra.mxu0 0.0
        %576 = vmatprep.subr.mxu0 0.0
        %577 = vmatpush1.msra.mxu0 0.0
        %578 = vmatprep.subr.mxu0 0.0
        %579 = vmatpush1.msra.mxu0 0.0
        %580 = vmatprep.subr.mxu0 0.0
        %581 = vmatpush1.msra.mxu0 0.0
        %582 = vmatprep.subr.mxu0 0.0
        %583 = vmatpush1.msra.mxu0 0.0
        %584 = vmatprep.subr.mxu0 0.0
        %585 = vmatpush1.msra.mxu0 0.0
        %586 = vmatprep.subr.mxu0 0.0
        %587 = vmatpush1.msra.mxu0 0.0
        %588 = vmatprep.subr.mxu0 0.0
        %589 = vmatpush1.msra.mxu0 0.0
        %590 = vmatprep.subr.mxu0 0.0
        %591 = vmatpush1.msra.mxu0 0.0
        %592 = vmatprep.subr.mxu0 0.0
        %593 = vmatpush1.msra.mxu0 0.0
        %594 = vmatprep.subr.mxu0 0.0
        %595 = vmatpush1.msra.mxu0 0.0
        %596 = vmatprep.subr.mxu0 0.0
        %597 = vmatpush1.msra.mxu0 0.0
        %598 = vmatprep.subr.mxu0 0.0
        %599 = vmatpush1.msra.mxu0 0.0
        %600 = vmatprep.subr.mxu0 0.0
        %601 = vmatpush1.msra.mxu0 0.0
        %602 = vmatprep.subr.mxu0 0.0
        %603 = vmatpush1.msra.mxu0 0.0
        %604 = vmatprep.subr.mxu0 0.0
        %605 = vmatpush1.msra.mxu0 0.0
        %606 = vmatprep.mubr.f32.mxu0 0.0
        %607 = vmatmul.mubr.f32.gmra.mrb[0].mxu0 %v447
        %v608 = vpop.f32.mrb[0].mxu0
        %v609 = vadd.f32 %v443, %v608
        %v610 = vpop.f32.mrb[0].mxu0
        %611 = vmatprep.mubr.f32.mxu0 0.0
        %612 = vmatmul.mubr.f32.gmra.mrb[0].mxu0 %v450
        %v613 = vpop.f32.mrb[0].mxu0
        %v614 = vadd.f32 %v443, %v613
        %v615 = vpop.f32.mrb[0].mxu0
        %616 = vmatprep.mubr.f32.mxu0 0.0
        %617 = vmatmul.mubr.f32.gmra.mrb[0].mxu0 %v453
        %v618 = vpop.f32.mrb[0].mxu0
        %v619 = vadd.f32 %v443, %v618
        %v620 = vpop.f32.mrb[0].mxu0
        %621 = vmatprep.mubr.f32.mxu0 0.0
        %622 = vmatmul.mubr.f32.gmra.mrb[0].mxu0 %v456
        %v623 = vpop.f32.mrb[0].mxu0
        %v624 = vadd.f32 %v443, %v623
        %v625 = vpop.f32.mrb[0].mxu0
        %626 = vmatprep.mubr.f32.mxu0 0.0
        %627 = vmatmul.mubr.f32.gmra.mrb[0].mxu0 %v459
        %v628 = vpop.f32.mrb[0].mxu0
        %v629 = vadd.f32 %v443, %v628
        %v630 = vpop.f32.mrb[0].mxu0
        %631 = vmatprep.mubr.f32.mxu0 0.0
        %632 = vmatmul.mubr.f32.gmra.mrb[0].mxu0 %v462
        %v633 = vpop.f32.mrb[0].mxu0
        %v634 = vadd.f32 %v443, %v633
        %v635 = vpop.f32.mrb[0].mxu0
        %636 = vmatprep.mubr.f32.mxu0 0.0
        %637 = vmatmul.mubr.f32.gmra.mrb[0].mxu0 %v465
        %v638 = vpop.f32.mrb[0].mxu0
        %v639 = vadd.f32 %v443, %v638
        %v640 = vpop.f32.mrb[0].mxu0
        %641 = vmatprep.mubr.f32.mxu0 0.0
        %642 = vmatmul.mubr.f32.gmra.mrb[0].mxu0 %v468
        %v643 = vpop.f32.mrb[0].mxu0
        %v644 = vadd.f32 %v443, %v643
        %v645 = vpop.f32.mrb[0].mxu0
        %646 = vmatprep.mubr.f32.mxu0 0.0
        %647 = vmatmul.mubr.f32.gmra.mrb[0].mxu0 %v471
        %v648 = vpop.f32.mrb[0].mxu0
        %v649 = vadd.f32 %v443, %v648
        %v650 = vpop.f32.mrb[0].mxu0
        %651 = vmatprep.mubr.f32.mxu0 0.0
        %652 = vmatmul.mubr.f32.gmra.mrb[0].mxu0 %v474
        %v653 = vpop.f32.mrb[0].mxu0
        %v654 = vadd.f32 %v443, %v653
        %v655 = vpop.f32.mrb[0].mxu0
        %656 = vmatprep.mubr.f32.mxu0 0.0
        %657 = vmatmul.mubr.f32.gmra.mrb[0].mxu0 %v477
        %v658 = vpop.f32.mrb[0].mxu0
        %v659 = vadd.f32 %v443, %v658
        %v660 = vpop.f32.mrb[0].mxu0
        %661 = vmatprep.mubr.f32.mxu0 0.0
        %662 = vmatmul.mubr.f32.gmra.mrb[0].mxu0 %v480
        %v663 = vpop.f32.mrb[0].mxu0
        %v664 = vadd.f32 %v443, %v663
        %v665 = vpop.f32.mrb[0].mxu0
        %666 = vmatprep.mubr.f32.mxu0 0.0
        %667 = vmatmul.mubr.f32.gmra.mrb[0].mxu0 %v483
        %v668 = vpop.f32.mrb[0].mxu0
        %v669 = vadd.f32 %v443, %v668
        %v670 = vpop.f32.mrb[0].mxu0
        %671 = vmatprep.mubr.f32.mxu0 0.0
        %672 = vmatmul.mubr.f32.gmra.mrb[0].mxu0 %v486
        %v673 = vpop.f32.mrb[0].mxu0
        %v674 = vadd.f32 %v443, %v673
        %v675 = vpop.f32.mrb[0].mxu0
        %676 = vmatprep.mubr.f32.mxu0 0.0
        %677 = vmatmul.mubr.f32.gmra.mrb[0].mxu0 %v489
        %v678 = vpop.f32.mrb[0].mxu0
        %v679 = vadd.f32 %v443, %v678
        %v680 = vpop.f32.mrb[0].mxu0
        %681 = vmatprep.mubr.f32.mxu0 0.0
        %682 = vmatmul.mubr.f32.gmra.mrb[0].mxu0 %v492
        %v683 = vpop.f32.mrb[0].mxu0
        %v684 = vadd.f32 %v443, %v683
        %v685 = vpop.f32.mrb[0].mxu0
        %686 = vmatprep.mubr.f32.mxu0 0.0
        %687 = vmatmul.mubr.f32.gmra.mrb[0].mxu0 %v495
        %v688 = vpop.f32.mrb[0].mxu0
        %v689 = vadd.f32 %v443, %v688
        %v690 = vpop.f32.mrb[0].mxu0
        %691 = vmatprep.mubr.f32.mxu0 0.0
        %692 = vmatmul.mubr.f32.gmra.mrb[0].mxu0 %v498
        %v693 = vpop.f32.mrb[0].mxu0
        %v694 = vadd.f32 %v443, %v693
        %v695 = vpop.f32.mrb[0].mxu0
        %696 = vmatprep.mubr.f32.mxu0 0.0
        %697 = vmatmul.mubr.f32.gmra.mrb[0].mxu0 %v501
        %v698 = vpop.f32.mrb[0].mxu0
        %v699 = vadd.f32 %v443, %v698
        %v700 = vpop.f32.mrb[0].mxu0
        %701 = vmatprep.mubr.f32.mxu0 0.0
        %702 = vmatmul.mubr.f32.gmra.mrb[0].mxu0 %v504
        %v703 = vpop.f32.mrb[0].mxu0
        %v704 = vadd.f32 %v443, %v703
        %v705 = vpop.f32.mrb[0].mxu0
        %706 = vmatprep.mubr.f32.mxu0 0.0
        %707 = vmatmul.mubr.f32.gmra.mrb[0].mxu0 %v507
        %v708 = vpop.f32.mrb[0].mxu0
        %v709 = vadd.f32 %v443, %v708
        %v710 = vpop.f32.mrb[0].mxu0
        %711 = vmatprep.mubr.f32.mxu0 0.0
        %712 = vmatmul.mubr.f32.gmra.mrb[0].mxu0 %v510
        %v713 = vpop.f32.mrb[0].mxu0
        %v714 = vadd.f32 %v443, %v713
        %v715 = vpop.f32.mrb[0].mxu0
        %716 = vmatprep.mubr.f32.mxu0 0.0
        %717 = vmatmul.mubr.f32.gmra.mrb[0].mxu0 %v513
        %v718 = vpop.f32.mrb[0].mxu0
        %v719 = vadd.f32 %v443, %v718
        %v720 = vpop.f32.mrb[0].mxu0
        %721 = vmatprep.mubr.f32.mxu0 0.0
        %722 = vmatmul.mubr.f32.gmra.mrb[0].mxu0 %v516
        %v723 = vpop.f32.mrb[0].mxu0
        %v724 = vadd.f32 %v443, %v723
        %v725 = vpop.f32.mrb[0].mxu0
        %726 = vmatprep.mubr.f32.mxu0 0.0
        %727 = vmatmul.mubr.f32.gmra.mrb[0].mxu0 %v519
        %v728 = vpop.f32.mrb[0].mxu0
        %v729 = vadd.f32 %v443, %v728
        %v730 = vpop.f32.mrb[0].mxu0
        %731 = vmatprep.mubr.f32.mxu0 0.0
        %732 = vmatmul.mubr.f32.gmra.mrb[0].mxu0 %v522
        %v733 = vpop.f32.mrb[0].mxu0
        %v734 = vadd.f32 %v443, %v733
        %v735 = vpop.f32.mrb[0].mxu0
        %736 = vmatprep.mubr.f32.mxu0 0.0
        %737 = vmatmul.mubr.f32.gmra.mrb[0].mxu0 %v525
        %v738 = vpop.f32.mrb[0].mxu0
        %v739 = vadd.f32 %v443, %v738
        %v740 = vpop.f32.mrb[0].mxu0
        %741 = vmatprep.mubr.f32.mxu0 0.0
        %742 = vmatmul.mubr.f32.gmra.mrb[0].mxu0 %v528
        %v743 = vpop.f32.mrb[0].mxu0
        %v744 = vadd.f32 %v443, %v743
        %v745 = vpop.f32.mrb[0].mxu0
        %746 = vmatprep.mubr.f32.mxu0 0.0
        %747 = vmatmul.mubr.f32.gmra.mrb[0].mxu0 %v531
        %v748 = vpop.f32.mrb[0].mxu0
        %v749 = vadd.f32 %v443, %v748
        %v750 = vpop.f32.mrb[0].mxu0
        %751 = vmatprep.mubr.f32.mxu0 0.0
        %752 = vmatmul.mubr.f32.gmra.mrb[0].mxu0 %v534
        %v753 = vpop.f32.mrb[0].mxu0
        %v754 = vadd.f32 %v443, %v753
        %v755 = vpop.f32.mrb[0].mxu0
        %756 = vmatprep.mubr.f32.mxu0 0.0
        %757 = vmatmul.mubr.f32.gmra.mrb[0].mxu0 %v537
        %v758 = vpop.f32.mrb[0].mxu0
        %v759 = vadd.f32 %v443, %v758
        %v760 = vpop.f32.mrb[0].mxu0
        %761 = vmatprep.mubr.f32.mxu0 0.0
        %762 = vmatmul.mubr.f32.gmra.mrb[0].mxu0 %v540
        %v763 = vpop.f32.mrb[0].mxu0
        %v764 = vadd.f32 %v443, %v763
        %v765 = vpop.f32.mrb[0].mxu0
        %766 = vdwg.mxu0
        %v767 = vmax.f32 %v609, 0.0
        %v768 = vmax.f32 %v614, 0.0
        %v769 = vmax.f32 %v619, 0.0
        %v770 = vmax.f32 %v624, 0.0
        %v771 = vmax.f32 %v629, 0.0
        %v772 = vmax.f32 %v634, 0.0
        %v773 = vmax.f32 %v639, 0.0
        %v774 = vmax.f32 %v644, 0.0
        %v775 = vmax.f32 %v649, 0.0
        %v776 = vmax.f32 %v654, 0.0
        %v777 = vmax.f32 %v659, 0.0
        %v778 = vmax.f32 %v664, 0.0
        %v779 = vmax.f32 %v669, 0.0
        %v780 = vmax.f32 %v674, 0.0
        %v781 = vmax.f32 %v679, 0.0
        %v782 = vmax.f32 %v684, 0.0
        %v783 = vmax.f32 %v689, 0.0
        %v784 = vmax.f32 %v694, 0.0
        %v785 = vmax.f32 %v699, 0.0
        %v786 = vmax.f32 %v704, 0.0
        %v787 = vmax.f32 %v709, 0.0
        %v788 = vmax.f32 %v714, 0.0
        %v789 = vmax.f32 %v719, 0.0
        %v790 = vmax.f32 %v724, 0.0
        %v791 = vmax.f32 %v729, 0.0
        %v792 = vmax.f32 %v734, 0.0
        %v793 = vmax.f32 %v739, 0.0
        %v794 = vmax.f32 %v744, 0.0
        %v795 = vmax.f32 %v749, 0.0
        %v796 = vmax.f32 %v754, 0.0
        %v797 = vmax.f32 %v759, 0.0
        %v798 = vmax.f32 %v764, 0.0
        %vm799 = vcmask 130048
        %800 = vst.msk [vmem:[#allocation2] sm:$0xff] %vm799, 0.0
        %vm801 = vcmask 123904
        %802 = vst.msk [vmem:[#allocation2 + $0x8] sm:$0x3] %vm801, 0.0
        %803 = vst.msk [vmem:[#allocation2 + $0x10] sm:$0xff] %vm799, 0.0
        %804 = vst.msk [vmem:[#allocation2 + $0x18] sm:$0x3] %vm801, 0.0
        %805 = vst.msk [vmem:[#allocation2 + $0x20] sm:$0xff] %vm799, 0.0
        %806 = vst.msk [vmem:[#allocation2 + $0x28] sm:$0x3] %vm801, 0.0
        %807 = vst.msk [vmem:[#allocation2 + $0x30] sm:$0xff] %vm799, 0.0
        %808 = vst.msk [vmem:[#allocation2 + $0x38] sm:$0x3] %vm801, 0.0
        %809 = vst.msk [vmem:[#allocation2 + $0x40] sm:$0xff] %vm799, 0.0
        %810 = vst.msk [vmem:[#allocation2 + $0x48] sm:$0x3] %vm801, 0.0
        %811 = vst.msk [vmem:[#allocation2 + $0x50] sm:$0xff] %vm799, 0.0
        %812 = vst.msk [vmem:[#allocation2 + $0x58] sm:$0x3] %vm801, 0.0
        %813 = vst.msk [vmem:[#allocation2 + $0x60] sm:$0xff] %vm799, 0.0
        %814 = vst.msk [vmem:[#allocation2 + $0x68] sm:$0x3] %vm801, 0.0
        %815 = vst.msk [vmem:[#allocation2 + $0x70] sm:$0xff] %vm799, 0.0
        %816 = vst.msk [vmem:[#allocation2 + $0x78] sm:$0x3] %vm801, 0.0
        %817 = vst.msk [vmem:[#allocation2 + $0x80] sm:$0xff] %vm799, 0.0
        %818 = vst.msk [vmem:[#allocation2 + $0x88] sm:$0x3] %vm801, 0.0
        %819 = vst.msk [vmem:[#allocation2 + $0x90] sm:$0xff] %vm799, 0.0
        %820 = vst.msk [vmem:[#allocation2 + $0x98] sm:$0x3] %vm801, 0.0
        %s821 = scalar_lea.vmem [#allocation2], 800
        %822 = vst.msk [vmem:[%s821] sm:$0xff] %vm799, 0.0
        %823 = vst.msk [vmem:[%s821 + $0x8] sm:$0x3] %vm801, 0.0
        %824 = vst.msk [vmem:[%s821 + $0x10] sm:$0xff] %vm799, 0.0
        %825 = vst.msk [vmem:[%s821 + $0x18] sm:$0x3] %vm801, 0.0
        %826 = vst.msk [vmem:[%s821 + $0x20] sm:$0xff] %vm799, 0.0
        %827 = vst.msk [vmem:[%s821 + $0x28] sm:$0x3] %vm801, 0.0
        %828 = vst.msk [vmem:[%s821 + $0x30] sm:$0xff] %vm799, 0.0
        %829 = vst.msk [vmem:[%s821 + $0x38] sm:$0x3] %vm801, 0.0
        %830 = vst.msk [vmem:[%s821 + $0x40] sm:$0xff] %vm799, 0.0
        %831 = vst.msk [vmem:[%s821 + $0x48] sm:$0x3] %vm801, 0.0
        %832 = vst.msk [vmem:[%s821 + $0x50] sm:$0xff] %vm799, 0.0
        %833 = vst.msk [vmem:[%s821 + $0x58] sm:$0x3] %vm801, 0.0
        %834 = vst.msk [vmem:[%s821 + $0x60] sm:$0xff] %vm799, 0.0
        %835 = vst.msk [vmem:[%s821 + $0x68] sm:$0x3] %vm801, 0.0
        %836 = vst.msk [vmem:[%s821 + $0x70] sm:$0xff] %vm799, 0.0
        %837 = vst.msk [vmem:[%s821 + $0x78] sm:$0x3] %vm801, 0.0
        %838 = vst.msk [vmem:[%s821 + $0x80] sm:$0xff] %vm799, 0.0
        %839 = vst.msk [vmem:[%s821 + $0x88] sm:$0x3] %vm801, 0.0
        %840 = vst.msk [vmem:[%s821 + $0x90] sm:$0xff] %vm799, 0.0
        %841 = vst.msk [vmem:[%s821 + $0x98] sm:$0x3] %vm801, 0.0
        %842 = vst.msk [vmem:[#allocation2] sm:$0xff] %vm799, 0.0
        %843 = vst.msk [vmem:[#allocation2 + $0x8] sm:$0x3] %vm801, 0.0
        %844 = vst.msk [vmem:[#allocation2 + $0xa0] sm:$0xff] %vm799, 0.0
        %845 = vst.msk [vmem:[#allocation2 + $0xa8] sm:$0x3] %vm801, 0.0
        %846 = vst.msk [vmem:[#allocation2 + $0x140] sm:$0xff] %vm799, 0.0
        %847 = vst.msk [vmem:[#allocation2 + $0x148] sm:$0x3] %vm801, 0.0
        %848 = vst.msk [vmem:[#allocation2 + $0x1e0] sm:$0xff] %vm799, 0.0
        %849 = vst.msk [vmem:[#allocation2 + $0x1e8] sm:$0x3] %vm801, 0.0
        %850 = vst.msk [vmem:[#allocation2 + $0x280] sm:$0xff] %vm799, 0.0
        %851 = vst.msk [vmem:[#allocation2 + $0x288] sm:$0x3] %vm801, 0.0
        %852 = vst.msk [vmem:[#allocation2 + $0x320] sm:$0xff] %vm799, 0.0
        %853 = vst.msk [vmem:[#allocation2 + $0x328] sm:$0x3] %vm801, 0.0
        %s854 = scalar_lea.vmem [#allocation2], 144
        %855 = vst.msk [vmem:[%s854] sm:$0xff] %vm799, 0.0
        %856 = vst.msk [vmem:[%s854 + $0x8] sm:$0x3] %vm801, 0.0
        %857 = vst.msk [vmem:[%s854 + $0xa0] sm:$0xff] %vm799, 0.0
        %858 = vst.msk [vmem:[%s854 + $0xa8] sm:$0x3] %vm801, 0.0
        %859 = vst.msk [vmem:[%s854 + $0x140] sm:$0xff] %vm799, 0.0
        %860 = vst.msk [vmem:[%s854 + $0x148] sm:$0x3] %vm801, 0.0
        %861 = vst.msk [vmem:[%s854 + $0x1e0] sm:$0xff] %vm799, 0.0
        %862 = vst.msk [vmem:[%s854 + $0x1e8] sm:$0x3] %vm801, 0.0
        %863 = vst.msk [vmem:[%s854 + $0x280] sm:$0xff] %vm799, 0.0
        %864 = vst.msk [vmem:[%s854 + $0x288] sm:$0x3] %vm801, 0.0
        %865 = vst.msk [vmem:[%s854 + $0x320] sm:$0xff] %vm799, 0.0
        %866 = vst.msk [vmem:[%s854 + $0x328] sm:$0x3] %vm801, 0.0
        %vm867 = vcmask 122880
        %868 = vst.msk [vmem:[#allocation2] sm:$0x1] %vm867, 0.0
        %869 = vst.msk [vmem:[#allocation2 + $0x10] sm:$0x1] %vm867, 0.0
        %870 = vst.msk [vmem:[#allocation2 + $0x20] sm:$0x1] %vm867, 0.0
        %871 = vst.msk [vmem:[#allocation2 + $0x30] sm:$0x1] %vm867, 0.0
        %872 = vst.msk [vmem:[#allocation2 + $0x40] sm:$0x1] %vm867, 0.0
        %873 = vst.msk [vmem:[#allocation2 + $0x50] sm:$0x1] %vm867, 0.0
        %874 = vst.msk [vmem:[#allocation2 + $0x60] sm:$0x1] %vm867, 0.0
        %875 = vst.msk [vmem:[#allocation2 + $0x70] sm:$0x1] %vm867, 0.0
        %876 = vst.msk [vmem:[#allocation2 + $0x80] sm:$0x1] %vm867, 0.0
        %877 = vst.msk [vmem:[#allocation2 + $0x90] sm:$0x1] %vm867, 0.0
        %878 = vst.msk [vmem:[#allocation2 + $0xa0] sm:$0x1] %vm867, 0.0
        %879 = vst.msk [vmem:[#allocation2 + $0xb0] sm:$0x1] %vm867, 0.0
        %880 = vst.msk [vmem:[#allocation2 + $0xc0] sm:$0x1] %vm867, 0.0
        %881 = vst.msk [vmem:[#allocation2 + $0xd0] sm:$0x1] %vm867, 0.0
        %882 = vst.msk [vmem:[#allocation2 + $0xe0] sm:$0x1] %vm867, 0.0
        %883 = vst.msk [vmem:[#allocation2 + $0xf0] sm:$0x1] %vm867, 0.0
        %884 = vst.msk [vmem:[#allocation2 + $0x100] sm:$0x1] %vm867, 0.0
        %885 = vst.msk [vmem:[#allocation2 + $0x110] sm:$0x1] %vm867, 0.0
        %886 = vst.msk [vmem:[#allocation2 + $0x120] sm:$0x1] %vm867, 0.0
        %887 = vst.msk [vmem:[#allocation2 + $0x130] sm:$0x1] %vm867, 0.0
        %888 = vst.msk [vmem:[#allocation2 + $0x140] sm:$0x1] %vm867, 0.0
        %889 = vst.msk [vmem:[#allocation2 + $0x150] sm:$0x1] %vm867, 0.0
        %890 = vst.msk [vmem:[#allocation2 + $0x160] sm:$0x1] %vm867, 0.0
        %891 = vst.msk [vmem:[#allocation2 + $0x170] sm:$0x1] %vm867, 0.0
        %892 = vst.msk [vmem:[#allocation2 + $0x180] sm:$0x1] %vm867, 0.0
        %893 = vst.msk [vmem:[#allocation2 + $0x190] sm:$0x1] %vm867, 0.0
        %894 = vst.msk [vmem:[#allocation2 + $0x1a0] sm:$0x1] %vm867, 0.0
        %895 = vst.msk [vmem:[#allocation2 + $0x1b0] sm:$0x1] %vm867, 0.0
        %896 = vst.msk [vmem:[#allocation2 + $0x1c0] sm:$0x1] %vm867, 0.0
        %897 = vst.msk [vmem:[#allocation2 + $0x1d0] sm:$0x1] %vm867, 0.0
        %898 = vst.msk [vmem:[#allocation2 + $0x1e0] sm:$0x1] %vm867, 0.0
        %899 = vst.msk [vmem:[#allocation2 + $0x1f0] sm:$0x1] %vm867, 0.0
        %900 = vst.msk [vmem:[#allocation2 + $0x200] sm:$0x1] %vm867, 0.0
        %901 = vst.msk [vmem:[#allocation2 + $0x210] sm:$0x1] %vm867, 0.0
        %902 = vst.msk [vmem:[#allocation2 + $0x220] sm:$0x1] %vm867, 0.0
        %903 = vst.msk [vmem:[#allocation2 + $0x230] sm:$0x1] %vm867, 0.0
        %904 = vst.msk [vmem:[#allocation2 + $0x240] sm:$0x1] %vm867, 0.0
        %905 = vst.msk [vmem:[#allocation2 + $0x250] sm:$0x1] %vm867, 0.0
        %906 = vst.msk [vmem:[#allocation2 + $0x260] sm:$0x1] %vm867, 0.0
        %907 = vst.msk [vmem:[#allocation2 + $0x270] sm:$0x1] %vm867, 0.0
        %908 = vst.msk [vmem:[#allocation2 + $0x280] sm:$0x1] %vm867, 0.0
        %909 = vst.msk [vmem:[#allocation2 + $0x290] sm:$0x1] %vm867, 0.0
        %910 = vst.msk [vmem:[#allocation2 + $0x2a0] sm:$0x1] %vm867, 0.0
        %911 = vst.msk [vmem:[#allocation2 + $0x2b0] sm:$0x1] %vm867, 0.0
        %912 = vst.msk [vmem:[#allocation2 + $0x2c0] sm:$0x1] %vm867, 0.0
        %913 = vst.msk [vmem:[#allocation2 + $0x2d0] sm:$0x1] %vm867, 0.0
        %914 = vst.msk [vmem:[#allocation2 + $0x2e0] sm:$0x1] %vm867, 0.0
        %915 = vst.msk [vmem:[#allocation2 + $0x2f0] sm:$0x1] %vm867, 0.0
        %916 = vst.msk [vmem:[#allocation2 + $0x300] sm:$0x1] %vm867, 0.0
        %917 = vst.msk [vmem:[#allocation2 + $0x310] sm:$0x1] %vm867, 0.0
        %918 = vst.msk [vmem:[#allocation2 + $0x320] sm:$0x1] %vm867, 0.0
        %919 = vst.msk [vmem:[#allocation2 + $0x330] sm:$0x1] %vm867, 0.0
        %920 = vst.msk [vmem:[#allocation2 + $0x340] sm:$0x1] %vm867, 0.0
        %921 = vst.msk [vmem:[#allocation2 + $0x350] sm:$0x1] %vm867, 0.0
        %922 = vst.msk [vmem:[#allocation2 + $0x360] sm:$0x1] %vm867, 0.0
        %923 = vst.msk [vmem:[#allocation2 + $0x370] sm:$0x1] %vm867, 0.0
        %924 = vst.msk [vmem:[#allocation2 + $0x380] sm:$0x1] %vm867, 0.0
        %925 = vst.msk [vmem:[#allocation2 + $0x390] sm:$0x1] %vm867, 0.0
        %926 = vst.msk [vmem:[#allocation2 + $0x3a0] sm:$0x1] %vm867, 0.0
        %927 = vst.msk [vmem:[#allocation2 + $0x3b0] sm:$0x1] %vm867, 0.0
        %928 = vst.msk [vmem:[#allocation2 + $0x9] sm:$0x1] %vm867, 0.0
        %929 = vst.msk [vmem:[#allocation2 + $0x19] sm:$0x1] %vm867, 0.0
        %930 = vst.msk [vmem:[#allocation2 + $0x29] sm:$0x1] %vm867, 0.0
        %931 = vst.msk [vmem:[#allocation2 + $0x39] sm:$0x1] %vm867, 0.0
        %932 = vst.msk [vmem:[#allocation2 + $0x49] sm:$0x1] %vm867, 0.0
        %933 = vst.msk [vmem:[#allocation2 + $0x59] sm:$0x1] %vm867, 0.0
        %934 = vst.msk [vmem:[#allocation2 + $0x69] sm:$0x1] %vm867, 0.0
        %935 = vst.msk [vmem:[#allocation2 + $0x79] sm:$0x1] %vm867, 0.0
        %936 = vst.msk [vmem:[#allocation2 + $0x89] sm:$0x1] %vm867, 0.0
        %937 = vst.msk [vmem:[#allocation2 + $0x99] sm:$0x1] %vm867, 0.0
        %938 = vst.msk [vmem:[#allocation2 + $0xa9] sm:$0x1] %vm867, 0.0
        %939 = vst.msk [vmem:[#allocation2 + $0xb9] sm:$0x1] %vm867, 0.0
        %940 = vst.msk [vmem:[#allocation2 + $0xc9] sm:$0x1] %vm867, 0.0
        %941 = vst.msk [vmem:[#allocation2 + $0xd9] sm:$0x1] %vm867, 0.0
        %942 = vst.msk [vmem:[#allocation2 + $0xe9] sm:$0x1] %vm867, 0.0
        %943 = vst.msk [vmem:[#allocation2 + $0xf9] sm:$0x1] %vm867, 0.0
        %944 = vst.msk [vmem:[#allocation2 + $0x109] sm:$0x1] %vm867, 0.0
        %945 = vst.msk [vmem:[#allocation2 + $0x119] sm:$0x1] %vm867, 0.0
        %946 = vst.msk [vmem:[#allocation2 + $0x129] sm:$0x1] %vm867, 0.0
        %947 = vst.msk [vmem:[#allocation2 + $0x139] sm:$0x1] %vm867, 0.0
        %948 = vst.msk [vmem:[#allocation2 + $0x149] sm:$0x1] %vm867, 0.0
        %949 = vst.msk [vmem:[#allocation2 + $0x159] sm:$0x1] %vm867, 0.0
        %950 = vst.msk [vmem:[#allocation2 + $0x169] sm:$0x1] %vm867, 0.0
        %951 = vst.msk [vmem:[#allocation2 + $0x179] sm:$0x1] %vm867, 0.0
        %952 = vst.msk [vmem:[#allocation2 + $0x189] sm:$0x1] %vm867, 0.0
        %953 = vst.msk [vmem:[#allocation2 + $0x199] sm:$0x1] %vm867, 0.0
        %954 = vst.msk [vmem:[#allocation2 + $0x1a9] sm:$0x1] %vm867, 0.0
        %955 = vst.msk [vmem:[#allocation2 + $0x1b9] sm:$0x1] %vm867, 0.0
        %956 = vst.msk [vmem:[#allocation2 + $0x1c9] sm:$0x1] %vm867, 0.0
        %957 = vst.msk [vmem:[#allocation2 + $0x1d9] sm:$0x1] %vm867, 0.0
        %958 = vst.msk [vmem:[#allocation2 + $0x1e9] sm:$0x1] %vm867, 0.0
        %959 = vst.msk [vmem:[#allocation2 + $0x1f9] sm:$0x1] %vm867, 0.0
        %960 = vst.msk [vmem:[#allocation2 + $0x209] sm:$0x1] %vm867, 0.0
        %961 = vst.msk [vmem:[#allocation2 + $0x219] sm:$0x1] %vm867, 0.0
        %962 = vst.msk [vmem:[#allocation2 + $0x229] sm:$0x1] %vm867, 0.0
        %963 = vst.msk [vmem:[#allocation2 + $0x239] sm:$0x1] %vm867, 0.0
        %964 = vst.msk [vmem:[#allocation2 + $0x249] sm:$0x1] %vm867, 0.0
        %965 = vst.msk [vmem:[#allocation2 + $0x259] sm:$0x1] %vm867, 0.0
        %966 = vst.msk [vmem:[#allocation2 + $0x269] sm:$0x1] %vm867, 0.0
        %967 = vst.msk [vmem:[#allocation2 + $0x279] sm:$0x1] %vm867, 0.0
        %968 = vst.msk [vmem:[#allocation2 + $0x289] sm:$0x1] %vm867, 0.0
        %969 = vst.msk [vmem:[#allocation2 + $0x299] sm:$0x1] %vm867, 0.0
        %970 = vst.msk [vmem:[#allocation2 + $0x2a9] sm:$0x1] %vm867, 0.0
        %971 = vst.msk [vmem:[#allocation2 + $0x2b9] sm:$0x1] %vm867, 0.0
        %972 = vst.msk [vmem:[#allocation2 + $0x2c9] sm:$0x1] %vm867, 0.0
        %973 = vst.msk [vmem:[#allocation2 + $0x2d9] sm:$0x1] %vm867, 0.0
        %974 = vst.msk [vmem:[#allocation2 + $0x2e9] sm:$0x1] %vm867, 0.0
        %975 = vst.msk [vmem:[#allocation2 + $0x2f9] sm:$0x1] %vm867, 0.0
        %976 = vst.msk [vmem:[#allocation2 + $0x309] sm:$0x1] %vm867, 0.0
        %977 = vst.msk [vmem:[#allocation2 + $0x319] sm:$0x1] %vm867, 0.0
        %978 = vst.msk [vmem:[#allocation2 + $0x329] sm:$0x1] %vm867, 0.0
        %979 = vst.msk [vmem:[#allocation2 + $0x339] sm:$0x1] %vm867, 0.0
        %980 = vst.msk [vmem:[#allocation2 + $0x349] sm:$0x1] %vm867, 0.0
        %981 = vst.msk [vmem:[#allocation2 + $0x359] sm:$0x1] %vm867, 0.0
        %982 = vst.msk [vmem:[#allocation2 + $0x369] sm:$0x1] %vm867, 0.0
        %983 = vst.msk [vmem:[#allocation2 + $0x379] sm:$0x1] %vm867, 0.0
        %984 = vst.msk [vmem:[#allocation2 + $0x389] sm:$0x1] %vm867, 0.0
        %985 = vst.msk [vmem:[#allocation2 + $0x399] sm:$0x1] %vm867, 0.0
        %986 = vst.msk [vmem:[#allocation2 + $0x3a9] sm:$0x1] %vm867, 0.0
        %987 = vst.msk [vmem:[#allocation2 + $0x3b9] sm:$0x1] %vm867, 0.0
        %s988 = scalar_lea.vmem [#allocation2], 176
        %989 = vst.msk [vmem:[%s988 + $0x1] sm:$0xff] %vm799, %v767
        %990 = vst.msk [vmem:[%s988 + $0x11] sm:$0xff] %vm799, %v768
        %991 = vst.msk [vmem:[%s988 + $0x21] sm:$0xff] %vm799, %v769
        %992 = vst.msk [vmem:[%s988 + $0x31] sm:$0xff] %vm799, %v770
        %993 = vst.msk [vmem:[%s988 + $0x41] sm:$0xff] %vm799, %v771
        %994 = vst.msk [vmem:[%s988 + $0x51] sm:$0xff] %vm799, %v772
        %995 = vst.msk [vmem:[%s988 + $0x61] sm:$0xff] %vm799, %v773
        %996 = vst.msk [vmem:[%s988 + $0x71] sm:$0xff] %vm799, %v774
        %997 = vst.msk [vmem:[%s988 + $0xa1] sm:$0xff] %vm799, %v775
        %998 = vst.msk [vmem:[%s988 + $0xb1] sm:$0xff] %vm799, %v776
        %999 = vst.msk [vmem:[%s988 + $0xc1] sm:$0xff] %vm799, %v777
        %1000 = vst.msk [vmem:[%s988 + $0xd1] sm:$0xff] %vm799, %v778
        %1001 = vst.msk [vmem:[%s988 + $0xe1] sm:$0xff] %vm799, %v779
        %1002 = vst.msk [vmem:[%s988 + $0xf1] sm:$0xff] %vm799, %v780
        %1003 = vst.msk [vmem:[%s988 + $0x101] sm:$0xff] %vm799, %v781
        %1004 = vst.msk [vmem:[%s988 + $0x111] sm:$0xff] %vm799, %v782
        %1005 = vst.msk [vmem:[%s988 + $0x141] sm:$0xff] %vm799, %v783
        %1006 = vst.msk [vmem:[%s988 + $0x151] sm:$0xff] %vm799, %v784
        %1007 = vst.msk [vmem:[%s988 + $0x161] sm:$0xff] %vm799, %v785
        %1008 = vst.msk [vmem:[%s988 + $0x171] sm:$0xff] %vm799, %v786
        %1009 = vst.msk [vmem:[%s988 + $0x181] sm:$0xff] %vm799, %v787
        %1010 = vst.msk [vmem:[%s988 + $0x191] sm:$0xff] %vm799, %v788
        %1011 = vst.msk [vmem:[%s988 + $0x1a1] sm:$0xff] %vm799, %v789
        %1012 = vst.msk [vmem:[%s988 + $0x1b1] sm:$0xff] %vm799, %v790
        %1013 = vst.msk [vmem:[%s988 + $0x1e1] sm:$0xff] %vm799, %v791
        %1014 = vst.msk [vmem:[%s988 + $0x1f1] sm:$0xff] %vm799, %v792
        %1015 = vst.msk [vmem:[%s988 + $0x201] sm:$0xff] %vm799, %v793
        %1016 = vst.msk [vmem:[%s988 + $0x211] sm:$0xff] %vm799, %v794
        %1017 = vst.msk [vmem:[%s988 + $0x221] sm:$0xff] %vm799, %v795
        %1018 = vst.msk [vmem:[%s988 + $0x231] sm:$0xff] %vm799, %v796
        %1019 = vst.msk [vmem:[%s988 + $0x241] sm:$0xff] %vm799, %v797
        %1020 = vst.msk [vmem:[%s988 + $0x251] sm:$0xff] %vm799, %v798
        %v1021 = vld [vmem:[%s3] sm:$0xff]
        %v1022 = vld [vmem:[%s3 + $0x8] sm:$0xff]
        %v1023 = vld [vmem:[%s3 + $0x10] sm:$0xff]
        %v1024 = vld [vmem:[%s3 + $0x18] sm:$0x7]
        %v1025 = vld [vmem:[#allocation2] sm:$0xff]
        %v1026 = vld [vmem:[#allocation2 + $0x10] sm:$0xff]
        %v1027 = vld [vmem:[#allocation2 + $0x20] sm:$0xff]
        %v1028 = vld [vmem:[#allocation2 + $0x30] sm:$0xff]
        %v1029 = vld [vmem:[#allocation2 + $0x40] sm:$0xff]
        %v1030 = vld [vmem:[#allocation2 + $0x50] sm:$0xff]
        %v1031 = vld [vmem:[#allocation2 + $0x60] sm:$0xff]
        %v1032 = vld [vmem:[#allocation2 + $0x70] sm:$0xff]
        %v1033 = vld [vmem:[#allocation2 + $0xa0] sm:$0xff]
        %v1034 = vld [vmem:[#allocation2 + $0xb0] sm:$0xff]
        %v1035 = vld [vmem:[#allocation2 + $0xc0] sm:$0xff]
        %v1036 = vld [vmem:[#allocation2 + $0xd0] sm:$0xff]
        %v1037 = vld [vmem:[#allocation2 + $0xe0] sm:$0xff]
        %v1038 = vld [vmem:[#allocation2 + $0xf0] sm:$0xff]
        %v1039 = vld [vmem:[#allocation2 + $0x100] sm:$0xff]
        %v1040 = vld [vmem:[#allocation2 + $0x110] sm:$0xff]
        %v1041 = vld [vmem:[#allocation2 + $0x140] sm:$0xff]
        %v1042 = vld [vmem:[#allocation2 + $0x150] sm:$0xff]
        %v1043 = vld [vmem:[#allocation2 + $0x160] sm:$0xff]
        %v1044 = vld [vmem:[#allocation2 + $0x170] sm:$0xff]
        %v1045 = vld [vmem:[#allocation2 + $0x180] sm:$0xff]
        %v1046 = vld [vmem:[#allocation2 + $0x190] sm:$0xff]
        %v1047 = vld [vmem:[#allocation2 + $0x1a0] sm:$0xff]
        %v1048 = vld [vmem:[#allocation2 + $0x1b0] sm:$0xff]
        %v1049 = vld [vmem:[#allocation2 + $0x1e0] sm:$0xff]
        %v1050 = vld [vmem:[#allocation2 + $0x1f0] sm:$0xff]
        %v1051 = vld [vmem:[#allocation2 + $0x200] sm:$0xff]
        %v1052 = vld [vmem:[#allocation2 + $0x210] sm:$0xff]
        %v1053 = vld [vmem:[#allocation2 + $0x220] sm:$0xff]
        %v1054 = vld [vmem:[#allocation2 + $0x230] sm:$0xff]
        %v1055 = vld [vmem:[#allocation2 + $0x240] sm:$0xff]
        %v1056 = vld [vmem:[#allocation2 + $0x250] sm:$0xff]
        %v1057 = vlaneseq
        %v1058 = vshrl.u32 %v1057, 7
        %v1059 = vsub.s32 0, %v1058
        %v1060 = vrot.slane %v1021, %v1059
        %v1061 = vmul.f32 %v1025, %v1060
        %v1062 = vmul.f32 %v1026, %v1060
        %v1063 = vmul.f32 %v1027, %v1060
        %v1064 = vmul.f32 %v1028, %v1060
        %v1065 = vmul.f32 %v1029, %v1060
        %v1066 = vmul.f32 %v1030, %v1060
        %v1067 = vmul.f32 %v1031, %v1060
        %v1068 = vmul.f32 %v1032, %v1060
        %v1069 = vmul.f32 %v1033, %v1060
        %v1070 = vmul.f32 %v1034, %v1060
        %v1071 = vmul.f32 %v1035, %v1060
        %v1072 = vmul.f32 %v1036, %v1060
        %v1073 = vmul.f32 %v1037, %v1060
        %v1074 = vmul.f32 %v1038, %v1060
        %v1075 = vmul.f32 %v1039, %v1060
        %v1076 = vmul.f32 %v1040, %v1060
        %v1077 = vmul.f32 %v1041, %v1060
        %v1078 = vmul.f32 %v1042, %v1060
        %v1079 = vmul.f32 %v1043, %v1060
        %v1080 = vmul.f32 %v1044, %v1060
        %v1081 = vmul.f32 %v1045, %v1060
        %v1082 = vmul.f32 %v1046, %v1060
        %v1083 = vmul.f32 %v1047, %v1060
        %v1084 = vmul.f32 %v1048, %v1060
        %v1085 = vmul.f32 %v1049, %v1060
        %v1086 = vmul.f32 %v1050, %v1060
        %v1087 = vmul.f32 %v1051, %v1060
        %v1088 = vmul.f32 %v1052, %v1060
        %v1089 = vmul.f32 %v1053, %v1060
        %v1090 = vmul.f32 %v1054, %v1060
        %v1091 = vmul.f32 %v1055, %v1060
        %v1092 = vmul.f32 %v1056, %v1060
        %v1093 = vadd.f32 %v1061, 0.0
        %v1094 = vadd.f32 %v1062, 0.0
        %v1095 = vadd.f32 %v1063, 0.0
        %v1096 = vadd.f32 %v1064, 0.0
        %v1097 = vadd.f32 %v1065, 0.0
        %v1098 = vadd.f32 %v1066, 0.0
        %v1099 = vadd.f32 %v1067, 0.0
        %v1100 = vadd.f32 %v1068, 0.0
        %v1101 = vadd.f32 %v1069, 0.0
        %v1102 = vadd.f32 %v1070, 0.0
        %v1103 = vadd.f32 %v1071, 0.0
        %v1104 = vadd.f32 %v1072, 0.0
        %v1105 = vadd.f32 %v1073, 0.0
        %v1106 = vadd.f32 %v1074, 0.0
        %v1107 = vadd.f32 %v1075, 0.0
        %v1108 = vadd.f32 %v1076, 0.0
        %v1109 = vadd.f32 %v1077, 0.0
        %v1110 = vadd.f32 %v1078, 0.0
        %v1111 = vadd.f32 %v1079, 0.0
        %v1112 = vadd.f32 %v1080, 0.0
        %v1113 = vadd.f32 %v1081, 0.0
        %v1114 = vadd.f32 %v1082, 0.0
        %v1115 = vadd.f32 %v1083, 0.0
        %v1116 = vadd.f32 %v1084, 0.0
        %v1117 = vadd.f32 %v1085, 0.0
        %v1118 = vadd.f32 %v1086, 0.0
        %v1119 = vadd.f32 %v1087, 0.0
        %v1120 = vadd.f32 %v1088, 0.0
        %v1121 = vadd.f32 %v1089, 0.0
        %v1122 = vadd.f32 %v1090, 0.0
        %v1123 = vadd.f32 %v1091, 0.0
        %v1124 = vadd.f32 %v1092, 0.0
        %v1125 = vld [vmem:[#allocation2 + $0x1] sm:$0xff]
        %v1126 = vld [vmem:[#allocation2 + $0x11] sm:$0xff]
        %v1127 = vld [vmem:[#allocation2 + $0x21] sm:$0xff]
        %v1128 = vld [vmem:[#allocation2 + $0x31] sm:$0xff]
        %v1129 = vld [vmem:[#allocation2 + $0x41] sm:$0xff]
        %v1130 = vld [vmem:[#allocation2 + $0x51] sm:$0xff]
        %v1131 = vld [vmem:[#allocation2 + $0x61] sm:$0xff]
        %v1132 = vld [vmem:[#allocation2 + $0x71] sm:$0xff]
        %v1133 = vld [vmem:[#allocation2 + $0xa1] sm:$0xff]
        %v1134 = vld [vmem:[#allocation2 + $0xb1] sm:$0xff]
        %v1135 = vld [vmem:[#allocation2 + $0xc1] sm:$0xff]
        %v1136 = vld [vmem:[#allocation2 + $0xd1] sm:$0xff]
        %v1137 = vld [vmem:[#allocation2 + $0xe1] sm:$0xff]
        %v1138 = vld [vmem:[#allocation2 + $0xf1] sm:$0xff]
        %v1139 = vld [vmem:[#allocation2 + $0x101] sm:$0xff]
        %v1140 = vld [vmem:[#allocation2 + $0x111] sm:$0xff]
        %v1141 = vld [vmem:[#allocation2 + $0x141] sm:$0xff]
        %v1142 = vld [vmem:[#allocation2 + $0x151] sm:$0xff]
        %v1143 = vld [vmem:[#allocation2 + $0x161] sm:$0xff]
        %v1144 = vld [vmem:[#allocation2 + $0x171] sm:$0xff]
        %v1145 = vld [vmem:[#allocation2 + $0x181] sm:$0xff]
        %v1146 = vld [vmem:[#allocation2 + $0x191] sm:$0xff]
        %v1147 = vld [vmem:[#allocation2 + $0x1a1] sm:$0xff]
        %v1148 = vld [vmem:[#allocation2 + $0x1b1] sm:$0xff]
        %v1149 = vld [vmem:[#allocation2 + $0x1e1] sm:$0xff]
        %v1150 = vld [vmem:[#allocation2 + $0x1f1] sm:$0xff]
        %v1151 = vld [vmem:[#allocation2 + $0x201] sm:$0xff]
        %v1152 = vld [vmem:[#allocation2 + $0x211] sm:$0xff]
        %v1153 = vld [vmem:[#allocation2 + $0x221] sm:$0xff]
        %v1154 = vld [vmem:[#allocation2 + $0x231] sm:$0xff]
        %v1155 = vld [vmem:[#allocation2 + $0x241] sm:$0xff]
        %v1156 = vld [vmem:[#allocation2 + $0x251] sm:$0xff]
        %v1157 = vlaneseq
        %v1158 = vshrl.u32 %v1157, 7
        %v1159 = vsub.s32 1, %v1158
        %v1160 = vrot.slane %v1021, %v1159
        %v1161 = vmul.f32 %v1125, %v1160
        %v1162 = vmul.f32 %v1126, %v1160
        %v1163 = vmul.f32 %v1127, %v1160
        %v1164 = vmul.f32 %v1128, %v1160
        %v1165 = vmul.f32 %v1129, %v1160
        %v1166 = vmul.f32 %v1130, %v1160
        %v1167 = vmul.f32 %v1131, %v1160
        %v1168 = vmul.f32 %v1132, %v1160
        %v1169 = vmul.f32 %v1133, %v1160
        %v1170 = vmul.f32 %v1134, %v1160
        %v1171 = vmul.f32 %v1135, %v1160
        %v1172 = vmul.f32 %v1136, %v1160
        %v1173 = vmul.f32 %v1137, %v1160
        %v1174 = vmul.f32 %v1138, %v1160
        %v1175 = vmul.f32 %v1139, %v1160
        %v1176 = vmul.f32 %v1140, %v1160
        %v1177 = vmul.f32 %v1141, %v1160
        %v1178 = vmul.f32 %v1142, %v1160
        %v1179 = vmul.f32 %v1143, %v1160
        %v1180 = vmul.f32 %v1144, %v1160
        %v1181 = vmul.f32 %v1145, %v1160
        %v1182 = vmul.f32 %v1146, %v1160
        %v1183 = vmul.f32 %v1147, %v1160
        %v1184 = vmul.f32 %v1148, %v1160
        %v1185 = vmul.f32 %v1149, %v1160
        %v1186 = vmul.f32 %v1150, %v1160
        %v1187 = vmul.f32 %v1151, %v1160
        %v1188 = vmul.f32 %v1152, %v1160
        %v1189 = vmul.f32 %v1153, %v1160
        %v1190 = vmul.f32 %v1154, %v1160
        %v1191 = vmul.f32 %v1155, %v1160
        %v1192 = vmul.f32 %v1156, %v1160
        %v1193 = vadd.f32 %v1093, %v1161
        %v1194 = vadd.f32 %v1094, %v1162
        %v1195 = vadd.f32 %v1095, %v1163
        %v1196 = vadd.f32 %v1096, %v1164
        %v1197 = vadd.f32 %v1097, %v1165
        %v1198 = vadd.f32 %v1098, %v1166
        %v1199 = vadd.f32 %v1099, %v1167
        %v1200 = vadd.f32 %v1100, %v1168
        %v1201 = vadd.f32 %v1101, %v1169
        %v1202 = vadd.f32 %v1102, %v1170
        %v1203 = vadd.f32 %v1103, %v1171
        %v1204 = vadd.f32 %v1104, %v1172
        %v1205 = vadd.f32 %v1105, %v1173
        %v1206 = vadd.f32 %v1106, %v1174
        %v1207 = vadd.f32 %v1107, %v1175
        %v1208 = vadd.f32 %v1108, %v1176
        %v1209 = vadd.f32 %v1109, %v1177
        %v1210 = vadd.f32 %v1110, %v1178
        %v1211 = vadd.f32 %v1111, %v1179
        %v1212 = vadd.f32 %v1112, %v1180
        %v1213 = vadd.f32 %v1113, %v1181
        %v1214 = vadd.f32 %v1114, %v1182
        %v1215 = vadd.f32 %v1115, %v1183
        %v1216 = vadd.f32 %v1116, %v1184
        %v1217 = vadd.f32 %v1117, %v1185
        %v1218 = vadd.f32 %v1118, %v1186
        %v1219 = vadd.f32 %v1119, %v1187
        %v1220 = vadd.f32 %v1120, %v1188
        %v1221 = vadd.f32 %v1121, %v1189
        %v1222 = vadd.f32 %v1122, %v1190
        %v1223 = vadd.f32 %v1123, %v1191
        %v1224 = vadd.f32 %v1124, %v1192
        %v1225 = vld [vmem:[#allocation2 + $0x2] sm:$0xff]
        %v1226 = vld [vmem:[#allocation2 + $0x12] sm:$0xff]
        %v1227 = vld [vmem:[#allocation2 + $0x22] sm:$0xff]
        %v1228 = vld [vmem:[#allocation2 + $0x32] sm:$0xff]
        %v1229 = vld [vmem:[#allocation2 + $0x42] sm:$0xff]
        %v1230 = vld [vmem:[#allocation2 + $0x52] sm:$0xff]
        %v1231 = vld [vmem:[#allocation2 + $0x62] sm:$0xff]
        %v1232 = vld [vmem:[#allocation2 + $0x72] sm:$0xff]
        %v1233 = vld [vmem:[#allocation2 + $0xa2] sm:$0xff]
        %v1234 = vld [vmem:[#allocation2 + $0xb2] sm:$0xff]
        %v1235 = vld [vmem:[#allocation2 + $0xc2] sm:$0xff]
        %v1236 = vld [vmem:[#allocation2 + $0xd2] sm:$0xff]
        %v1237 = vld [vmem:[#allocation2 + $0xe2] sm:$0xff]
        %v1238 = vld [vmem:[#allocation2 + $0xf2] sm:$0xff]
        %v1239 = vld [vmem:[#allocation2 + $0x102] sm:$0xff]
        %v1240 = vld [vmem:[#allocation2 + $0x112] sm:$0xff]
        %v1241 = vld [vmem:[#allocation2 + $0x142] sm:$0xff]
        %v1242 = vld [vmem:[#allocation2 + $0x152] sm:$0xff]
        %v1243 = vld [vmem:[#allocation2 + $0x162] sm:$0xff]
        %v1244 = vld [vmem:[#allocation2 + $0x172] sm:$0xff]
        %v1245 = vld [vmem:[#allocation2 + $0x182] sm:$0xff]
        %v1246 = vld [vmem:[#allocation2 + $0x192] sm:$0xff]
        %v1247 = vld [vmem:[#allocation2 + $0x1a2] sm:$0xff]
        %v1248 = vld [vmem:[#allocation2 + $0x1b2] sm:$0xff]
        %v1249 = vld [vmem:[#allocation2 + $0x1e2] sm:$0xff]
        %v1250 = vld [vmem:[#allocation2 + $0x1f2] sm:$0xff]
        %v1251 = vld [vmem:[#allocation2 + $0x202] sm:$0xff]
        %v1252 = vld [vmem:[#allocation2 + $0x212] sm:$0xff]
        %v1253 = vld [vmem:[#allocation2 + $0x222] sm:$0xff]
        %v1254 = vld [vmem:[#allocation2 + $0x232] sm:$0xff]
        %v1255 = vld [vmem:[#allocation2 + $0x242] sm:$0xff]
        %v1256 = vld [vmem:[#allocation2 + $0x252] sm:$0xff]
        %v1257 = vlaneseq
        %v1258 = vshrl.u32 %v1257, 7
        %v1259 = vsub.s32 2, %v1258
        %v1260 = vrot.slane %v1021, %v1259
        %v1261 = vmul.f32 %v1225, %v1260
        %v1262 = vmul.f32 %v1226, %v1260
        %v1263 = vmul.f32 %v1227, %v1260
        %v1264 = vmul.f32 %v1228, %v1260
        %v1265 = vmul.f32 %v1229, %v1260
        %v1266 = vmul.f32 %v1230, %v1260
        %v1267 = vmul.f32 %v1231, %v1260
        %v1268 = vmul.f32 %v1232, %v1260
        %v1269 = vmul.f32 %v1233, %v1260
        %v1270 = vmul.f32 %v1234, %v1260
        %v1271 = vmul.f32 %v1235, %v1260
        %v1272 = vmul.f32 %v1236, %v1260
        %v1273 = vmul.f32 %v1237, %v1260
        %v1274 = vmul.f32 %v1238, %v1260
        %v1275 = vmul.f32 %v1239, %v1260
        %v1276 = vmul.f32 %v1240, %v1260
        %v1277 = vmul.f32 %v1241, %v1260
        %v1278 = vmul.f32 %v1242, %v1260
        %v1279 = vmul.f32 %v1243, %v1260
        %v1280 = vmul.f32 %v1244, %v1260
        %v1281 = vmul.f32 %v1245, %v1260
        %v1282 = vmul.f32 %v1246, %v1260
        %v1283 = vmul.f32 %v1247, %v1260
        %v1284 = vmul.f32 %v1248, %v1260
        %v1285 = vmul.f32 %v1249, %v1260
        %v1286 = vmul.f32 %v1250, %v1260
        %v1287 = vmul.f32 %v1251, %v1260
        %v1288 = vmul.f32 %v1252, %v1260
        %v1289 = vmul.f32 %v1253, %v1260
        %v1290 = vmul.f32 %v1254, %v1260
        %v1291 = vmul.f32 %v1255, %v1260
        %v1292 = vmul.f32 %v1256, %v1260
        %v1293 = vadd.f32 %v1193, %v1261
        %v1294 = vadd.f32 %v1194, %v1262
        %v1295 = vadd.f32 %v1195, %v1263
        %v1296 = vadd.f32 %v1196, %v1264
        %v1297 = vadd.f32 %v1197, %v1265
        %v1298 = vadd.f32 %v1198, %v1266
        %v1299 = vadd.f32 %v1199, %v1267
        %v1300 = vadd.f32 %v1200, %v1268
        %v1301 = vadd.f32 %v1201, %v1269
        %v1302 = vadd.f32 %v1202, %v1270
        %v1303 = vadd.f32 %v1203, %v1271
        %v1304 = vadd.f32 %v1204, %v1272
        %v1305 = vadd.f32 %v1205, %v1273
        %v1306 = vadd.f32 %v1206, %v1274
        %v1307 = vadd.f32 %v1207, %v1275
        %v1308 = vadd.f32 %v1208, %v1276
        %v1309 = vadd.f32 %v1209, %v1277
        %v1310 = vadd.f32 %v1210, %v1278
        %v1311 = vadd.f32 %v1211, %v1279
        %v1312 = vadd.f32 %v1212, %v1280
        %v1313 = vadd.f32 %v1213, %v1281
        %v1314 = vadd.f32 %v1214, %v1282
        %v1315 = vadd.f32 %v1215, %v1283
        %v1316 = vadd.f32 %v1216, %v1284
        %v1317 = vadd.f32 %v1217, %v1285
        %v1318 = vadd.f32 %v1218, %v1286
        %v1319 = vadd.f32 %v1219, %v1287
        %v1320 = vadd.f32 %v1220, %v1288
        %v1321 = vadd.f32 %v1221, %v1289
        %v1322 = vadd.f32 %v1222, %v1290
        %v1323 = vadd.f32 %v1223, %v1291
        %v1324 = vadd.f32 %v1224, %v1292
        %s1325 = scalar_lea.vmem [#allocation2], 16
        %v1326 = vld [vmem:[%s1325] sm:$0xff]
        %v1327 = vld [vmem:[%s1325 + $0x10] sm:$0xff]
        %v1328 = vld [vmem:[%s1325 + $0x20] sm:$0xff]
        %v1329 = vld [vmem:[%s1325 + $0x30] sm:$0xff]
        %v1330 = vld [vmem:[%s1325 + $0x40] sm:$0xff]
        %v1331 = vld [vmem:[%s1325 + $0x50] sm:$0xff]
        %v1332 = vld [vmem:[%s1325 + $0x60] sm:$0xff]
        %v1333 = vld [vmem:[%s1325 + $0x70] sm:$0xff]
        %v1334 = vld [vmem:[%s1325 + $0xa0] sm:$0xff]
        %v1335 = vld [vmem:[%s1325 + $0xb0] sm:$0xff]
        %v1336 = vld [vmem:[%s1325 + $0xc0] sm:$0xff]
        %v1337 = vld [vmem:[%s1325 + $0xd0] sm:$0xff]
        %v1338 = vld [vmem:[%s1325 + $0xe0] sm:$0xff]
        %v1339 = vld [vmem:[%s1325 + $0xf0] sm:$0xff]
        %v1340 = vld [vmem:[%s1325 + $0x100] sm:$0xff]
        %v1341 = vld [vmem:[%s1325 + $0x110] sm:$0xff]
        %v1342 = vld [vmem:[%s1325 + $0x140] sm:$0xff]
        %v1343 = vld [vmem:[%s1325 + $0x150] sm:$0xff]
        %v1344 = vld [vmem:[%s1325 + $0x160] sm:$0xff]
        %v1345 = vld [vmem:[%s1325 + $0x170] sm:$0xff]
        %v1346 = vld [vmem:[%s1325 + $0x180] sm:$0xff]
        %v1347 = vld [vmem:[%s1325 + $0x190] sm:$0xff]
        %v1348 = vld [vmem:[%s1325 + $0x1a0] sm:$0xff]
        %v1349 = vld [vmem:[%s1325 + $0x1b0] sm:$0xff]
        %v1350 = vld [vmem:[%s1325 + $0x1e0] sm:$0xff]
        %v1351 = vld [vmem:[%s1325 + $0x1f0] sm:$0xff]
        %v1352 = vld [vmem:[%s1325 + $0x200] sm:$0xff]
        %v1353 = vld [vmem:[%s1325 + $0x210] sm:$0xff]
        %v1354 = vld [vmem:[%s1325 + $0x220] sm:$0xff]
        %v1355 = vld [vmem:[%s1325 + $0x230] sm:$0xff]
        %v1356 = vld [vmem:[%s1325 + $0x240] sm:$0xff]
        %v1357 = vld [vmem:[%s1325 + $0x250] sm:$0xff]
        %v1358 = vlaneseq
        %v1359 = vshrl.u32 %v1358, 7
        %v1360 = vsub.s32 3, %v1359
        %v1361 = vrot.slane %v1021, %v1360
        %v1362 = vmul.f32 %v1326, %v1361
        %v1363 = vmul.f32 %v1327, %v1361
        %v1364 = vmul.f32 %v1328, %v1361
        %v1365 = vmul.f32 %v1329, %v1361
        %v1366 = vmul.f32 %v1330, %v1361
        %v1367 = vmul.f32 %v1331, %v1361
        %v1368 = vmul.f32 %v1332, %v1361
        %v1369 = vmul.f32 %v1333, %v1361
        %v1370 = vmul.f32 %v1334, %v1361
        %v1371 = vmul.f32 %v1335, %v1361
        %v1372 = vmul.f32 %v1336, %v1361
        %v1373 = vmul.f32 %v1337, %v1361
        %v1374 = vmul.f32 %v1338, %v1361
        %v1375 = vmul.f32 %v1339, %v1361
        %v1376 = vmul.f32 %v1340, %v1361
        %v1377 = vmul.f32 %v1341, %v1361
        %v1378 = vmul.f32 %v1342, %v1361
        %v1379 = vmul.f32 %v1343, %v1361
        %v1380 = vmul.f32 %v1344, %v1361
        %v1381 = vmul.f32 %v1345, %v1361
        %v1382 = vmul.f32 %v1346, %v1361
        %v1383 = vmul.f32 %v1347, %v1361
        %v1384 = vmul.f32 %v1348, %v1361
        %v1385 = vmul.f32 %v1349, %v1361
        %v1386 = vmul.f32 %v1350, %v1361
        %v1387 = vmul.f32 %v1351, %v1361
        %v1388 = vmul.f32 %v1352, %v1361
        %v1389 = vmul.f32 %v1353, %v1361
        %v1390 = vmul.f32 %v1354, %v1361
        %v1391 = vmul.f32 %v1355, %v1361
        %v1392 = vmul.f32 %v1356, %v1361
        %v1393 = vmul.f32 %v1357, %v1361
        %v1394 = vadd.f32 %v1293, %v1362
        %v1395 = vadd.f32 %v1294, %v1363
        %v1396 = vadd.f32 %v1295, %v1364
        %v1397 = vadd.f32 %v1296, %v1365
        %v1398 = vadd.f32 %v1297, %v1366
        %v1399 = vadd.f32 %v1298, %v1367
        %v1400 = vadd.f32 %v1299, %v1368
        %v1401 = vadd.f32 %v1300, %v1369
        %v1402 = vadd.f32 %v1301, %v1370
        %v1403 = vadd.f32 %v1302, %v1371
        %v1404 = vadd.f32 %v1303, %v1372
        %v1405 = vadd.f32 %v1304, %v1373
        %v1406 = vadd.f32 %v1305, %v1374
        %v1407 = vadd.f32 %v1306, %v1375
        %v1408 = vadd.f32 %v1307, %v1376
        %v1409 = vadd.f32 %v1308, %v1377
        %v1410 = vadd.f32 %v1309, %v1378
        %v1411 = vadd.f32 %v1310, %v1379
        %v1412 = vadd.f32 %v1311, %v1380
        %v1413 = vadd.f32 %v1312, %v1381
        %v1414 = vadd.f32 %v1313, %v1382
        %v1415 = vadd.f32 %v1314, %v1383
        %v1416 = vadd.f32 %v1315, %v1384
        %v1417 = vadd.f32 %v1316, %v1385
        %v1418 = vadd.f32 %v1317, %v1386
        %v1419 = vadd.f32 %v1318, %v1387
        %v1420 = vadd.f32 %v1319, %v1388
        %v1421 = vadd.f32 %v1320, %v1389
        %v1422 = vadd.f32 %v1321, %v1390
        %v1423 = vadd.f32 %v1322, %v1391
        %v1424 = vadd.f32 %v1323, %v1392
        %v1425 = vadd.f32 %v1324, %v1393
        %v1426 = vld [vmem:[%s1325 + $0x1] sm:$0xff]
        %v1427 = vld [vmem:[%s1325 + $0x11] sm:$0xff]
        %v1428 = vld [vmem:[%s1325 + $0x21] sm:$0xff]
        %v1429 = vld [vmem:[%s1325 + $0x31] sm:$0xff]
        %v1430 = vld [vmem:[%s1325 + $0x41] sm:$0xff]
        %v1431 = vld [vmem:[%s1325 + $0x51] sm:$0xff]
        %v1432 = vld [vmem:[%s1325 + $0x61] sm:$0xff]
        %v1433 = vld [vmem:[%s1325 + $0x71] sm:$0xff]
        %v1434 = vld [vmem:[%s1325 + $0xa1] sm:$0xff]
        %v1435 = vld [vmem:[%s1325 + $0xb1] sm:$0xff]
        %v1436 = vld [vmem:[%s1325 + $0xc1] sm:$0xff]
        %v1437 = vld [vmem:[%s1325 + $0xd1] sm:$0xff]
        %v1438 = vld [vmem:[%s1325 + $0xe1] sm:$0xff]
        %v1439 = vld [vmem:[%s1325 + $0xf1] sm:$0xff]
        %v1440 = vld [vmem:[%s1325 + $0x101] sm:$0xff]
        %v1441 = vld [vmem:[%s1325 + $0x111] sm:$0xff]
        %v1442 = vld [vmem:[%s1325 + $0x141] sm:$0xff]
        %v1443 = vld [vmem:[%s1325 + $0x151] sm:$0xff]
        %v1444 = vld [vmem:[%s1325 + $0x161] sm:$0xff]
        %v1445 = vld [vmem:[%s1325 + $0x171] sm:$0xff]
        %v1446 = vld [vmem:[%s1325 + $0x181] sm:$0xff]
        %v1447 = vld [vmem:[%s1325 + $0x191] sm:$0xff]
        %v1448 = vld [vmem:[%s1325 + $0x1a1] sm:$0xff]
        %v1449 = vld [vmem:[%s1325 + $0x1b1] sm:$0xff]
        %v1450 = vld [vmem:[%s1325 + $0x1e1] sm:$0xff]
        %v1451 = vld [vmem:[%s1325 + $0x1f1] sm:$0xff]
        %v1452 = vld [vmem:[%s1325 + $0x201] sm:$0xff]
        %v1453 = vld [vmem:[%s1325 + $0x211] sm:$0xff]
        %v1454 = vld [vmem:[%s1325 + $0x221] sm:$0xff]
        %v1455 = vld [vmem:[%s1325 + $0x231] sm:$0xff]
        %v1456 = vld [vmem:[%s1325 + $0x241] sm:$0xff]
        %v1457 = vld [vmem:[%s1325 + $0x251] sm:$0xff]
        %v1458 = vlaneseq
        %v1459 = vshrl.u32 %v1458, 7
        %v1460 = vsub.s32 4, %v1459
        %v1461 = vrot.slane %v1021, %v1460
        %v1462 = vmul.f32 %v1426, %v1461
        %v1463 = vmul.f32 %v1427, %v1461
        %v1464 = vmul.f32 %v1428, %v1461
        %v1465 = vmul.f32 %v1429, %v1461
        %v1466 = vmul.f32 %v1430, %v1461
        %v1467 = vmul.f32 %v1431, %v1461
        %v1468 = vmul.f32 %v1432, %v1461
        %v1469 = vmul.f32 %v1433, %v1461
        %v1470 = vmul.f32 %v1434, %v1461
        %v1471 = vmul.f32 %v1435, %v1461
        %v1472 = vmul.f32 %v1436, %v1461
        %v1473 = vmul.f32 %v1437, %v1461
        %v1474 = vmul.f32 %v1438, %v1461
        %v1475 = vmul.f32 %v1439, %v1461
        %v1476 = vmul.f32 %v1440, %v1461
        %v1477 = vmul.f32 %v1441, %v1461
        %v1478 = vmul.f32 %v1442, %v1461
        %v1479 = vmul.f32 %v1443, %v1461
        %v1480 = vmul.f32 %v1444, %v1461
        %v1481 = vmul.f32 %v1445, %v1461
        %v1482 = vmul.f32 %v1446, %v1461
        %v1483 = vmul.f32 %v1447, %v1461
        %v1484 = vmul.f32 %v1448, %v1461
        %v1485 = vmul.f32 %v1449, %v1461
        %v1486 = vmul.f32 %v1450, %v1461
        %v1487 = vmul.f32 %v1451, %v1461
        %v1488 = vmul.f32 %v1452, %v1461
        %v1489 = vmul.f32 %v1453, %v1461
        %v1490 = vmul.f32 %v1454, %v1461
        %v1491 = vmul.f32 %v1455, %v1461
        %v1492 = vmul.f32 %v1456, %v1461
        %v1493 = vmul.f32 %v1457, %v1461
        %v1494 = vadd.f32 %v1394, %v1462
        %v1495 = vadd.f32 %v1395, %v1463
        %v1496 = vadd.f32 %v1396, %v1464
        %v1497 = vadd.f32 %v1397, %v1465
        %v1498 = vadd.f32 %v1398, %v1466
        %v1499 = vadd.f32 %v1399, %v1467
        %v1500 = vadd.f32 %v1400, %v1468
        %v1501 = vadd.f32 %v1401, %v1469
        %v1502 = vadd.f32 %v1402, %v1470
        %v1503 = vadd.f32 %v1403, %v1471
        %v1504 = vadd.f32 %v1404, %v1472
        %v1505 = vadd.f32 %v1405, %v1473
        %v1506 = vadd.f32 %v1406, %v1474
        %v1507 = vadd.f32 %v1407, %v1475
        %v1508 = vadd.f32 %v1408, %v1476
        %v1509 = vadd.f32 %v1409, %v1477
        %v1510 = vadd.f32 %v1410, %v1478
        %v1511 = vadd.f32 %v1411, %v1479
        %v1512 = vadd.f32 %v1412, %v1480
        %v1513 = vadd.f32 %v1413, %v1481
        %v1514 = vadd.f32 %v1414, %v1482
        %v1515 = vadd.f32 %v1415, %v1483
        %v1516 = vadd.f32 %v1416, %v1484
        %v1517 = vadd.f32 %v1417, %v1485
        %v1518 = vadd.f32 %v1418, %v1486
        %v1519 = vadd.f32 %v1419, %v1487
        %v1520 = vadd.f32 %v1420, %v1488
        %v1521 = vadd.f32 %v1421, %v1489
        %v1522 = vadd.f32 %v1422, %v1490
        %v1523 = vadd.f32 %v1423, %v1491
        %v1524 = vadd.f32 %v1424, %v1492
        %v1525 = vadd.f32 %v1425, %v1493
        %v1526 = vld [vmem:[%s1325 + $0x2] sm:$0xff]
        %v1527 = vld [vmem:[%s1325 + $0x12] sm:$0xff]
        %v1528 = vld [vmem:[%s1325 + $0x22] sm:$0xff]
        %v1529 = vld [vmem:[%s1325 + $0x32] sm:$0xff]
        %v1530 = vld [vmem:[%s1325 + $0x42] sm:$0xff]
        %v1531 = vld [vmem:[%s1325 + $0x52] sm:$0xff]
        %v1532 = vld [vmem:[%s1325 + $0x62] sm:$0xff]
        %v1533 = vld [vmem:[%s1325 + $0x72] sm:$0xff]
        %v1534 = vld [vmem:[%s1325 + $0xa2] sm:$0xff]
        %v1535 = vld [vmem:[%s1325 + $0xb2] sm:$0xff]
        %v1536 = vld [vmem:[%s1325 + $0xc2] sm:$0xff]
        %v1537 = vld [vmem:[%s1325 + $0xd2] sm:$0xff]
        %v1538 = vld [vmem:[%s1325 + $0xe2] sm:$0xff]
        %v1539 = vld [vmem:[%s1325 + $0xf2] sm:$0xff]
        %v1540 = vld [vmem:[%s1325 + $0x102] sm:$0xff]
        %v1541 = vld [vmem:[%s1325 + $0x112] sm:$0xff]
        %v1542 = vld [vmem:[%s1325 + $0x142] sm:$0xff]
        %v1543 = vld [vmem:[%s1325 + $0x152] sm:$0xff]
        %v1544 = vld [vmem:[%s1325 + $0x162] sm:$0xff]
        %v1545 = vld [vmem:[%s1325 + $0x172] sm:$0xff]
        %v1546 = vld [vmem:[%s1325 + $0x182] sm:$0xff]
        %v1547 = vld [vmem:[%s1325 + $0x192] sm:$0xff]
        %v1548 = vld [vmem:[%s1325 + $0x1a2] sm:$0xff]
        %v1549 = vld [vmem:[%s1325 + $0x1b2] sm:$0xff]
        %v1550 = vld [vmem:[%s1325 + $0x1e2] sm:$0xff]
        %v1551 = vld [vmem:[%s1325 + $0x1f2] sm:$0xff]
        %v1552 = vld [vmem:[%s1325 + $0x202] sm:$0xff]
        %v1553 = vld [vmem:[%s1325 + $0x212] sm:$0xff]
        %v1554 = vld [vmem:[%s1325 + $0x222] sm:$0xff]
        %v1555 = vld [vmem:[%s1325 + $0x232] sm:$0xff]
        %v1556 = vld [vmem:[%s1325 + $0x242] sm:$0xff]
        %v1557 = vld [vmem:[%s1325 + $0x252] sm:$0xff]
        %v1558 = vlaneseq
        %v1559 = vshrl.u32 %v1558, 7
        %v1560 = vsub.s32 5, %v1559
        %v1561 = vrot.slane %v1021, %v1560
        %v1562 = vmul.f32 %v1526, %v1561
        %v1563 = vmul.f32 %v1527, %v1561
        %v1564 = vmul.f32 %v1528, %v1561
        %v1565 = vmul.f32 %v1529, %v1561
        %v1566 = vmul.f32 %v1530, %v1561
        %v1567 = vmul.f32 %v1531, %v1561
        %v1568 = vmul.f32 %v1532, %v1561
        %v1569 = vmul.f32 %v1533, %v1561
        %v1570 = vmul.f32 %v1534, %v1561
        %v1571 = vmul.f32 %v1535, %v1561
        %v1572 = vmul.f32 %v1536, %v1561
        %v1573 = vmul.f32 %v1537, %v1561
        %v1574 = vmul.f32 %v1538, %v1561
        %v1575 = vmul.f32 %v1539, %v1561
        %v1576 = vmul.f32 %v1540, %v1561
        %v1577 = vmul.f32 %v1541, %v1561
        %v1578 = vmul.f32 %v1542, %v1561
        %v1579 = vmul.f32 %v1543, %v1561
        %v1580 = vmul.f32 %v1544, %v1561
        %v1581 = vmul.f32 %v1545, %v1561
        %v1582 = vmul.f32 %v1546, %v1561
        %v1583 = vmul.f32 %v1547, %v1561
        %v1584 = vmul.f32 %v1548, %v1561
        %v1585 = vmul.f32 %v1549, %v1561
        %v1586 = vmul.f32 %v1550, %v1561
        %v1587 = vmul.f32 %v1551, %v1561
        %v1588 = vmul.f32 %v1552, %v1561
        %v1589 = vmul.f32 %v1553, %v1561
        %v1590 = vmul.f32 %v1554, %v1561
        %v1591 = vmul.f32 %v1555, %v1561
        %v1592 = vmul.f32 %v1556, %v1561
        %v1593 = vmul.f32 %v1557, %v1561
        %v1594 = vadd.f32 %v1494, %v1562
        %v1595 = vadd.f32 %v1495, %v1563
        %v1596 = vadd.f32 %v1496, %v1564
        %v1597 = vadd.f32 %v1497, %v1565
        %v1598 = vadd.f32 %v1498, %v1566
        %v1599 = vadd.f32 %v1499, %v1567
        %v1600 = vadd.f32 %v1500, %v1568
        %v1601 = vadd.f32 %v1501, %v1569
        %v1602 = vadd.f32 %v1502, %v1570
        %v1603 = vadd.f32 %v1503, %v1571
        %v1604 = vadd.f32 %v1504, %v1572
        %v1605 = vadd.f32 %v1505, %v1573
        %v1606 = vadd.f32 %v1506, %v1574
        %v1607 = vadd.f32 %v1507, %v1575
        %v1608 = vadd.f32 %v1508, %v1576
        %v1609 = vadd.f32 %v1509, %v1577
        %v1610 = vadd.f32 %v1510, %v1578
        %v1611 = vadd.f32 %v1511, %v1579
        %v1612 = vadd.f32 %v1512, %v1580
        %v1613 = vadd.f32 %v1513, %v1581
        %v1614 = vadd.f32 %v1514, %v1582
        %v1615 = vadd.f32 %v1515, %v1583
        %v1616 = vadd.f32 %v1516, %v1584
        %v1617 = vadd.f32 %v1517, %v1585
        %v1618 = vadd.f32 %v1518, %v1586
        %v1619 = vadd.f32 %v1519, %v1587
        %v1620 = vadd.f32 %v1520, %v1588
        %v1621 = vadd.f32 %v1521, %v1589
        %v1622 = vadd.f32 %v1522, %v1590
        %v1623 = vadd.f32 %v1523, %v1591
        %v1624 = vadd.f32 %v1524, %v1592
        %v1625 = vadd.f32 %v1525, %v1593
        %s1626 = scalar_lea.vmem [#allocation2], 32
        %v1627 = vld [vmem:[%s1626] sm:$0xff]
        %v1628 = vld [vmem:[%s1626 + $0x10] sm:$0xff]
        %v1629 = vld [vmem:[%s1626 + $0x20] sm:$0xff]
        %v1630 = vld [vmem:[%s1626 + $0x30] sm:$0xff]
        %v1631 = vld [vmem:[%s1626 + $0x40] sm:$0xff]
        %v1632 = vld [vmem:[%s1626 + $0x50] sm:$0xff]
        %v1633 = vld [vmem:[%s1626 + $0x60] sm:$0xff]
        %v1634 = vld [vmem:[%s1626 + $0x70] sm:$0xff]
        %v1635 = vld [vmem:[%s1626 + $0xa0] sm:$0xff]
        %v1636 = vld [vmem:[%s1626 + $0xb0] sm:$0xff]
        %v1637 = vld [vmem:[%s1626 + $0xc0] sm:$0xff]
        %v1638 = vld [vmem:[%s1626 + $0xd0] sm:$0xff]
        %v1639 = vld [vmem:[%s1626 + $0xe0] sm:$0xff]
        %v1640 = vld [vmem:[%s1626 + $0xf0] sm:$0xff]
        %v1641 = vld [vmem:[%s1626 + $0x100] sm:$0xff]
        %v1642 = vld [vmem:[%s1626 + $0x110] sm:$0xff]
        %v1643 = vld [vmem:[%s1626 + $0x140] sm:$0xff]
        %v1644 = vld [vmem:[%s1626 + $0x150] sm:$0xff]
        %v1645 = vld [vmem:[%s1626 + $0x160] sm:$0xff]
        %v1646 = vld [vmem:[%s1626 + $0x170] sm:$0xff]
        %v1647 = vld [vmem:[%s1626 + $0x180] sm:$0xff]
        %v1648 = vld [vmem:[%s1626 + $0x190] sm:$0xff]
        %v1649 = vld [vmem:[%s1626 + $0x1a0] sm:$0xff]
        %v1650 = vld [vmem:[%s1626 + $0x1b0] sm:$0xff]
        %v1651 = vld [vmem:[%s1626 + $0x1e0] sm:$0xff]
        %v1652 = vld [vmem:[%s1626 + $0x1f0] sm:$0xff]
        %v1653 = vld [vmem:[%s1626 + $0x200] sm:$0xff]
        %v1654 = vld [vmem:[%s1626 + $0x210] sm:$0xff]
        %v1655 = vld [vmem:[%s1626 + $0x220] sm:$0xff]
        %v1656 = vld [vmem:[%s1626 + $0x230] sm:$0xff]
        %v1657 = vld [vmem:[%s1626 + $0x240] sm:$0xff]
        %v1658 = vld [vmem:[%s1626 + $0x250] sm:$0xff]
        %v1659 = vlaneseq
        %v1660 = vshrl.u32 %v1659, 7
        %v1661 = vsub.s32 6, %v1660
        %v1662 = vrot.slane %v1021, %v1661
        %v1663 = vmul.f32 %v1627, %v1662
        %v1664 = vmul.f32 %v1628, %v1662
        %v1665 = vmul.f32 %v1629, %v1662
        %v1666 = vmul.f32 %v1630, %v1662
        %v1667 = vmul.f32 %v1631, %v1662
        %v1668 = vmul.f32 %v1632, %v1662
        %v1669 = vmul.f32 %v1633, %v1662
        %v1670 = vmul.f32 %v1634, %v1662
        %v1671 = vmul.f32 %v1635, %v1662
        %v1672 = vmul.f32 %v1636, %v1662
        %v1673 = vmul.f32 %v1637, %v1662
        %v1674 = vmul.f32 %v1638, %v1662
        %v1675 = vmul.f32 %v1639, %v1662
        %v1676 = vmul.f32 %v1640, %v1662
        %v1677 = vmul.f32 %v1641, %v1662
        %v1678 = vmul.f32 %v1642, %v1662
        %v1679 = vmul.f32 %v1643, %v1662
        %v1680 = vmul.f32 %v1644, %v1662
        %v1681 = vmul.f32 %v1645, %v1662
        %v1682 = vmul.f32 %v1646, %v1662
        %v1683 = vmul.f32 %v1647, %v1662
        %v1684 = vmul.f32 %v1648, %v1662
        %v1685 = vmul.f32 %v1649, %v1662
        %v1686 = vmul.f32 %v1650, %v1662
        %v1687 = vmul.f32 %v1651, %v1662
        %v1688 = vmul.f32 %v1652, %v1662
        %v1689 = vmul.f32 %v1653, %v1662
        %v1690 = vmul.f32 %v1654, %v1662
        %v1691 = vmul.f32 %v1655, %v1662
        %v1692 = vmul.f32 %v1656, %v1662
        %v1693 = vmul.f32 %v1657, %v1662
        %v1694 = vmul.f32 %v1658, %v1662
        %v1695 = vadd.f32 %v1594, %v1663
        %v1696 = vadd.f32 %v1595, %v1664
        %v1697 = vadd.f32 %v1596, %v1665
        %v1698 = vadd.f32 %v1597, %v1666
        %v1699 = vadd.f32 %v1598, %v1667
        %v1700 = vadd.f32 %v1599, %v1668
        %v1701 = vadd.f32 %v1600, %v1669
        %v1702 = vadd.f32 %v1601, %v1670
        %v1703 = vadd.f32 %v1602, %v1671
        %v1704 = vadd.f32 %v1603, %v1672
        %v1705 = vadd.f32 %v1604, %v1673
        %v1706 = vadd.f32 %v1605, %v1674
        %v1707 = vadd.f32 %v1606, %v1675
        %v1708 = vadd.f32 %v1607, %v1676
        %v1709 = vadd.f32 %v1608, %v1677
        %v1710 = vadd.f32 %v1609, %v1678
        %v1711 = vadd.f32 %v1610, %v1679
        %v1712 = vadd.f32 %v1611, %v1680
        %v1713 = vadd.f32 %v1612, %v1681
        %v1714 = vadd.f32 %v1613, %v1682
        %v1715 = vadd.f32 %v1614, %v1683
        %v1716 = vadd.f32 %v1615, %v1684
        %v1717 = vadd.f32 %v1616, %v1685
        %v1718 = vadd.f32 %v1617, %v1686
        %v1719 = vadd.f32 %v1618, %v1687
        %v1720 = vadd.f32 %v1619, %v1688
        %v1721 = vadd.f32 %v1620, %v1689
        %v1722 = vadd.f32 %v1621, %v1690
        %v1723 = vadd.f32 %v1622, %v1691
        %v1724 = vadd.f32 %v1623, %v1692
        %v1725 = vadd.f32 %v1624, %v1693
        %v1726 = vadd.f32 %v1625, %v1694
        %v1727 = vld [vmem:[%s1626 + $0x1] sm:$0xff]
        %v1728 = vld [vmem:[%s1626 + $0x11] sm:$0xff]
        %v1729 = vld [vmem:[%s1626 + $0x21] sm:$0xff]
        %v1730 = vld [vmem:[%s1626 + $0x31] sm:$0xff]
        %v1731 = vld [vmem:[%s1626 + $0x41] sm:$0xff]
        %v1732 = vld [vmem:[%s1626 + $0x51] sm:$0xff]
        %v1733 = vld [vmem:[%s1626 + $0x61] sm:$0xff]
        %v1734 = vld [vmem:[%s1626 + $0x71] sm:$0xff]
        %v1735 = vld [vmem:[%s1626 + $0xa1] sm:$0xff]
        %v1736 = vld [vmem:[%s1626 + $0xb1] sm:$0xff]
        %v1737 = vld [vmem:[%s1626 + $0xc1] sm:$0xff]
        %v1738 = vld [vmem:[%s1626 + $0xd1] sm:$0xff]
        %v1739 = vld [vmem:[%s1626 + $0xe1] sm:$0xff]
        %v1740 = vld [vmem:[%s1626 + $0xf1] sm:$0xff]
        %v1741 = vld [vmem:[%s1626 + $0x101] sm:$0xff]
        %v1742 = vld [vmem:[%s1626 + $0x111] sm:$0xff]
        %v1743 = vld [vmem:[%s1626 + $0x141] sm:$0xff]
        %v1744 = vld [vmem:[%s1626 + $0x151] sm:$0xff]
        %v1745 = vld [vmem:[%s1626 + $0x161] sm:$0xff]
        %v1746 = vld [vmem:[%s1626 + $0x171] sm:$0xff]
        %v1747 = vld [vmem:[%s1626 + $0x181] sm:$0xff]
        %v1748 = vld [vmem:[%s1626 + $0x191] sm:$0xff]
        %v1749 = vld [vmem:[%s1626 + $0x1a1] sm:$0xff]
        %v1750 = vld [vmem:[%s1626 + $0x1b1] sm:$0xff]
        %v1751 = vld [vmem:[%s1626 + $0x1e1] sm:$0xff]
        %v1752 = vld [vmem:[%s1626 + $0x1f1] sm:$0xff]
        %v1753 = vld [vmem:[%s1626 + $0x201] sm:$0xff]
        %v1754 = vld [vmem:[%s1626 + $0x211] sm:$0xff]
        %v1755 = vld [vmem:[%s1626 + $0x221] sm:$0xff]
        %v1756 = vld [vmem:[%s1626 + $0x231] sm:$0xff]
        %v1757 = vld [vmem:[%s1626 + $0x241] sm:$0xff]
        %v1758 = vld [vmem:[%s1626 + $0x251] sm:$0xff]
        %v1759 = vlaneseq
        %v1760 = vshrl.u32 %v1759, 7
        %v1761 = vsub.s32 7, %v1760
        %v1762 = vrot.slane %v1021, %v1761
        %v1763 = vmul.f32 %v1727, %v1762
        %v1764 = vmul.f32 %v1728, %v1762
        %v1765 = vmul.f32 %v1729, %v1762
        %v1766 = vmul.f32 %v1730, %v1762
        %v1767 = vmul.f32 %v1731, %v1762
        %v1768 = vmul.f32 %v1732, %v1762
        %v1769 = vmul.f32 %v1733, %v1762
        %v1770 = vmul.f32 %v1734, %v1762
        %v1771 = vmul.f32 %v1735, %v1762
        %v1772 = vmul.f32 %v1736, %v1762
        %v1773 = vmul.f32 %v1737, %v1762
        %v1774 = vmul.f32 %v1738, %v1762
        %v1775 = vmul.f32 %v1739, %v1762
        %v1776 = vmul.f32 %v1740, %v1762
        %v1777 = vmul.f32 %v1741, %v1762
        %v1778 = vmul.f32 %v1742, %v1762
        %v1779 = vmul.f32 %v1743, %v1762
        %v1780 = vmul.f32 %v1744, %v1762
        %v1781 = vmul.f32 %v1745, %v1762
        %v1782 = vmul.f32 %v1746, %v1762
        %v1783 = vmul.f32 %v1747, %v1762
        %v1784 = vmul.f32 %v1748, %v1762
        %v1785 = vmul.f32 %v1749, %v1762
        %v1786 = vmul.f32 %v1750, %v1762
        %v1787 = vmul.f32 %v1751, %v1762
        %v1788 = vmul.f32 %v1752, %v1762
        %v1789 = vmul.f32 %v1753, %v1762
        %v1790 = vmul.f32 %v1754, %v1762
        %v1791 = vmul.f32 %v1755, %v1762
        %v1792 = vmul.f32 %v1756, %v1762
        %v1793 = vmul.f32 %v1757, %v1762
        %v1794 = vmul.f32 %v1758, %v1762
        %v1795 = vadd.f32 %v1695, %v1763
        %v1796 = vadd.f32 %v1696, %v1764
        %v1797 = vadd.f32 %v1697, %v1765
        %v1798 = vadd.f32 %v1698, %v1766
        %v1799 = vadd.f32 %v1699, %v1767
        %v1800 = vadd.f32 %v1700, %v1768
        %v1801 = vadd.f32 %v1701, %v1769
        %v1802 = vadd.f32 %v1702, %v1770
        %v1803 = vadd.f32 %v1703, %v1771
        %v1804 = vadd.f32 %v1704, %v1772
        %v1805 = vadd.f32 %v1705, %v1773
        %v1806 = vadd.f32 %v1706, %v1774
        %v1807 = vadd.f32 %v1707, %v1775
        %v1808 = vadd.f32 %v1708, %v1776
        %v1809 = vadd.f32 %v1709, %v1777
        %v1810 = vadd.f32 %v1710, %v1778
        %v1811 = vadd.f32 %v1711, %v1779
        %v1812 = vadd.f32 %v1712, %v1780
        %v1813 = vadd.f32 %v1713, %v1781
        %v1814 = vadd.f32 %v1714, %v1782
        %v1815 = vadd.f32 %v1715, %v1783
        %v1816 = vadd.f32 %v1716, %v1784
        %v1817 = vadd.f32 %v1717, %v1785
        %v1818 = vadd.f32 %v1718, %v1786
        %v1819 = vadd.f32 %v1719, %v1787
        %v1820 = vadd.f32 %v1720, %v1788
        %v1821 = vadd.f32 %v1721, %v1789
        %v1822 = vadd.f32 %v1722, %v1790
        %v1823 = vadd.f32 %v1723, %v1791
        %v1824 = vadd.f32 %v1724, %v1792
        %v1825 = vadd.f32 %v1725, %v1793
        %v1826 = vadd.f32 %v1726, %v1794
        %v1827 = vld [vmem:[%s1626 + $0x2] sm:$0xff]
        %v1828 = vld [vmem:[%s1626 + $0x12] sm:$0xff]
        %v1829 = vld [vmem:[%s1626 + $0x22] sm:$0xff]
        %v1830 = vld [vmem:[%s1626 + $0x32] sm:$0xff]
        %v1831 = vld [vmem:[%s1626 + $0x42] sm:$0xff]
        %v1832 = vld [vmem:[%s1626 + $0x52] sm:$0xff]
        %v1833 = vld [vmem:[%s1626 + $0x62] sm:$0xff]
        %v1834 = vld [vmem:[%s1626 + $0x72] sm:$0xff]
        %v1835 = vld [vmem:[%s1626 + $0xa2] sm:$0xff]
        %v1836 = vld [vmem:[%s1626 + $0xb2] sm:$0xff]
        %v1837 = vld [vmem:[%s1626 + $0xc2] sm:$0xff]
        %v1838 = vld [vmem:[%s1626 + $0xd2] sm:$0xff]
        %v1839 = vld [vmem:[%s1626 + $0xe2] sm:$0xff]
        %v1840 = vld [vmem:[%s1626 + $0xf2] sm:$0xff]
        %v1841 = vld [vmem:[%s1626 + $0x102] sm:$0xff]
        %v1842 = vld [vmem:[%s1626 + $0x112] sm:$0xff]
        %v1843 = vld [vmem:[%s1626 + $0x142] sm:$0xff]
        %v1844 = vld [vmem:[%s1626 + $0x152] sm:$0xff]
        %v1845 = vld [vmem:[%s1626 + $0x162] sm:$0xff]
        %v1846 = vld [vmem:[%s1626 + $0x172] sm:$0xff]
        %v1847 = vld [vmem:[%s1626 + $0x182] sm:$0xff]
        %v1848 = vld [vmem:[%s1626 + $0x192] sm:$0xff]
        %v1849 = vld [vmem:[%s1626 + $0x1a2] sm:$0xff]
        %v1850 = vld [vmem:[%s1626 + $0x1b2] sm:$0xff]
        %v1851 = vld [vmem:[%s1626 + $0x1e2] sm:$0xff]
        %v1852 = vld [vmem:[%s1626 + $0x1f2] sm:$0xff]
        %v1853 = vld [vmem:[%s1626 + $0x202] sm:$0xff]
        %v1854 = vld [vmem:[%s1626 + $0x212] sm:$0xff]
        %v1855 = vld [vmem:[%s1626 + $0x222] sm:$0xff]
        %v1856 = vld [vmem:[%s1626 + $0x232] sm:$0xff]
        %v1857 = vld [vmem:[%s1626 + $0x242] sm:$0xff]
        %v1858 = vld [vmem:[%s1626 + $0x252] sm:$0xff]
        %v1859 = vlaneseq
        %v1860 = vshrl.u32 %v1859, 7
        %v1861 = vsub.s32 0, %v1860
        %v1862 = vrot.slane %v1022, %v1861
        %v1863 = vmul.f32 %v1827, %v1862
        %v1864 = vmul.f32 %v1828, %v1862
        %v1865 = vmul.f32 %v1829, %v1862
        %v1866 = vmul.f32 %v1830, %v1862
        %v1867 = vmul.f32 %v1831, %v1862
        %v1868 = vmul.f32 %v1832, %v1862
        %v1869 = vmul.f32 %v1833, %v1862
        %v1870 = vmul.f32 %v1834, %v1862
        %v1871 = vmul.f32 %v1835, %v1862
        %v1872 = vmul.f32 %v1836, %v1862
        %v1873 = vmul.f32 %v1837, %v1862
        %v1874 = vmul.f32 %v1838, %v1862
        %v1875 = vmul.f32 %v1839, %v1862
        %v1876 = vmul.f32 %v1840, %v1862
        %v1877 = vmul.f32 %v1841, %v1862
        %v1878 = vmul.f32 %v1842, %v1862
        %v1879 = vmul.f32 %v1843, %v1862
        %v1880 = vmul.f32 %v1844, %v1862
        %v1881 = vmul.f32 %v1845, %v1862
        %v1882 = vmul.f32 %v1846, %v1862
        %v1883 = vmul.f32 %v1847, %v1862
        %v1884 = vmul.f32 %v1848, %v1862
        %v1885 = vmul.f32 %v1849, %v1862
        %v1886 = vmul.f32 %v1850, %v1862
        %v1887 = vmul.f32 %v1851, %v1862
        %v1888 = vmul.f32 %v1852, %v1862
        %v1889 = vmul.f32 %v1853, %v1862
        %v1890 = vmul.f32 %v1854, %v1862
        %v1891 = vmul.f32 %v1855, %v1862
        %v1892 = vmul.f32 %v1856, %v1862
        %v1893 = vmul.f32 %v1857, %v1862
        %v1894 = vmul.f32 %v1858, %v1862
        %v1895 = vadd.f32 %v1795, %v1863
        %v1896 = vadd.f32 %v1796, %v1864
        %v1897 = vadd.f32 %v1797, %v1865
        %v1898 = vadd.f32 %v1798, %v1866
        %v1899 = vadd.f32 %v1799, %v1867
        %v1900 = vadd.f32 %v1800, %v1868
        %v1901 = vadd.f32 %v1801, %v1869
        %v1902 = vadd.f32 %v1802, %v1870
        %v1903 = vadd.f32 %v1803, %v1871
        %v1904 = vadd.f32 %v1804, %v1872
        %v1905 = vadd.f32 %v1805, %v1873
        %v1906 = vadd.f32 %v1806, %v1874
        %v1907 = vadd.f32 %v1807, %v1875
        %v1908 = vadd.f32 %v1808, %v1876
        %v1909 = vadd.f32 %v1809, %v1877
        %v1910 = vadd.f32 %v1810, %v1878
        %v1911 = vadd.f32 %v1811, %v1879
        %v1912 = vadd.f32 %v1812, %v1880
        %v1913 = vadd.f32 %v1813, %v1881
        %v1914 = vadd.f32 %v1814, %v1882
        %v1915 = vadd.f32 %v1815, %v1883
        %v1916 = vadd.f32 %v1816, %v1884
        %v1917 = vadd.f32 %v1817, %v1885
        %v1918 = vadd.f32 %v1818, %v1886
        %v1919 = vadd.f32 %v1819, %v1887
        %v1920 = vadd.f32 %v1820, %v1888
        %v1921 = vadd.f32 %v1821, %v1889
        %v1922 = vadd.f32 %v1822, %v1890
        %v1923 = vadd.f32 %v1823, %v1891
        %v1924 = vadd.f32 %v1824, %v1892
        %v1925 = vadd.f32 %v1825, %v1893
        %v1926 = vadd.f32 %v1826, %v1894
        %s1927 = scalar_lea.vmem [#allocation2], 160
        %v1928 = vld [vmem:[%s1927] sm:$0xff]
        %v1929 = vld [vmem:[%s1927 + $0x10] sm:$0xff]
        %v1930 = vld [vmem:[%s1927 + $0x20] sm:$0xff]
        %v1931 = vld [vmem:[%s1927 + $0x30] sm:$0xff]
        %v1932 = vld [vmem:[%s1927 + $0x40] sm:$0xff]
        %v1933 = vld [vmem:[%s1927 + $0x50] sm:$0xff]
        %v1934 = vld [vmem:[%s1927 + $0x60] sm:$0xff]
        %v1935 = vld [vmem:[%s1927 + $0x70] sm:$0xff]
        %v1936 = vld [vmem:[%s1927 + $0xa0] sm:$0xff]
        %v1937 = vld [vmem:[%s1927 + $0xb0] sm:$0xff]
        %v1938 = vld [vmem:[%s1927 + $0xc0] sm:$0xff]
        %v1939 = vld [vmem:[%s1927 + $0xd0] sm:$0xff]
        %v1940 = vld [vmem:[%s1927 + $0xe0] sm:$0xff]
        %v1941 = vld [vmem:[%s1927 + $0xf0] sm:$0xff]
        %v1942 = vld [vmem:[%s1927 + $0x100] sm:$0xff]
        %v1943 = vld [vmem:[%s1927 + $0x110] sm:$0xff]
        %v1944 = vld [vmem:[%s1927 + $0x140] sm:$0xff]
        %v1945 = vld [vmem:[%s1927 + $0x150] sm:$0xff]
        %v1946 = vld [vmem:[%s1927 + $0x160] sm:$0xff]
        %v1947 = vld [vmem:[%s1927 + $0x170] sm:$0xff]
        %v1948 = vld [vmem:[%s1927 + $0x180] sm:$0xff]
        %v1949 = vld [vmem:[%s1927 + $0x190] sm:$0xff]
        %v1950 = vld [vmem:[%s1927 + $0x1a0] sm:$0xff]
        %v1951 = vld [vmem:[%s1927 + $0x1b0] sm:$0xff]
        %v1952 = vld [vmem:[%s1927 + $0x1e0] sm:$0xff]
        %v1953 = vld [vmem:[%s1927 + $0x1f0] sm:$0xff]
        %v1954 = vld [vmem:[%s1927 + $0x200] sm:$0xff]
        %v1955 = vld [vmem:[%s1927 + $0x210] sm:$0xff]
        %v1956 = vld [vmem:[%s1927 + $0x220] sm:$0xff]
        %v1957 = vld [vmem:[%s1927 + $0x230] sm:$0xff]
        %v1958 = vld [vmem:[%s1927 + $0x240] sm:$0xff]
        %v1959 = vld [vmem:[%s1927 + $0x250] sm:$0xff]
        %v1960 = vlaneseq
        %v1961 = vshrl.u32 %v1960, 7
        %v1962 = vsub.s32 1, %v1961
        %v1963 = vrot.slane %v1022, %v1962
        %v1964 = vmul.f32 %v1928, %v1963
        %v1965 = vmul.f32 %v1929, %v1963
        %v1966 = vmul.f32 %v1930, %v1963
        %v1967 = vmul.f32 %v1931, %v1963
        %v1968 = vmul.f32 %v1932, %v1963
        %v1969 = vmul.f32 %v1933, %v1963
        %v1970 = vmul.f32 %v1934, %v1963
        %v1971 = vmul.f32 %v1935, %v1963
        %v1972 = vmul.f32 %v1936, %v1963
        %v1973 = vmul.f32 %v1937, %v1963
        %v1974 = vmul.f32 %v1938, %v1963
        %v1975 = vmul.f32 %v1939, %v1963
        %v1976 = vmul.f32 %v1940, %v1963
        %v1977 = vmul.f32 %v1941, %v1963
        %v1978 = vmul.f32 %v1942, %v1963
        %v1979 = vmul.f32 %v1943, %v1963
        %v1980 = vmul.f32 %v1944, %v1963
        %v1981 = vmul.f32 %v1945, %v1963
        %v1982 = vmul.f32 %v1946, %v1963
        %v1983 = vmul.f32 %v1947, %v1963
        %v1984 = vmul.f32 %v1948, %v1963
        %v1985 = vmul.f32 %v1949, %v1963
        %v1986 = vmul.f32 %v1950, %v1963
        %v1987 = vmul.f32 %v1951, %v1963
        %v1988 = vmul.f32 %v1952, %v1963
        %v1989 = vmul.f32 %v1953, %v1963
        %v1990 = vmul.f32 %v1954, %v1963
        %v1991 = vmul.f32 %v1955, %v1963
        %v1992 = vmul.f32 %v1956, %v1963
        %v1993 = vmul.f32 %v1957, %v1963
        %v1994 = vmul.f32 %v1958, %v1963
        %v1995 = vmul.f32 %v1959, %v1963
        %v1996 = vadd.f32 %v1895, %v1964
        %v1997 = vadd.f32 %v1896, %v1965
        %v1998 = vadd.f32 %v1897, %v1966
        %v1999 = vadd.f32 %v1898, %v1967
        %v2000 = vadd.f32 %v1899, %v1968
        %v2001 = vadd.f32 %v1900, %v1969
        %v2002 = vadd.f32 %v1901, %v1970
        %v2003 = vadd.f32 %v1902, %v1971
        %v2004 = vadd.f32 %v1903, %v1972
        %v2005 = vadd.f32 %v1904, %v1973
        %v2006 = vadd.f32 %v1905, %v1974
        %v2007 = vadd.f32 %v1906, %v1975
        %v2008 = vadd.f32 %v1907, %v1976
        %v2009 = vadd.f32 %v1908, %v1977
        %v2010 = vadd.f32 %v1909, %v1978
        %v2011 = vadd.f32 %v1910, %v1979
        %v2012 = vadd.f32 %v1911, %v1980
        %v2013 = vadd.f32 %v1912, %v1981
        %v2014 = vadd.f32 %v1913, %v1982
        %v2015 = vadd.f32 %v1914, %v1983
        %v2016 = vadd.f32 %v1915, %v1984
        %v2017 = vadd.f32 %v1916, %v1985
        %v2018 = vadd.f32 %v1917, %v1986
        %v2019 = vadd.f32 %v1918, %v1987
        %v2020 = vadd.f32 %v1919, %v1988
        %v2021 = vadd.f32 %v1920, %v1989
        %v2022 = vadd.f32 %v1921, %v1990
        %v2023 = vadd.f32 %v1922, %v1991
        %v2024 = vadd.f32 %v1923, %v1992
        %v2025 = vadd.f32 %v1924, %v1993
        %v2026 = vadd.f32 %v1925, %v1994
        %v2027 = vadd.f32 %v1926, %v1995
        %v2028 = vld [vmem:[%s1927 + $0x1] sm:$0xff]
        %v2029 = vld [vmem:[%s1927 + $0x11] sm:$0xff]
        %v2030 = vld [vmem:[%s1927 + $0x21] sm:$0xff]
        %v2031 = vld [vmem:[%s1927 + $0x31] sm:$0xff]
        %v2032 = vld [vmem:[%s1927 + $0x41] sm:$0xff]
        %v2033 = vld [vmem:[%s1927 + $0x51] sm:$0xff]
        %v2034 = vld [vmem:[%s1927 + $0x61] sm:$0xff]
        %v2035 = vld [vmem:[%s1927 + $0x71] sm:$0xff]
        %v2036 = vld [vmem:[%s1927 + $0xa1] sm:$0xff]
        %v2037 = vld [vmem:[%s1927 + $0xb1] sm:$0xff]
        %v2038 = vld [vmem:[%s1927 + $0xc1] sm:$0xff]
        %v2039 = vld [vmem:[%s1927 + $0xd1] sm:$0xff]
        %v2040 = vld [vmem:[%s1927 + $0xe1] sm:$0xff]
        %v2041 = vld [vmem:[%s1927 + $0xf1] sm:$0xff]
        %v2042 = vld [vmem:[%s1927 + $0x101] sm:$0xff]
        %v2043 = vld [vmem:[%s1927 + $0x111] sm:$0xff]
        %v2044 = vld [vmem:[%s1927 + $0x141] sm:$0xff]
        %v2045 = vld [vmem:[%s1927 + $0x151] sm:$0xff]
        %v2046 = vld [vmem:[%s1927 + $0x161] sm:$0xff]
        %v2047 = vld [vmem:[%s1927 + $0x171] sm:$0xff]
        %v2048 = vld [vmem:[%s1927 + $0x181] sm:$0xff]
        %v2049 = vld [vmem:[%s1927 + $0x191] sm:$0xff]
        %v2050 = vld [vmem:[%s1927 + $0x1a1] sm:$0xff]
        %v2051 = vld [vmem:[%s1927 + $0x1b1] sm:$0xff]
        %v2052 = vld [vmem:[%s1927 + $0x1e1] sm:$0xff]
        %v2053 = vld [vmem:[%s1927 + $0x1f1] sm:$0xff]
        %v2054 = vld [vmem:[%s1927 + $0x201] sm:$0xff]
        %v2055 = vld [vmem:[%s1927 + $0x211] sm:$0xff]
        %v2056 = vld [vmem:[%s1927 + $0x221] sm:$0xff]
        %v2057 = vld [vmem:[%s1927 + $0x231] sm:$0xff]
        %v2058 = vld [vmem:[%s1927 + $0x241] sm:$0xff]
        %v2059 = vld [vmem:[%s1927 + $0x251] sm:$0xff]
        %v2060 = vlaneseq
        %v2061 = vshrl.u32 %v2060, 7
        %v2062 = vsub.s32 2, %v2061
        %v2063 = vrot.slane %v1022, %v2062
        %v2064 = vmul.f32 %v2028, %v2063
        %v2065 = vmul.f32 %v2029, %v2063
        %v2066 = vmul.f32 %v2030, %v2063
        %v2067 = vmul.f32 %v2031, %v2063
        %v2068 = vmul.f32 %v2032, %v2063
        %v2069 = vmul.f32 %v2033, %v2063
        %v2070 = vmul.f32 %v2034, %v2063
        %v2071 = vmul.f32 %v2035, %v2063
        %v2072 = vmul.f32 %v2036, %v2063
        %v2073 = vmul.f32 %v2037, %v2063
        %v2074 = vmul.f32 %v2038, %v2063
        %v2075 = vmul.f32 %v2039, %v2063
        %v2076 = vmul.f32 %v2040, %v2063
        %v2077 = vmul.f32 %v2041, %v2063
        %v2078 = vmul.f32 %v2042, %v2063
        %v2079 = vmul.f32 %v2043, %v2063
        %v2080 = vmul.f32 %v2044, %v2063
        %v2081 = vmul.f32 %v2045, %v2063
        %v2082 = vmul.f32 %v2046, %v2063
        %v2083 = vmul.f32 %v2047, %v2063
        %v2084 = vmul.f32 %v2048, %v2063
        %v2085 = vmul.f32 %v2049, %v2063
        %v2086 = vmul.f32 %v2050, %v2063
        %v2087 = vmul.f32 %v2051, %v2063
        %v2088 = vmul.f32 %v2052, %v2063
        %v2089 = vmul.f32 %v2053, %v2063
        %v2090 = vmul.f32 %v2054, %v2063
        %v2091 = vmul.f32 %v2055, %v2063
        %v2092 = vmul.f32 %v2056, %v2063
        %v2093 = vmul.f32 %v2057, %v2063
        %v2094 = vmul.f32 %v2058, %v2063
        %v2095 = vmul.f32 %v2059, %v2063
        %v2096 = vadd.f32 %v1996, %v2064
        %v2097 = vadd.f32 %v1997, %v2065
        %v2098 = vadd.f32 %v1998, %v2066
        %v2099 = vadd.f32 %v1999, %v2067
        %v2100 = vadd.f32 %v2000, %v2068
        %v2101 = vadd.f32 %v2001, %v2069
        %v2102 = vadd.f32 %v2002, %v2070
        %v2103 = vadd.f32 %v2003, %v2071
        %v2104 = vadd.f32 %v2004, %v2072
        %v2105 = vadd.f32 %v2005, %v2073
        %v2106 = vadd.f32 %v2006, %v2074
        %v2107 = vadd.f32 %v2007, %v2075
        %v2108 = vadd.f32 %v2008, %v2076
        %v2109 = vadd.f32 %v2009, %v2077
        %v2110 = vadd.f32 %v2010, %v2078
        %v2111 = vadd.f32 %v2011, %v2079
        %v2112 = vadd.f32 %v2012, %v2080
        %v2113 = vadd.f32 %v2013, %v2081
        %v2114 = vadd.f32 %v2014, %v2082
        %v2115 = vadd.f32 %v2015, %v2083
        %v2116 = vadd.f32 %v2016, %v2084
        %v2117 = vadd.f32 %v2017, %v2085
        %v2118 = vadd.f32 %v2018, %v2086
        %v2119 = vadd.f32 %v2019, %v2087
        %v2120 = vadd.f32 %v2020, %v2088
        %v2121 = vadd.f32 %v2021, %v2089
        %v2122 = vadd.f32 %v2022, %v2090
        %v2123 = vadd.f32 %v2023, %v2091
        %v2124 = vadd.f32 %v2024, %v2092
        %v2125 = vadd.f32 %v2025, %v2093
        %v2126 = vadd.f32 %v2026, %v2094
        %v2127 = vadd.f32 %v2027, %v2095
        %v2128 = vld [vmem:[%s1927 + $0x2] sm:$0xff]
        %v2129 = vld [vmem:[%s1927 + $0x12] sm:$0xff]
        %v2130 = vld [vmem:[%s1927 + $0x22] sm:$0xff]
        %v2131 = vld [vmem:[%s1927 + $0x32] sm:$0xff]
        %v2132 = vld [vmem:[%s1927 + $0x42] sm:$0xff]
        %v2133 = vld [vmem:[%s1927 + $0x52] sm:$0xff]
        %v2134 = vld [vmem:[%s1927 + $0x62] sm:$0xff]
        %v2135 = vld [vmem:[%s1927 + $0x72] sm:$0xff]
        %v2136 = vld [vmem:[%s1927 + $0xa2] sm:$0xff]
        %v2137 = vld [vmem:[%s1927 + $0xb2] sm:$0xff]
        %v2138 = vld [vmem:[%s1927 + $0xc2] sm:$0xff]
        %v2139 = vld [vmem:[%s1927 + $0xd2] sm:$0xff]
        %v2140 = vld [vmem:[%s1927 + $0xe2] sm:$0xff]
        %v2141 = vld [vmem:[%s1927 + $0xf2] sm:$0xff]
        %v2142 = vld [vmem:[%s1927 + $0x102] sm:$0xff]
        %v2143 = vld [vmem:[%s1927 + $0x112] sm:$0xff]
        %v2144 = vld [vmem:[%s1927 + $0x142] sm:$0xff]
        %v2145 = vld [vmem:[%s1927 + $0x152] sm:$0xff]
        %v2146 = vld [vmem:[%s1927 + $0x162] sm:$0xff]
        %v2147 = vld [vmem:[%s1927 + $0x172] sm:$0xff]
        %v2148 = vld [vmem:[%s1927 + $0x182] sm:$0xff]
        %v2149 = vld [vmem:[%s1927 + $0x192] sm:$0xff]
        %v2150 = vld [vmem:[%s1927 + $0x1a2] sm:$0xff]
        %v2151 = vld [vmem:[%s1927 + $0x1b2] sm:$0xff]
        %v2152 = vld [vmem:[%s1927 + $0x1e2] sm:$0xff]
        %v2153 = vld [vmem:[%s1927 + $0x1f2] sm:$0xff]
        %v2154 = vld [vmem:[%s1927 + $0x202] sm:$0xff]
        %v2155 = vld [vmem:[%s1927 + $0x212] sm:$0xff]
        %v2156 = vld [vmem:[%s1927 + $0x222] sm:$0xff]
        %v2157 = vld [vmem:[%s1927 + $0x232] sm:$0xff]
        %v2158 = vld [vmem:[%s1927 + $0x242] sm:$0xff]
        %v2159 = vld [vmem:[%s1927 + $0x252] sm:$0xff]
        %v2160 = vlaneseq
        %v2161 = vshrl.u32 %v2160, 7
        %v2162 = vsub.s32 3, %v2161
        %v2163 = vrot.slane %v1022, %v2162
        %v2164 = vmul.f32 %v2128, %v2163
        %v2165 = vmul.f32 %v2129, %v2163
        %v2166 = vmul.f32 %v2130, %v2163
        %v2167 = vmul.f32 %v2131, %v2163
        %v2168 = vmul.f32 %v2132, %v2163
        %v2169 = vmul.f32 %v2133, %v2163
        %v2170 = vmul.f32 %v2134, %v2163
        %v2171 = vmul.f32 %v2135, %v2163
        %v2172 = vmul.f32 %v2136, %v2163
        %v2173 = vmul.f32 %v2137, %v2163
        %v2174 = vmul.f32 %v2138, %v2163
        %v2175 = vmul.f32 %v2139, %v2163
        %v2176 = vmul.f32 %v2140, %v2163
        %v2177 = vmul.f32 %v2141, %v2163
        %v2178 = vmul.f32 %v2142, %v2163
        %v2179 = vmul.f32 %v2143, %v2163
        %v2180 = vmul.f32 %v2144, %v2163
        %v2181 = vmul.f32 %v2145, %v2163
        %v2182 = vmul.f32 %v2146, %v2163
        %v2183 = vmul.f32 %v2147, %v2163
        %v2184 = vmul.f32 %v2148, %v2163
        %v2185 = vmul.f32 %v2149, %v2163
        %v2186 = vmul.f32 %v2150, %v2163
        %v2187 = vmul.f32 %v2151, %v2163
        %v2188 = vmul.f32 %v2152, %v2163
        %v2189 = vmul.f32 %v2153, %v2163
        %v2190 = vmul.f32 %v2154, %v2163
        %v2191 = vmul.f32 %v2155, %v2163
        %v2192 = vmul.f32 %v2156, %v2163
        %v2193 = vmul.f32 %v2157, %v2163
        %v2194 = vmul.f32 %v2158, %v2163
        %v2195 = vmul.f32 %v2159, %v2163
        %v2196 = vadd.f32 %v2096, %v2164
        %v2197 = vadd.f32 %v2097, %v2165
        %v2198 = vadd.f32 %v2098, %v2166
        %v2199 = vadd.f32 %v2099, %v2167
        %v2200 = vadd.f32 %v2100, %v2168
        %v2201 = vadd.f32 %v2101, %v2169
        %v2202 = vadd.f32 %v2102, %v2170
        %v2203 = vadd.f32 %v2103, %v2171
        %v2204 = vadd.f32 %v2104, %v2172
        %v2205 = vadd.f32 %v2105, %v2173
        %v2206 = vadd.f32 %v2106, %v2174
        %v2207 = vadd.f32 %v2107, %v2175
        %v2208 = vadd.f32 %v2108, %v2176
        %v2209 = vadd.f32 %v2109, %v2177
        %v2210 = vadd.f32 %v2110, %v2178
        %v2211 = vadd.f32 %v2111, %v2179
        %v2212 = vadd.f32 %v2112, %v2180
        %v2213 = vadd.f32 %v2113, %v2181
        %v2214 = vadd.f32 %v2114, %v2182
        %v2215 = vadd.f32 %v2115, %v2183
        %v2216 = vadd.f32 %v2116, %v2184
        %v2217 = vadd.f32 %v2117, %v2185
        %v2218 = vadd.f32 %v2118, %v2186
        %v2219 = vadd.f32 %v2119, %v2187
        %v2220 = vadd.f32 %v2120, %v2188
        %v2221 = vadd.f32 %v2121, %v2189
        %v2222 = vadd.f32 %v2122, %v2190
        %v2223 = vadd.f32 %v2123, %v2191
        %v2224 = vadd.f32 %v2124, %v2192
        %v2225 = vadd.f32 %v2125, %v2193
        %v2226 = vadd.f32 %v2126, %v2194
        %v2227 = vadd.f32 %v2127, %v2195
        %v2228 = vld [vmem:[%s988] sm:$0xff]
        %v2229 = vld [vmem:[%s988 + $0x10] sm:$0xff]
        %v2230 = vld [vmem:[%s988 + $0x20] sm:$0xff]
        %v2231 = vld [vmem:[%s988 + $0x30] sm:$0xff]
        %v2232 = vld [vmem:[%s988 + $0x40] sm:$0xff]
        %v2233 = vld [vmem:[%s988 + $0x50] sm:$0xff]
        %v2234 = vld [vmem:[%s988 + $0x60] sm:$0xff]
        %v2235 = vld [vmem:[%s988 + $0x70] sm:$0xff]
        %v2236 = vld [vmem:[%s988 + $0xa0] sm:$0xff]
        %v2237 = vld [vmem:[%s988 + $0xb0] sm:$0xff]
        %v2238 = vld [vmem:[%s988 + $0xc0] sm:$0xff]
        %v2239 = vld [vmem:[%s988 + $0xd0] sm:$0xff]
        %v2240 = vld [vmem:[%s988 + $0xe0] sm:$0xff]
        %v2241 = vld [vmem:[%s988 + $0xf0] sm:$0xff]
        %v2242 = vld [vmem:[%s988 + $0x100] sm:$0xff]
        %v2243 = vld [vmem:[%s988 + $0x110] sm:$0xff]
        %v2244 = vld [vmem:[%s988 + $0x140] sm:$0xff]
        %v2245 = vld [vmem:[%s988 + $0x150] sm:$0xff]
        %v2246 = vld [vmem:[%s988 + $0x160] sm:$0xff]
        %v2247 = vld [vmem:[%s988 + $0x170] sm:$0xff]
        %v2248 = vld [vmem:[%s988 + $0x180] sm:$0xff]
        %v2249 = vld [vmem:[%s988 + $0x190] sm:$0xff]
        %v2250 = vld [vmem:[%s988 + $0x1a0] sm:$0xff]
        %v2251 = vld [vmem:[%s988 + $0x1b0] sm:$0xff]
        %v2252 = vld [vmem:[%s988 + $0x1e0] sm:$0xff]
        %v2253 = vld [vmem:[%s988 + $0x1f0] sm:$0xff]
        %v2254 = vld [vmem:[%s988 + $0x200] sm:$0xff]
        %v2255 = vld [vmem:[%s988 + $0x210] sm:$0xff]
        %v2256 = vld [vmem:[%s988 + $0x220] sm:$0xff]
        %v2257 = vld [vmem:[%s988 + $0x230] sm:$0xff]
        %v2258 = vld [vmem:[%s988 + $0x240] sm:$0xff]
        %v2259 = vld [vmem:[%s988 + $0x250] sm:$0xff]
        %v2260 = vlaneseq
        %v2261 = vshrl.u32 %v2260, 7
        %v2262 = vsub.s32 4, %v2261
        %v2263 = vrot.slane %v1022, %v2262
        %v2264 = vmul.f32 %v2228, %v2263
        %v2265 = vmul.f32 %v2229, %v2263
        %v2266 = vmul.f32 %v2230, %v2263
        %v2267 = vmul.f32 %v2231, %v2263
        %v2268 = vmul.f32 %v2232, %v2263
        %v2269 = vmul.f32 %v2233, %v2263
        %v2270 = vmul.f32 %v2234, %v2263
        %v2271 = vmul.f32 %v2235, %v2263
        %v2272 = vmul.f32 %v2236, %v2263
        %v2273 = vmul.f32 %v2237, %v2263
        %v2274 = vmul.f32 %v2238, %v2263
        %v2275 = vmul.f32 %v2239, %v2263
        %v2276 = vmul.f32 %v2240, %v2263
        %v2277 = vmul.f32 %v2241, %v2263
        %v2278 = vmul.f32 %v2242, %v2263
        %v2279 = vmul.f32 %v2243, %v2263
        %v2280 = vmul.f32 %v2244, %v2263
        %v2281 = vmul.f32 %v2245, %v2263
        %v2282 = vmul.f32 %v2246, %v2263
        %v2283 = vmul.f32 %v2247, %v2263
        %v2284 = vmul.f32 %v2248, %v2263
        %v2285 = vmul.f32 %v2249, %v2263
        %v2286 = vmul.f32 %v2250, %v2263
        %v2287 = vmul.f32 %v2251, %v2263
        %v2288 = vmul.f32 %v2252, %v2263
        %v2289 = vmul.f32 %v2253, %v2263
        %v2290 = vmul.f32 %v2254, %v2263
        %v2291 = vmul.f32 %v2255, %v2263
        %v2292 = vmul.f32 %v2256, %v2263
        %v2293 = vmul.f32 %v2257, %v2263
        %v2294 = vmul.f32 %v2258, %v2263
        %v2295 = vmul.f32 %v2259, %v2263
        %v2296 = vadd.f32 %v2196, %v2264
        %v2297 = vadd.f32 %v2197, %v2265
        %v2298 = vadd.f32 %v2198, %v2266
        %v2299 = vadd.f32 %v2199, %v2267
        %v2300 = vadd.f32 %v2200, %v2268
        %v2301 = vadd.f32 %v2201, %v2269
        %v2302 = vadd.f32 %v2202, %v2270
        %v2303 = vadd.f32 %v2203, %v2271
        %v2304 = vadd.f32 %v2204, %v2272
        %v2305 = vadd.f32 %v2205, %v2273
        %v2306 = vadd.f32 %v2206, %v2274
        %v2307 = vadd.f32 %v2207, %v2275
        %v2308 = vadd.f32 %v2208, %v2276
        %v2309 = vadd.f32 %v2209, %v2277
        %v2310 = vadd.f32 %v2210, %v2278
        %v2311 = vadd.f32 %v2211, %v2279
        %v2312 = vadd.f32 %v2212, %v2280
        %v2313 = vadd.f32 %v2213, %v2281
        %v2314 = vadd.f32 %v2214, %v2282
        %v2315 = vadd.f32 %v2215, %v2283
        %v2316 = vadd.f32 %v2216, %v2284
        %v2317 = vadd.f32 %v2217, %v2285
        %v2318 = vadd.f32 %v2218, %v2286
        %v2319 = vadd.f32 %v2219, %v2287
        %v2320 = vadd.f32 %v2220, %v2288
        %v2321 = vadd.f32 %v2221, %v2289
        %v2322 = vadd.f32 %v2222, %v2290
        %v2323 = vadd.f32 %v2223, %v2291
        %v2324 = vadd.f32 %v2224, %v2292
        %v2325 = vadd.f32 %v2225, %v2293
        %v2326 = vadd.f32 %v2226, %v2294
        %v2327 = vadd.f32 %v2227, %v2295
        %v2328 = vld [vmem:[%s988 + $0x1] sm:$0xff]
        %v2329 = vld [vmem:[%s988 + $0x11] sm:$0xff]
        %v2330 = vld [vmem:[%s988 + $0x21] sm:$0xff]
        %v2331 = vld [vmem:[%s988 + $0x31] sm:$0xff]
        %v2332 = vld [vmem:[%s988 + $0x41] sm:$0xff]
        %v2333 = vld [vmem:[%s988 + $0x51] sm:$0xff]
        %v2334 = vld [vmem:[%s988 + $0x61] sm:$0xff]
        %v2335 = vld [vmem:[%s988 + $0x71] sm:$0xff]
        %v2336 = vld [vmem:[%s988 + $0xa1] sm:$0xff]
        %v2337 = vld [vmem:[%s988 + $0xb1] sm:$0xff]
        %v2338 = vld [vmem:[%s988 + $0xc1] sm:$0xff]
        %v2339 = vld [vmem:[%s988 + $0xd1] sm:$0xff]
        %v2340 = vld [vmem:[%s988 + $0xe1] sm:$0xff]
        %v2341 = vld [vmem:[%s988 + $0xf1] sm:$0xff]
        %v2342 = vld [vmem:[%s988 + $0x101] sm:$0xff]
        %v2343 = vld [vmem:[%s988 + $0x111] sm:$0xff]
        %v2344 = vld [vmem:[%s988 + $0x141] sm:$0xff]
        %v2345 = vld [vmem:[%s988 + $0x151] sm:$0xff]
        %v2346 = vld [vmem:[%s988 + $0x161] sm:$0xff]
        %v2347 = vld [vmem:[%s988 + $0x171] sm:$0xff]
        %v2348 = vld [vmem:[%s988 + $0x181] sm:$0xff]
        %v2349 = vld [vmem:[%s988 + $0x191] sm:$0xff]
        %v2350 = vld [vmem:[%s988 + $0x1a1] sm:$0xff]
        %v2351 = vld [vmem:[%s988 + $0x1b1] sm:$0xff]
        %v2352 = vld [vmem:[%s988 + $0x1e1] sm:$0xff]
        %v2353 = vld [vmem:[%s988 + $0x1f1] sm:$0xff]
        %v2354 = vld [vmem:[%s988 + $0x201] sm:$0xff]
        %v2355 = vld [vmem:[%s988 + $0x211] sm:$0xff]
        %v2356 = vld [vmem:[%s988 + $0x221] sm:$0xff]
        %v2357 = vld [vmem:[%s988 + $0x231] sm:$0xff]
        %v2358 = vld [vmem:[%s988 + $0x241] sm:$0xff]
        %v2359 = vld [vmem:[%s988 + $0x251] sm:$0xff]
        %v2360 = vlaneseq
        %v2361 = vshrl.u32 %v2360, 7
        %v2362 = vsub.s32 5, %v2361
        %v2363 = vrot.slane %v1022, %v2362
        %v2364 = vmul.f32 %v2328, %v2363
        %v2365 = vmul.f32 %v2329, %v2363
        %v2366 = vmul.f32 %v2330, %v2363
        %v2367 = vmul.f32 %v2331, %v2363
        %v2368 = vmul.f32 %v2332, %v2363
        %v2369 = vmul.f32 %v2333, %v2363
        %v2370 = vmul.f32 %v2334, %v2363
        %v2371 = vmul.f32 %v2335, %v2363
        %v2372 = vmul.f32 %v2336, %v2363
        %v2373 = vmul.f32 %v2337, %v2363
        %v2374 = vmul.f32 %v2338, %v2363
        %v2375 = vmul.f32 %v2339, %v2363
        %v2376 = vmul.f32 %v2340, %v2363
        %v2377 = vmul.f32 %v2341, %v2363
        %v2378 = vmul.f32 %v2342, %v2363
        %v2379 = vmul.f32 %v2343, %v2363
        %v2380 = vmul.f32 %v2344, %v2363
        %v2381 = vmul.f32 %v2345, %v2363
        %v2382 = vmul.f32 %v2346, %v2363
        %v2383 = vmul.f32 %v2347, %v2363
        %v2384 = vmul.f32 %v2348, %v2363
        %v2385 = vmul.f32 %v2349, %v2363
        %v2386 = vmul.f32 %v2350, %v2363
        %v2387 = vmul.f32 %v2351, %v2363
        %v2388 = vmul.f32 %v2352, %v2363
        %v2389 = vmul.f32 %v2353, %v2363
        %v2390 = vmul.f32 %v2354, %v2363
        %v2391 = vmul.f32 %v2355, %v2363
        %v2392 = vmul.f32 %v2356, %v2363
        %v2393 = vmul.f32 %v2357, %v2363
        %v2394 = vmul.f32 %v2358, %v2363
        %v2395 = vmul.f32 %v2359, %v2363
        %v2396 = vadd.f32 %v2296, %v2364
        %v2397 = vadd.f32 %v2297, %v2365
        %v2398 = vadd.f32 %v2298, %v2366
        %v2399 = vadd.f32 %v2299, %v2367
        %v2400 = vadd.f32 %v2300, %v2368
        %v2401 = vadd.f32 %v2301, %v2369
        %v2402 = vadd.f32 %v2302, %v2370
        %v2403 = vadd.f32 %v2303, %v2371
        %v2404 = vadd.f32 %v2304, %v2372
        %v2405 = vadd.f32 %v2305, %v2373
        %v2406 = vadd.f32 %v2306, %v2374
        %v2407 = vadd.f32 %v2307, %v2375
        %v2408 = vadd.f32 %v2308, %v2376
        %v2409 = vadd.f32 %v2309, %v2377
        %v2410 = vadd.f32 %v2310, %v2378
        %v2411 = vadd.f32 %v2311, %v2379
        %v2412 = vadd.f32 %v2312, %v2380
        %v2413 = vadd.f32 %v2313, %v2381
        %v2414 = vadd.f32 %v2314, %v2382
        %v2415 = vadd.f32 %v2315, %v2383
        %v2416 = vadd.f32 %v2316, %v2384
        %v2417 = vadd.f32 %v2317, %v2385
        %v2418 = vadd.f32 %v2318, %v2386
        %v2419 = vadd.f32 %v2319, %v2387
        %v2420 = vadd.f32 %v2320, %v2388
        %v2421 = vadd.f32 %v2321, %v2389
        %v2422 = vadd.f32 %v2322, %v2390
        %v2423 = vadd.f32 %v2323, %v2391
        %v2424 = vadd.f32 %v2324, %v2392
        %v2425 = vadd.f32 %v2325, %v2393
        %v2426 = vadd.f32 %v2326, %v2394
        %v2427 = vadd.f32 %v2327, %v2395
        %v2428 = vld [vmem:[%s988 + $0x2] sm:$0xff]
        %v2429 = vld [vmem:[%s988 + $0x12] sm:$0xff]
        %v2430 = vld [vmem:[%s988 + $0x22] sm:$0xff]
        %v2431 = vld [vmem:[%s988 + $0x32] sm:$0xff]
        %v2432 = vld [vmem:[%s988 + $0x42] sm:$0xff]
        %v2433 = vld [vmem:[%s988 + $0x52] sm:$0xff]
        %v2434 = vld [vmem:[%s988 + $0x62] sm:$0xff]
        %v2435 = vld [vmem:[%s988 + $0x72] sm:$0xff]
        %v2436 = vld [vmem:[%s988 + $0xa2] sm:$0xff]
        %v2437 = vld [vmem:[%s988 + $0xb2] sm:$0xff]
        %v2438 = vld [vmem:[%s988 + $0xc2] sm:$0xff]
        %v2439 = vld [vmem:[%s988 + $0xd2] sm:$0xff]
        %v2440 = vld [vmem:[%s988 + $0xe2] sm:$0xff]
        %v2441 = vld [vmem:[%s988 + $0xf2] sm:$0xff]
        %v2442 = vld [vmem:[%s988 + $0x102] sm:$0xff]
        %v2443 = vld [vmem:[%s988 + $0x112] sm:$0xff]
        %v2444 = vld [vmem:[%s988 + $0x142] sm:$0xff]
        %v2445 = vld [vmem:[%s988 + $0x152] sm:$0xff]
        %v2446 = vld [vmem:[%s988 + $0x162] sm:$0xff]
        %v2447 = vld [vmem:[%s988 + $0x172] sm:$0xff]
        %v2448 = vld [vmem:[%s988 + $0x182] sm:$0xff]
        %v2449 = vld [vmem:[%s988 + $0x192] sm:$0xff]
        %v2450 = vld [vmem:[%s988 + $0x1a2] sm:$0xff]
        %v2451 = vld [vmem:[%s988 + $0x1b2] sm:$0xff]
        %v2452 = vld [vmem:[%s988 + $0x1e2] sm:$0xff]
        %v2453 = vld [vmem:[%s988 + $0x1f2] sm:$0xff]
        %v2454 = vld [vmem:[%s988 + $0x202] sm:$0xff]
        %v2455 = vld [vmem:[%s988 + $0x212] sm:$0xff]
        %v2456 = vld [vmem:[%s988 + $0x222] sm:$0xff]
        %v2457 = vld [vmem:[%s988 + $0x232] sm:$0xff]
        %v2458 = vld [vmem:[%s988 + $0x242] sm:$0xff]
        %v2459 = vld [vmem:[%s988 + $0x252] sm:$0xff]
        %v2460 = vlaneseq
        %v2461 = vshrl.u32 %v2460, 7
        %v2462 = vsub.s32 6, %v2461
        %v2463 = vrot.slane %v1022, %v2462
        %v2464 = vmul.f32 %v2428, %v2463
        %v2465 = vmul.f32 %v2429, %v2463
        %v2466 = vmul.f32 %v2430, %v2463
        %v2467 = vmul.f32 %v2431, %v2463
        %v2468 = vmul.f32 %v2432, %v2463
        %v2469 = vmul.f32 %v2433, %v2463
        %v2470 = vmul.f32 %v2434, %v2463
        %v2471 = vmul.f32 %v2435, %v2463
        %v2472 = vmul.f32 %v2436, %v2463
        %v2473 = vmul.f32 %v2437, %v2463
        %v2474 = vmul.f32 %v2438, %v2463
        %v2475 = vmul.f32 %v2439, %v2463
        %v2476 = vmul.f32 %v2440, %v2463
        %v2477 = vmul.f32 %v2441, %v2463
        %v2478 = vmul.f32 %v2442, %v2463
        %v2479 = vmul.f32 %v2443, %v2463
        %v2480 = vmul.f32 %v2444, %v2463
        %v2481 = vmul.f32 %v2445, %v2463
        %v2482 = vmul.f32 %v2446, %v2463
        %v2483 = vmul.f32 %v2447, %v2463
        %v2484 = vmul.f32 %v2448, %v2463
        %v2485 = vmul.f32 %v2449, %v2463
        %v2486 = vmul.f32 %v2450, %v2463
        %v2487 = vmul.f32 %v2451, %v2463
        %v2488 = vmul.f32 %v2452, %v2463
        %v2489 = vmul.f32 %v2453, %v2463
        %v2490 = vmul.f32 %v2454, %v2463
        %v2491 = vmul.f32 %v2455, %v2463
        %v2492 = vmul.f32 %v2456, %v2463
        %v2493 = vmul.f32 %v2457, %v2463
        %v2494 = vmul.f32 %v2458, %v2463
        %v2495 = vmul.f32 %v2459, %v2463
        %v2496 = vadd.f32 %v2396, %v2464
        %v2497 = vadd.f32 %v2397, %v2465
        %v2498 = vadd.f32 %v2398, %v2466
        %v2499 = vadd.f32 %v2399, %v2467
        %v2500 = vadd.f32 %v2400, %v2468
        %v2501 = vadd.f32 %v2401, %v2469
        %v2502 = vadd.f32 %v2402, %v2470
        %v2503 = vadd.f32 %v2403, %v2471
        %v2504 = vadd.f32 %v2404, %v2472
        %v2505 = vadd.f32 %v2405, %v2473
        %v2506 = vadd.f32 %v2406, %v2474
        %v2507 = vadd.f32 %v2407, %v2475
        %v2508 = vadd.f32 %v2408, %v2476
        %v2509 = vadd.f32 %v2409, %v2477
        %v2510 = vadd.f32 %v2410, %v2478
        %v2511 = vadd.f32 %v2411, %v2479
        %v2512 = vadd.f32 %v2412, %v2480
        %v2513 = vadd.f32 %v2413, %v2481
        %v2514 = vadd.f32 %v2414, %v2482
        %v2515 = vadd.f32 %v2415, %v2483
        %v2516 = vadd.f32 %v2416, %v2484
        %v2517 = vadd.f32 %v2417, %v2485
        %v2518 = vadd.f32 %v2418, %v2486
        %v2519 = vadd.f32 %v2419, %v2487
        %v2520 = vadd.f32 %v2420, %v2488
        %v2521 = vadd.f32 %v2421, %v2489
        %v2522 = vadd.f32 %v2422, %v2490
        %v2523 = vadd.f32 %v2423, %v2491
        %v2524 = vadd.f32 %v2424, %v2492
        %v2525 = vadd.f32 %v2425, %v2493
        %v2526 = vadd.f32 %v2426, %v2494
        %v2527 = vadd.f32 %v2427, %v2495
        %s2528 = scalar_lea.vmem [#allocation2], 192
        %v2529 = vld [vmem:[%s2528] sm:$0xff]
        %v2530 = vld [vmem:[%s2528 + $0x10] sm:$0xff]
        %v2531 = vld [vmem:[%s2528 + $0x20] sm:$0xff]
        %v2532 = vld [vmem:[%s2528 + $0x30] sm:$0xff]
        %v2533 = vld [vmem:[%s2528 + $0x40] sm:$0xff]
        %v2534 = vld [vmem:[%s2528 + $0x50] sm:$0xff]
        %v2535 = vld [vmem:[%s2528 + $0x60] sm:$0xff]
        %v2536 = vld [vmem:[%s2528 + $0x70] sm:$0xff]
        %v2537 = vld [vmem:[%s2528 + $0xa0] sm:$0xff]
        %v2538 = vld [vmem:[%s2528 + $0xb0] sm:$0xff]
        %v2539 = vld [vmem:[%s2528 + $0xc0] sm:$0xff]
        %v2540 = vld [vmem:[%s2528 + $0xd0] sm:$0xff]
        %v2541 = vld [vmem:[%s2528 + $0xe0] sm:$0xff]
        %v2542 = vld [vmem:[%s2528 + $0xf0] sm:$0xff]
        %v2543 = vld [vmem:[%s2528 + $0x100] sm:$0xff]
        %v2544 = vld [vmem:[%s2528 + $0x110] sm:$0xff]
        %v2545 = vld [vmem:[%s2528 + $0x140] sm:$0xff]
        %v2546 = vld [vmem:[%s2528 + $0x150] sm:$0xff]
        %v2547 = vld [vmem:[%s2528 + $0x160] sm:$0xff]
        %v2548 = vld [vmem:[%s2528 + $0x170] sm:$0xff]
        %v2549 = vld [vmem:[%s2528 + $0x180] sm:$0xff]
        %v2550 = vld [vmem:[%s2528 + $0x190] sm:$0xff]
        %v2551 = vld [vmem:[%s2528 + $0x1a0] sm:$0xff]
        %v2552 = vld [vmem:[%s2528 + $0x1b0] sm:$0xff]
        %v2553 = vld [vmem:[%s2528 + $0x1e0] sm:$0xff]
        %v2554 = vld [vmem:[%s2528 + $0x1f0] sm:$0xff]
        %v2555 = vld [vmem:[%s2528 + $0x200] sm:$0xff]
        %v2556 = vld [vmem:[%s2528 + $0x210] sm:$0xff]
        %v2557 = vld [vmem:[%s2528 + $0x220] sm:$0xff]
        %v2558 = vld [vmem:[%s2528 + $0x230] sm:$0xff]
        %v2559 = vld [vmem:[%s2528 + $0x240] sm:$0xff]
        %v2560 = vld [vmem:[%s2528 + $0x250] sm:$0xff]
        %v2561 = vlaneseq
        %v2562 = vshrl.u32 %v2561, 7
        %v2563 = vsub.s32 7, %v2562
        %v2564 = vrot.slane %v1022, %v2563
        %v2565 = vmul.f32 %v2529, %v2564
        %v2566 = vmul.f32 %v2530, %v2564
        %v2567 = vmul.f32 %v2531, %v2564
        %v2568 = vmul.f32 %v2532, %v2564
        %v2569 = vmul.f32 %v2533, %v2564
        %v2570 = vmul.f32 %v2534, %v2564
        %v2571 = vmul.f32 %v2535, %v2564
        %v2572 = vmul.f32 %v2536, %v2564
        %v2573 = vmul.f32 %v2537, %v2564
        %v2574 = vmul.f32 %v2538, %v2564
        %v2575 = vmul.f32 %v2539, %v2564
        %v2576 = vmul.f32 %v2540, %v2564
        %v2577 = vmul.f32 %v2541, %v2564
        %v2578 = vmul.f32 %v2542, %v2564
        %v2579 = vmul.f32 %v2543, %v2564
        %v2580 = vmul.f32 %v2544, %v2564
        %v2581 = vmul.f32 %v2545, %v2564
        %v2582 = vmul.f32 %v2546, %v2564
        %v2583 = vmul.f32 %v2547, %v2564
        %v2584 = vmul.f32 %v2548, %v2564
        %v2585 = vmul.f32 %v2549, %v2564
        %v2586 = vmul.f32 %v2550, %v2564
        %v2587 = vmul.f32 %v2551, %v2564
        %v2588 = vmul.f32 %v2552, %v2564
        %v2589 = vmul.f32 %v2553, %v2564
        %v2590 = vmul.f32 %v2554, %v2564
        %v2591 = vmul.f32 %v2555, %v2564
        %v2592 = vmul.f32 %v2556, %v2564
        %v2593 = vmul.f32 %v2557, %v2564
        %v2594 = vmul.f32 %v2558, %v2564
        %v2595 = vmul.f32 %v2559, %v2564
        %v2596 = vmul.f32 %v2560, %v2564
        %v2597 = vadd.f32 %v2496, %v2565
        %v2598 = vadd.f32 %v2497, %v2566
        %v2599 = vadd.f32 %v2498, %v2567
        %v2600 = vadd.f32 %v2499, %v2568
        %v2601 = vadd.f32 %v2500, %v2569
        %v2602 = vadd.f32 %v2501, %v2570
        %v2603 = vadd.f32 %v2502, %v2571
        %v2604 = vadd.f32 %v2503, %v2572
        %v2605 = vadd.f32 %v2504, %v2573
        %v2606 = vadd.f32 %v2505, %v2574
        %v2607 = vadd.f32 %v2506, %v2575
        %v2608 = vadd.f32 %v2507, %v2576
        %v2609 = vadd.f32 %v2508, %v2577
        %v2610 = vadd.f32 %v2509, %v2578
        %v2611 = vadd.f32 %v2510, %v2579
        %v2612 = vadd.f32 %v2511, %v2580
        %v2613 = vadd.f32 %v2512, %v2581
        %v2614 = vadd.f32 %v2513, %v2582
        %v2615 = vadd.f32 %v2514, %v2583
        %v2616 = vadd.f32 %v2515, %v2584
        %v2617 = vadd.f32 %v2516, %v2585
        %v2618 = vadd.f32 %v2517, %v2586
        %v2619 = vadd.f32 %v2518, %v2587
        %v2620 = vadd.f32 %v2519, %v2588
        %v2621 = vadd.f32 %v2520, %v2589
        %v2622 = vadd.f32 %v2521, %v2590
        %v2623 = vadd.f32 %v2522, %v2591
        %v2624 = vadd.f32 %v2523, %v2592
        %v2625 = vadd.f32 %v2524, %v2593
        %v2626 = vadd.f32 %v2525, %v2594
        %v2627 = vadd.f32 %v2526, %v2595
        %v2628 = vadd.f32 %v2527, %v2596
        %v2629 = vld [vmem:[%s2528 + $0x1] sm:$0xff]
        %v2630 = vld [vmem:[%s2528 + $0x11] sm:$0xff]
        %v2631 = vld [vmem:[%s2528 + $0x21] sm:$0xff]
        %v2632 = vld [vmem:[%s2528 + $0x31] sm:$0xff]
        %v2633 = vld [vmem:[%s2528 + $0x41] sm:$0xff]
        %v2634 = vld [vmem:[%s2528 + $0x51] sm:$0xff]
        %v2635 = vld [vmem:[%s2528 + $0x61] sm:$0xff]
        %v2636 = vld [vmem:[%s2528 + $0x71] sm:$0xff]
        %v2637 = vld [vmem:[%s2528 + $0xa1] sm:$0xff]
        %v2638 = vld [vmem:[%s2528 + $0xb1] sm:$0xff]
        %v2639 = vld [vmem:[%s2528 + $0xc1] sm:$0xff]
        %v2640 = vld [vmem:[%s2528 + $0xd1] sm:$0xff]
        %v2641 = vld [vmem:[%s2528 + $0xe1] sm:$0xff]
        %v2642 = vld [vmem:[%s2528 + $0xf1] sm:$0xff]
        %v2643 = vld [vmem:[%s2528 + $0x101] sm:$0xff]
        %v2644 = vld [vmem:[%s2528 + $0x111] sm:$0xff]
        %v2645 = vld [vmem:[%s2528 + $0x141] sm:$0xff]
        %v2646 = vld [vmem:[%s2528 + $0x151] sm:$0xff]
        %v2647 = vld [vmem:[%s2528 + $0x161] sm:$0xff]
        %v2648 = vld [vmem:[%s2528 + $0x171] sm:$0xff]
        %v2649 = vld [vmem:[%s2528 + $0x181] sm:$0xff]
        %v2650 = vld [vmem:[%s2528 + $0x191] sm:$0xff]
        %v2651 = vld [vmem:[%s2528 + $0x1a1] sm:$0xff]
        %v2652 = vld [vmem:[%s2528 + $0x1b1] sm:$0xff]
        %v2653 = vld [vmem:[%s2528 + $0x1e1] sm:$0xff]
        %v2654 = vld [vmem:[%s2528 + $0x1f1] sm:$0xff]
        %v2655 = vld [vmem:[%s2528 + $0x201] sm:$0xff]
        %v2656 = vld [vmem:[%s2528 + $0x211] sm:$0xff]
        %v2657 = vld [vmem:[%s2528 + $0x221] sm:$0xff]
        %v2658 = vld [vmem:[%s2528 + $0x231] sm:$0xff]
        %v2659 = vld [vmem:[%s2528 + $0x241] sm:$0xff]
        %v2660 = vld [vmem:[%s2528 + $0x251] sm:$0xff]
        %v2661 = vlaneseq
        %v2662 = vshrl.u32 %v2661, 7
        %v2663 = vsub.s32 0, %v2662
        %v2664 = vrot.slane %v1023, %v2663
        %v2665 = vmul.f32 %v2629, %v2664
        %v2666 = vmul.f32 %v2630, %v2664
        %v2667 = vmul.f32 %v2631, %v2664
        %v2668 = vmul.f32 %v2632, %v2664
        %v2669 = vmul.f32 %v2633, %v2664
        %v2670 = vmul.f32 %v2634, %v2664
        %v2671 = vmul.f32 %v2635, %v2664
        %v2672 = vmul.f32 %v2636, %v2664
        %v2673 = vmul.f32 %v2637, %v2664
        %v2674 = vmul.f32 %v2638, %v2664
        %v2675 = vmul.f32 %v2639, %v2664
        %v2676 = vmul.f32 %v2640, %v2664
        %v2677 = vmul.f32 %v2641, %v2664
        %v2678 = vmul.f32 %v2642, %v2664
        %v2679 = vmul.f32 %v2643, %v2664
        %v2680 = vmul.f32 %v2644, %v2664
        %v2681 = vmul.f32 %v2645, %v2664
        %v2682 = vmul.f32 %v2646, %v2664
        %v2683 = vmul.f32 %v2647, %v2664
        %v2684 = vmul.f32 %v2648, %v2664
        %v2685 = vmul.f32 %v2649, %v2664
        %v2686 = vmul.f32 %v2650, %v2664
        %v2687 = vmul.f32 %v2651, %v2664
        %v2688 = vmul.f32 %v2652, %v2664
        %v2689 = vmul.f32 %v2653, %v2664
        %v2690 = vmul.f32 %v2654, %v2664
        %v2691 = vmul.f32 %v2655, %v2664
        %v2692 = vmul.f32 %v2656, %v2664
        %v2693 = vmul.f32 %v2657, %v2664
        %v2694 = vmul.f32 %v2658, %v2664
        %v2695 = vmul.f32 %v2659, %v2664
        %v2696 = vmul.f32 %v2660, %v2664
        %v2697 = vadd.f32 %v2597, %v2665
        %v2698 = vadd.f32 %v2598, %v2666
        %v2699 = vadd.f32 %v2599, %v2667
        %v2700 = vadd.f32 %v2600, %v2668
        %v2701 = vadd.f32 %v2601, %v2669
        %v2702 = vadd.f32 %v2602, %v2670
        %v2703 = vadd.f32 %v2603, %v2671
        %v2704 = vadd.f32 %v2604, %v2672
        %v2705 = vadd.f32 %v2605, %v2673
        %v2706 = vadd.f32 %v2606, %v2674
        %v2707 = vadd.f32 %v2607, %v2675
        %v2708 = vadd.f32 %v2608, %v2676
        %v2709 = vadd.f32 %v2609, %v2677
        %v2710 = vadd.f32 %v2610, %v2678
        %v2711 = vadd.f32 %v2611, %v2679
        %v2712 = vadd.f32 %v2612, %v2680
        %v2713 = vadd.f32 %v2613, %v2681
        %v2714 = vadd.f32 %v2614, %v2682
        %v2715 = vadd.f32 %v2615, %v2683
        %v2716 = vadd.f32 %v2616, %v2684
        %v2717 = vadd.f32 %v2617, %v2685
        %v2718 = vadd.f32 %v2618, %v2686
        %v2719 = vadd.f32 %v2619, %v2687
        %v2720 = vadd.f32 %v2620, %v2688
        %v2721 = vadd.f32 %v2621, %v2689
        %v2722 = vadd.f32 %v2622, %v2690
        %v2723 = vadd.f32 %v2623, %v2691
        %v2724 = vadd.f32 %v2624, %v2692
        %v2725 = vadd.f32 %v2625, %v2693
        %v2726 = vadd.f32 %v2626, %v2694
        %v2727 = vadd.f32 %v2627, %v2695
        %v2728 = vadd.f32 %v2628, %v2696
        %v2729 = vld [vmem:[%s2528 + $0x2] sm:$0xff]
        %v2730 = vld [vmem:[%s2528 + $0x12] sm:$0xff]
        %v2731 = vld [vmem:[%s2528 + $0x22] sm:$0xff]
        %v2732 = vld [vmem:[%s2528 + $0x32] sm:$0xff]
        %v2733 = vld [vmem:[%s2528 + $0x42] sm:$0xff]
        %v2734 = vld [vmem:[%s2528 + $0x52] sm:$0xff]
        %v2735 = vld [vmem:[%s2528 + $0x62] sm:$0xff]
        %v2736 = vld [vmem:[%s2528 + $0x72] sm:$0xff]
        %v2737 = vld [vmem:[%s2528 + $0xa2] sm:$0xff]
        %v2738 = vld [vmem:[%s2528 + $0xb2] sm:$0xff]
        %v2739 = vld [vmem:[%s2528 + $0xc2] sm:$0xff]
        %v2740 = vld [vmem:[%s2528 + $0xd2] sm:$0xff]
        %v2741 = vld [vmem:[%s2528 + $0xe2] sm:$0xff]
        %v2742 = vld [vmem:[%s2528 + $0xf2] sm:$0xff]
        %v2743 = vld [vmem:[%s2528 + $0x102] sm:$0xff]
        %v2744 = vld [vmem:[%s2528 + $0x112] sm:$0xff]
        %v2745 = vld [vmem:[%s2528 + $0x142] sm:$0xff]
        %v2746 = vld [vmem:[%s2528 + $0x152] sm:$0xff]
        %v2747 = vld [vmem:[%s2528 + $0x162] sm:$0xff]
        %v2748 = vld [vmem:[%s2528 + $0x172] sm:$0xff]
        %v2749 = vld [vmem:[%s2528 + $0x182] sm:$0xff]
        %v2750 = vld [vmem:[%s2528 + $0x192] sm:$0xff]
        %v2751 = vld [vmem:[%s2528 + $0x1a2] sm:$0xff]
        %v2752 = vld [vmem:[%s2528 + $0x1b2] sm:$0xff]
        %v2753 = vld [vmem:[%s2528 + $0x1e2] sm:$0xff]
        %v2754 = vld [vmem:[%s2528 + $0x1f2] sm:$0xff]
        %v2755 = vld [vmem:[%s2528 + $0x202] sm:$0xff]
        %v2756 = vld [vmem:[%s2528 + $0x212] sm:$0xff]
        %v2757 = vld [vmem:[%s2528 + $0x222] sm:$0xff]
        %v2758 = vld [vmem:[%s2528 + $0x232] sm:$0xff]
        %v2759 = vld [vmem:[%s2528 + $0x242] sm:$0xff]
        %v2760 = vld [vmem:[%s2528 + $0x252] sm:$0xff]
        %v2761 = vlaneseq
        %v2762 = vshrl.u32 %v2761, 7
        %v2763 = vsub.s32 1, %v2762
        %v2764 = vrot.slane %v1023, %v2763
        %v2765 = vmul.f32 %v2729, %v2764
        %v2766 = vmul.f32 %v2730, %v2764
        %v2767 = vmul.f32 %v2731, %v2764
        %v2768 = vmul.f32 %v2732, %v2764
        %v2769 = vmul.f32 %v2733, %v2764
        %v2770 = vmul.f32 %v2734, %v2764
        %v2771 = vmul.f32 %v2735, %v2764
        %v2772 = vmul.f32 %v2736, %v2764
        %v2773 = vmul.f32 %v2737, %v2764
        %v2774 = vmul.f32 %v2738, %v2764
        %v2775 = vmul.f32 %v2739, %v2764
        %v2776 = vmul.f32 %v2740, %v2764
        %v2777 = vmul.f32 %v2741, %v2764
        %v2778 = vmul.f32 %v2742, %v2764
        %v2779 = vmul.f32 %v2743, %v2764
        %v2780 = vmul.f32 %v2744, %v2764
        %v2781 = vmul.f32 %v2745, %v2764
        %v2782 = vmul.f32 %v2746, %v2764
        %v2783 = vmul.f32 %v2747, %v2764
        %v2784 = vmul.f32 %v2748, %v2764
        %v2785 = vmul.f32 %v2749, %v2764
        %v2786 = vmul.f32 %v2750, %v2764
        %v2787 = vmul.f32 %v2751, %v2764
        %v2788 = vmul.f32 %v2752, %v2764
        %v2789 = vmul.f32 %v2753, %v2764
        %v2790 = vmul.f32 %v2754, %v2764
        %v2791 = vmul.f32 %v2755, %v2764
        %v2792 = vmul.f32 %v2756, %v2764
        %v2793 = vmul.f32 %v2757, %v2764
        %v2794 = vmul.f32 %v2758, %v2764
        %v2795 = vmul.f32 %v2759, %v2764
        %v2796 = vmul.f32 %v2760, %v2764
        %v2797 = vadd.f32 %v2697, %v2765
        %v2798 = vadd.f32 %v2698, %v2766
        %v2799 = vadd.f32 %v2699, %v2767
        %v2800 = vadd.f32 %v2700, %v2768
        %v2801 = vadd.f32 %v2701, %v2769
        %v2802 = vadd.f32 %v2702, %v2770
        %v2803 = vadd.f32 %v2703, %v2771
        %v2804 = vadd.f32 %v2704, %v2772
        %v2805 = vadd.f32 %v2705, %v2773
        %v2806 = vadd.f32 %v2706, %v2774
        %v2807 = vadd.f32 %v2707, %v2775
        %v2808 = vadd.f32 %v2708, %v2776
        %v2809 = vadd.f32 %v2709, %v2777
        %v2810 = vadd.f32 %v2710, %v2778
        %v2811 = vadd.f32 %v2711, %v2779
        %v2812 = vadd.f32 %v2712, %v2780
        %v2813 = vadd.f32 %v2713, %v2781
        %v2814 = vadd.f32 %v2714, %v2782
        %v2815 = vadd.f32 %v2715, %v2783
        %v2816 = vadd.f32 %v2716, %v2784
        %v2817 = vadd.f32 %v2717, %v2785
        %v2818 = vadd.f32 %v2718, %v2786
        %v2819 = vadd.f32 %v2719, %v2787
        %v2820 = vadd.f32 %v2720, %v2788
        %v2821 = vadd.f32 %v2721, %v2789
        %v2822 = vadd.f32 %v2722, %v2790
        %v2823 = vadd.f32 %v2723, %v2791
        %v2824 = vadd.f32 %v2724, %v2792
        %v2825 = vadd.f32 %v2725, %v2793
        %v2826 = vadd.f32 %v2726, %v2794
        %v2827 = vadd.f32 %v2727, %v2795
        %v2828 = vadd.f32 %v2728, %v2796
        %s2829 = scalar_lea.vmem [#allocation2], 320
        %v2830 = vld [vmem:[%s2829] sm:$0xff]
        %v2831 = vld [vmem:[%s2829 + $0x10] sm:$0xff]
        %v2832 = vld [vmem:[%s2829 + $0x20] sm:$0xff]
        %v2833 = vld [vmem:[%s2829 + $0x30] sm:$0xff]
        %v2834 = vld [vmem:[%s2829 + $0x40] sm:$0xff]
        %v2835 = vld [vmem:[%s2829 + $0x50] sm:$0xff]
        %v2836 = vld [vmem:[%s2829 + $0x60] sm:$0xff]
        %v2837 = vld [vmem:[%s2829 + $0x70] sm:$0xff]
        %v2838 = vld [vmem:[%s2829 + $0xa0] sm:$0xff]
        %v2839 = vld [vmem:[%s2829 + $0xb0] sm:$0xff]
        %v2840 = vld [vmem:[%s2829 + $0xc0] sm:$0xff]
        %v2841 = vld [vmem:[%s2829 + $0xd0] sm:$0xff]
        %v2842 = vld [vmem:[%s2829 + $0xe0] sm:$0xff]
        %v2843 = vld [vmem:[%s2829 + $0xf0] sm:$0xff]
        %v2844 = vld [vmem:[%s2829 + $0x100] sm:$0xff]
        %v2845 = vld [vmem:[%s2829 + $0x110] sm:$0xff]
        %v2846 = vld [vmem:[%s2829 + $0x140] sm:$0xff]
        %v2847 = vld [vmem:[%s2829 + $0x150] sm:$0xff]
        %v2848 = vld [vmem:[%s2829 + $0x160] sm:$0xff]
        %v2849 = vld [vmem:[%s2829 + $0x170] sm:$0xff]
        %v2850 = vld [vmem:[%s2829 + $0x180] sm:$0xff]
        %v2851 = vld [vmem:[%s2829 + $0x190] sm:$0xff]
        %v2852 = vld [vmem:[%s2829 + $0x1a0] sm:$0xff]
        %v2853 = vld [vmem:[%s2829 + $0x1b0] sm:$0xff]
        %v2854 = vld [vmem:[%s2829 + $0x1e0] sm:$0xff]
        %v2855 = vld [vmem:[%s2829 + $0x1f0] sm:$0xff]
        %v2856 = vld [vmem:[%s2829 + $0x200] sm:$0xff]
        %v2857 = vld [vmem:[%s2829 + $0x210] sm:$0xff]
        %v2858 = vld [vmem:[%s2829 + $0x220] sm:$0xff]
        %v2859 = vld [vmem:[%s2829 + $0x230] sm:$0xff]
        %v2860 = vld [vmem:[%s2829 + $0x240] sm:$0xff]
        %v2861 = vld [vmem:[%s2829 + $0x250] sm:$0xff]
        %v2862 = vlaneseq
        %v2863 = vshrl.u32 %v2862, 7
        %v2864 = vsub.s32 2, %v2863
        %v2865 = vrot.slane %v1023, %v2864
        %v2866 = vmul.f32 %v2830, %v2865
        %v2867 = vmul.f32 %v2831, %v2865
        %v2868 = vmul.f32 %v2832, %v2865
        %v2869 = vmul.f32 %v2833, %v2865
        %v2870 = vmul.f32 %v2834, %v2865
        %v2871 = vmul.f32 %v2835, %v2865
        %v2872 = vmul.f32 %v2836, %v2865
        %v2873 = vmul.f32 %v2837, %v2865
        %v2874 = vmul.f32 %v2838, %v2865
        %v2875 = vmul.f32 %v2839, %v2865
        %v2876 = vmul.f32 %v2840, %v2865
        %v2877 = vmul.f32 %v2841, %v2865
        %v2878 = vmul.f32 %v2842, %v2865
        %v2879 = vmul.f32 %v2843, %v2865
        %v2880 = vmul.f32 %v2844, %v2865
        %v2881 = vmul.f32 %v2845, %v2865
        %v2882 = vmul.f32 %v2846, %v2865
        %v2883 = vmul.f32 %v2847, %v2865
        %v2884 = vmul.f32 %v2848, %v2865
        %v2885 = vmul.f32 %v2849, %v2865
        %v2886 = vmul.f32 %v2850, %v2865
        %v2887 = vmul.f32 %v2851, %v2865
        %v2888 = vmul.f32 %v2852, %v2865
        %v2889 = vmul.f32 %v2853, %v2865
        %v2890 = vmul.f32 %v2854, %v2865
        %v2891 = vmul.f32 %v2855, %v2865
        %v2892 = vmul.f32 %v2856, %v2865
        %v2893 = vmul.f32 %v2857, %v2865
        %v2894 = vmul.f32 %v2858, %v2865
        %v2895 = vmul.f32 %v2859, %v2865
        %v2896 = vmul.f32 %v2860, %v2865
        %v2897 = vmul.f32 %v2861, %v2865
        %v2898 = vadd.f32 %v2797, %v2866
        %v2899 = vadd.f32 %v2798, %v2867
        %v2900 = vadd.f32 %v2799, %v2868
        %v2901 = vadd.f32 %v2800, %v2869
        %v2902 = vadd.f32 %v2801, %v2870
        %v2903 = vadd.f32 %v2802, %v2871
        %v2904 = vadd.f32 %v2803, %v2872
        %v2905 = vadd.f32 %v2804, %v2873
        %v2906 = vadd.f32 %v2805, %v2874
        %v2907 = vadd.f32 %v2806, %v2875
        %v2908 = vadd.f32 %v2807, %v2876
        %v2909 = vadd.f32 %v2808, %v2877
        %v2910 = vadd.f32 %v2809, %v2878
        %v2911 = vadd.f32 %v2810, %v2879
        %v2912 = vadd.f32 %v2811, %v2880
        %v2913 = vadd.f32 %v2812, %v2881
        %v2914 = vadd.f32 %v2813, %v2882
        %v2915 = vadd.f32 %v2814, %v2883
        %v2916 = vadd.f32 %v2815, %v2884
        %v2917 = vadd.f32 %v2816, %v2885
        %v2918 = vadd.f32 %v2817, %v2886
        %v2919 = vadd.f32 %v2818, %v2887
        %v2920 = vadd.f32 %v2819, %v2888
        %v2921 = vadd.f32 %v2820, %v2889
        %v2922 = vadd.f32 %v2821, %v2890
        %v2923 = vadd.f32 %v2822, %v2891
        %v2924 = vadd.f32 %v2823, %v2892
        %v2925 = vadd.f32 %v2824, %v2893
        %v2926 = vadd.f32 %v2825, %v2894
        %v2927 = vadd.f32 %v2826, %v2895
        %v2928 = vadd.f32 %v2827, %v2896
        %v2929 = vadd.f32 %v2828, %v2897
        %v2930 = vld [vmem:[%s2829 + $0x1] sm:$0xff]
        %v2931 = vld [vmem:[%s2829 + $0x11] sm:$0xff]
        %v2932 = vld [vmem:[%s2829 + $0x21] sm:$0xff]
        %v2933 = vld [vmem:[%s2829 + $0x31] sm:$0xff]
        %v2934 = vld [vmem:[%s2829 + $0x41] sm:$0xff]
        %v2935 = vld [vmem:[%s2829 + $0x51] sm:$0xff]
        %v2936 = vld [vmem:[%s2829 + $0x61] sm:$0xff]
        %v2937 = vld [vmem:[%s2829 + $0x71] sm:$0xff]
        %v2938 = vld [vmem:[%s2829 + $0xa1] sm:$0xff]
        %v2939 = vld [vmem:[%s2829 + $0xb1] sm:$0xff]
        %v2940 = vld [vmem:[%s2829 + $0xc1] sm:$0xff]
        %v2941 = vld [vmem:[%s2829 + $0xd1] sm:$0xff]
        %v2942 = vld [vmem:[%s2829 + $0xe1] sm:$0xff]
        %v2943 = vld [vmem:[%s2829 + $0xf1] sm:$0xff]
        %v2944 = vld [vmem:[%s2829 + $0x101] sm:$0xff]
        %v2945 = vld [vmem:[%s2829 + $0x111] sm:$0xff]
        %v2946 = vld [vmem:[%s2829 + $0x141] sm:$0xff]
        %v2947 = vld [vmem:[%s2829 + $0x151] sm:$0xff]
        %v2948 = vld [vmem:[%s2829 + $0x161] sm:$0xff]
        %v2949 = vld [vmem:[%s2829 + $0x171] sm:$0xff]
        %v2950 = vld [vmem:[%s2829 + $0x181] sm:$0xff]
        %v2951 = vld [vmem:[%s2829 + $0x191] sm:$0xff]
        %v2952 = vld [vmem:[%s2829 + $0x1a1] sm:$0xff]
        %v2953 = vld [vmem:[%s2829 + $0x1b1] sm:$0xff]
        %v2954 = vld [vmem:[%s2829 + $0x1e1] sm:$0xff]
        %v2955 = vld [vmem:[%s2829 + $0x1f1] sm:$0xff]
        %v2956 = vld [vmem:[%s2829 + $0x201] sm:$0xff]
        %v2957 = vld [vmem:[%s2829 + $0x211] sm:$0xff]
        %v2958 = vld [vmem:[%s2829 + $0x221] sm:$0xff]
        %v2959 = vld [vmem:[%s2829 + $0x231] sm:$0xff]
        %v2960 = vld [vmem:[%s2829 + $0x241] sm:$0xff]
        %v2961 = vld [vmem:[%s2829 + $0x251] sm:$0xff]
        %v2962 = vlaneseq
        %v2963 = vshrl.u32 %v2962, 7
        %v2964 = vsub.s32 3, %v2963
        %v2965 = vrot.slane %v1023, %v2964
        %v2966 = vmul.f32 %v2930, %v2965
        %v2967 = vmul.f32 %v2931, %v2965
        %v2968 = vmul.f32 %v2932, %v2965
        %v2969 = vmul.f32 %v2933, %v2965
        %v2970 = vmul.f32 %v2934, %v2965
        %v2971 = vmul.f32 %v2935, %v2965
        %v2972 = vmul.f32 %v2936, %v2965
        %v2973 = vmul.f32 %v2937, %v2965
        %v2974 = vmul.f32 %v2938, %v2965
        %v2975 = vmul.f32 %v2939, %v2965
        %v2976 = vmul.f32 %v2940, %v2965
        %v2977 = vmul.f32 %v2941, %v2965
        %v2978 = vmul.f32 %v2942, %v2965
        %v2979 = vmul.f32 %v2943, %v2965
        %v2980 = vmul.f32 %v2944, %v2965
        %v2981 = vmul.f32 %v2945, %v2965
        %v2982 = vmul.f32 %v2946, %v2965
        %v2983 = vmul.f32 %v2947, %v2965
        %v2984 = vmul.f32 %v2948, %v2965
        %v2985 = vmul.f32 %v2949, %v2965
        %v2986 = vmul.f32 %v2950, %v2965
        %v2987 = vmul.f32 %v2951, %v2965
        %v2988 = vmul.f32 %v2952, %v2965
        %v2989 = vmul.f32 %v2953, %v2965
        %v2990 = vmul.f32 %v2954, %v2965
        %v2991 = vmul.f32 %v2955, %v2965
        %v2992 = vmul.f32 %v2956, %v2965
        %v2993 = vmul.f32 %v2957, %v2965
        %v2994 = vmul.f32 %v2958, %v2965
        %v2995 = vmul.f32 %v2959, %v2965
        %v2996 = vmul.f32 %v2960, %v2965
        %v2997 = vmul.f32 %v2961, %v2965
        %v2998 = vadd.f32 %v2898, %v2966
        %v2999 = vadd.f32 %v2899, %v2967
        %v3000 = vadd.f32 %v2900, %v2968
        %v3001 = vadd.f32 %v2901, %v2969
        %v3002 = vadd.f32 %v2902, %v2970
        %v3003 = vadd.f32 %v2903, %v2971
        %v3004 = vadd.f32 %v2904, %v2972
        %v3005 = vadd.f32 %v2905, %v2973
        %v3006 = vadd.f32 %v2906, %v2974
        %v3007 = vadd.f32 %v2907, %v2975
        %v3008 = vadd.f32 %v2908, %v2976
        %v3009 = vadd.f32 %v2909, %v2977
        %v3010 = vadd.f32 %v2910, %v2978
        %v3011 = vadd.f32 %v2911, %v2979
        %v3012 = vadd.f32 %v2912, %v2980
        %v3013 = vadd.f32 %v2913, %v2981
        %v3014 = vadd.f32 %v2914, %v2982
        %v3015 = vadd.f32 %v2915, %v2983
        %v3016 = vadd.f32 %v2916, %v2984
        %v3017 = vadd.f32 %v2917, %v2985
        %v3018 = vadd.f32 %v2918, %v2986
        %v3019 = vadd.f32 %v2919, %v2987
        %v3020 = vadd.f32 %v2920, %v2988
        %v3021 = vadd.f32 %v2921, %v2989
        %v3022 = vadd.f32 %v2922, %v2990
        %v3023 = vadd.f32 %v2923, %v2991
        %v3024 = vadd.f32 %v2924, %v2992
        %v3025 = vadd.f32 %v2925, %v2993
        %v3026 = vadd.f32 %v2926, %v2994
        %v3027 = vadd.f32 %v2927, %v2995
        %v3028 = vadd.f32 %v2928, %v2996
        %v3029 = vadd.f32 %v2929, %v2997
        %v3030 = vld [vmem:[%s2829 + $0x2] sm:$0xff]
        %v3031 = vld [vmem:[%s2829 + $0x12] sm:$0xff]
        %v3032 = vld [vmem:[%s2829 + $0x22] sm:$0xff]
        %v3033 = vld [vmem:[%s2829 + $0x32] sm:$0xff]
        %v3034 = vld [vmem:[%s2829 + $0x42] sm:$0xff]
        %v3035 = vld [vmem:[%s2829 + $0x52] sm:$0xff]
        %v3036 = vld [vmem:[%s2829 + $0x62] sm:$0xff]
        %v3037 = vld [vmem:[%s2829 + $0x72] sm:$0xff]
        %v3038 = vld [vmem:[%s2829 + $0xa2] sm:$0xff]
        %v3039 = vld [vmem:[%s2829 + $0xb2] sm:$0xff]
        %v3040 = vld [vmem:[%s2829 + $0xc2] sm:$0xff]
        %v3041 = vld [vmem:[%s2829 + $0xd2] sm:$0xff]
        %v3042 = vld [vmem:[%s2829 + $0xe2] sm:$0xff]
        %v3043 = vld [vmem:[%s2829 + $0xf2] sm:$0xff]
        %v3044 = vld [vmem:[%s2829 + $0x102] sm:$0xff]
        %v3045 = vld [vmem:[%s2829 + $0x112] sm:$0xff]
        %v3046 = vld [vmem:[%s2829 + $0x142] sm:$0xff]
        %v3047 = vld [vmem:[%s2829 + $0x152] sm:$0xff]
        %v3048 = vld [vmem:[%s2829 + $0x162] sm:$0xff]
        %v3049 = vld [vmem:[%s2829 + $0x172] sm:$0xff]
        %v3050 = vld [vmem:[%s2829 + $0x182] sm:$0xff]
        %v3051 = vld [vmem:[%s2829 + $0x192] sm:$0xff]
        %v3052 = vld [vmem:[%s2829 + $0x1a2] sm:$0xff]
        %v3053 = vld [vmem:[%s2829 + $0x1b2] sm:$0xff]
        %v3054 = vld [vmem:[%s2829 + $0x1e2] sm:$0xff]
        %v3055 = vld [vmem:[%s2829 + $0x1f2] sm:$0xff]
        %v3056 = vld [vmem:[%s2829 + $0x202] sm:$0xff]
        %v3057 = vld [vmem:[%s2829 + $0x212] sm:$0xff]
        %v3058 = vld [vmem:[%s2829 + $0x222] sm:$0xff]
        %v3059 = vld [vmem:[%s2829 + $0x232] sm:$0xff]
        %v3060 = vld [vmem:[%s2829 + $0x242] sm:$0xff]
        %v3061 = vld [vmem:[%s2829 + $0x252] sm:$0xff]
        %v3062 = vlaneseq
        %v3063 = vshrl.u32 %v3062, 7
        %v3064 = vsub.s32 4, %v3063
        %v3065 = vrot.slane %v1023, %v3064
        %v3066 = vmul.f32 %v3030, %v3065
        %v3067 = vmul.f32 %v3031, %v3065
        %v3068 = vmul.f32 %v3032, %v3065
        %v3069 = vmul.f32 %v3033, %v3065
        %v3070 = vmul.f32 %v3034, %v3065
        %v3071 = vmul.f32 %v3035, %v3065
        %v3072 = vmul.f32 %v3036, %v3065
        %v3073 = vmul.f32 %v3037, %v3065
        %v3074 = vmul.f32 %v3038, %v3065
        %v3075 = vmul.f32 %v3039, %v3065
        %v3076 = vmul.f32 %v3040, %v3065
        %v3077 = vmul.f32 %v3041, %v3065
        %v3078 = vmul.f32 %v3042, %v3065
        %v3079 = vmul.f32 %v3043, %v3065
        %v3080 = vmul.f32 %v3044, %v3065
        %v3081 = vmul.f32 %v3045, %v3065
        %v3082 = vmul.f32 %v3046, %v3065
        %v3083 = vmul.f32 %v3047, %v3065
        %v3084 = vmul.f32 %v3048, %v3065
        %v3085 = vmul.f32 %v3049, %v3065
        %v3086 = vmul.f32 %v3050, %v3065
        %v3087 = vmul.f32 %v3051, %v3065
        %v3088 = vmul.f32 %v3052, %v3065
        %v3089 = vmul.f32 %v3053, %v3065
        %v3090 = vmul.f32 %v3054, %v3065
        %v3091 = vmul.f32 %v3055, %v3065
        %v3092 = vmul.f32 %v3056, %v3065
        %v3093 = vmul.f32 %v3057, %v3065
        %v3094 = vmul.f32 %v3058, %v3065
        %v3095 = vmul.f32 %v3059, %v3065
        %v3096 = vmul.f32 %v3060, %v3065
        %v3097 = vmul.f32 %v3061, %v3065
        %v3098 = vadd.f32 %v2998, %v3066
        %v3099 = vadd.f32 %v2999, %v3067
        %v3100 = vadd.f32 %v3000, %v3068
        %v3101 = vadd.f32 %v3001, %v3069
        %v3102 = vadd.f32 %v3002, %v3070
        %v3103 = vadd.f32 %v3003, %v3071
        %v3104 = vadd.f32 %v3004, %v3072
        %v3105 = vadd.f32 %v3005, %v3073
        %v3106 = vadd.f32 %v3006, %v3074
        %v3107 = vadd.f32 %v3007, %v3075
        %v3108 = vadd.f32 %v3008, %v3076
        %v3109 = vadd.f32 %v3009, %v3077
        %v3110 = vadd.f32 %v3010, %v3078
        %v3111 = vadd.f32 %v3011, %v3079
        %v3112 = vadd.f32 %v3012, %v3080
        %v3113 = vadd.f32 %v3013, %v3081
        %v3114 = vadd.f32 %v3014, %v3082
        %v3115 = vadd.f32 %v3015, %v3083
        %v3116 = vadd.f32 %v3016, %v3084
        %v3117 = vadd.f32 %v3017, %v3085
        %v3118 = vadd.f32 %v3018, %v3086
        %v3119 = vadd.f32 %v3019, %v3087
        %v3120 = vadd.f32 %v3020, %v3088
        %v3121 = vadd.f32 %v3021, %v3089
        %v3122 = vadd.f32 %v3022, %v3090
        %v3123 = vadd.f32 %v3023, %v3091
        %v3124 = vadd.f32 %v3024, %v3092
        %v3125 = vadd.f32 %v3025, %v3093
        %v3126 = vadd.f32 %v3026, %v3094
        %v3127 = vadd.f32 %v3027, %v3095
        %v3128 = vadd.f32 %v3028, %v3096
        %v3129 = vadd.f32 %v3029, %v3097
        %s3130 = scalar_lea.vmem [#allocation2], 336
        %v3131 = vld [vmem:[%s3130] sm:$0xff]
        %v3132 = vld [vmem:[%s3130 + $0x10] sm:$0xff]
        %v3133 = vld [vmem:[%s3130 + $0x20] sm:$0xff]
        %v3134 = vld [vmem:[%s3130 + $0x30] sm:$0xff]
        %v3135 = vld [vmem:[%s3130 + $0x40] sm:$0xff]
        %v3136 = vld [vmem:[%s3130 + $0x50] sm:$0xff]
        %v3137 = vld [vmem:[%s3130 + $0x60] sm:$0xff]
        %v3138 = vld [vmem:[%s3130 + $0x70] sm:$0xff]
        %v3139 = vld [vmem:[%s3130 + $0xa0] sm:$0xff]
        %v3140 = vld [vmem:[%s3130 + $0xb0] sm:$0xff]
        %v3141 = vld [vmem:[%s3130 + $0xc0] sm:$0xff]
        %v3142 = vld [vmem:[%s3130 + $0xd0] sm:$0xff]
        %v3143 = vld [vmem:[%s3130 + $0xe0] sm:$0xff]
        %v3144 = vld [vmem:[%s3130 + $0xf0] sm:$0xff]
        %v3145 = vld [vmem:[%s3130 + $0x100] sm:$0xff]
        %v3146 = vld [vmem:[%s3130 + $0x110] sm:$0xff]
        %v3147 = vld [vmem:[%s3130 + $0x140] sm:$0xff]
        %v3148 = vld [vmem:[%s3130 + $0x150] sm:$0xff]
        %v3149 = vld [vmem:[%s3130 + $0x160] sm:$0xff]
        %v3150 = vld [vmem:[%s3130 + $0x170] sm:$0xff]
        %v3151 = vld [vmem:[%s3130 + $0x180] sm:$0xff]
        %v3152 = vld [vmem:[%s3130 + $0x190] sm:$0xff]
        %v3153 = vld [vmem:[%s3130 + $0x1a0] sm:$0xff]
        %v3154 = vld [vmem:[%s3130 + $0x1b0] sm:$0xff]
        %v3155 = vld [vmem:[%s3130 + $0x1e0] sm:$0xff]
        %v3156 = vld [vmem:[%s3130 + $0x1f0] sm:$0xff]
        %v3157 = vld [vmem:[%s3130 + $0x200] sm:$0xff]
        %v3158 = vld [vmem:[%s3130 + $0x210] sm:$0xff]
        %v3159 = vld [vmem:[%s3130 + $0x220] sm:$0xff]
        %v3160 = vld [vmem:[%s3130 + $0x230] sm:$0xff]
        %v3161 = vld [vmem:[%s3130 + $0x240] sm:$0xff]
        %v3162 = vld [vmem:[%s3130 + $0x250] sm:$0xff]
        %v3163 = vlaneseq
        %v3164 = vshrl.u32 %v3163, 7
        %v3165 = vsub.s32 5, %v3164
        %v3166 = vrot.slane %v1023, %v3165
        %v3167 = vmul.f32 %v3131, %v3166
        %v3168 = vmul.f32 %v3132, %v3166
        %v3169 = vmul.f32 %v3133, %v3166
        %v3170 = vmul.f32 %v3134, %v3166
        %v3171 = vmul.f32 %v3135, %v3166
        %v3172 = vmul.f32 %v3136, %v3166
        %v3173 = vmul.f32 %v3137, %v3166
        %v3174 = vmul.f32 %v3138, %v3166
        %v3175 = vmul.f32 %v3139, %v3166
        %v3176 = vmul.f32 %v3140, %v3166
        %v3177 = vmul.f32 %v3141, %v3166
        %v3178 = vmul.f32 %v3142, %v3166
        %v3179 = vmul.f32 %v3143, %v3166
        %v3180 = vmul.f32 %v3144, %v3166
        %v3181 = vmul.f32 %v3145, %v3166
        %v3182 = vmul.f32 %v3146, %v3166
        %v3183 = vmul.f32 %v3147, %v3166
        %v3184 = vmul.f32 %v3148, %v3166
        %v3185 = vmul.f32 %v3149, %v3166
        %v3186 = vmul.f32 %v3150, %v3166
        %v3187 = vmul.f32 %v3151, %v3166
        %v3188 = vmul.f32 %v3152, %v3166
        %v3189 = vmul.f32 %v3153, %v3166
        %v3190 = vmul.f32 %v3154, %v3166
        %v3191 = vmul.f32 %v3155, %v3166
        %v3192 = vmul.f32 %v3156, %v3166
        %v3193 = vmul.f32 %v3157, %v3166
        %v3194 = vmul.f32 %v3158, %v3166
        %v3195 = vmul.f32 %v3159, %v3166
        %v3196 = vmul.f32 %v3160, %v3166
        %v3197 = vmul.f32 %v3161, %v3166
        %v3198 = vmul.f32 %v3162, %v3166
        %v3199 = vadd.f32 %v3098, %v3167
        %v3200 = vadd.f32 %v3099, %v3168
        %v3201 = vadd.f32 %v3100, %v3169
        %v3202 = vadd.f32 %v3101, %v3170
        %v3203 = vadd.f32 %v3102, %v3171
        %v3204 = vadd.f32 %v3103, %v3172
        %v3205 = vadd.f32 %v3104, %v3173
        %v3206 = vadd.f32 %v3105, %v3174
        %v3207 = vadd.f32 %v3106, %v3175
        %v3208 = vadd.f32 %v3107, %v3176
        %v3209 = vadd.f32 %v3108, %v3177
        %v3210 = vadd.f32 %v3109, %v3178
        %v3211 = vadd.f32 %v3110, %v3179
        %v3212 = vadd.f32 %v3111, %v3180
        %v3213 = vadd.f32 %v3112, %v3181
        %v3214 = vadd.f32 %v3113, %v3182
        %v3215 = vadd.f32 %v3114, %v3183
        %v3216 = vadd.f32 %v3115, %v3184
        %v3217 = vadd.f32 %v3116, %v3185
        %v3218 = vadd.f32 %v3117, %v3186
        %v3219 = vadd.f32 %v3118, %v3187
        %v3220 = vadd.f32 %v3119, %v3188
        %v3221 = vadd.f32 %v3120, %v3189
        %v3222 = vadd.f32 %v3121, %v3190
        %v3223 = vadd.f32 %v3122, %v3191
        %v3224 = vadd.f32 %v3123, %v3192
        %v3225 = vadd.f32 %v3124, %v3193
        %v3226 = vadd.f32 %v3125, %v3194
        %v3227 = vadd.f32 %v3126, %v3195
        %v3228 = vadd.f32 %v3127, %v3196
        %v3229 = vadd.f32 %v3128, %v3197
        %v3230 = vadd.f32 %v3129, %v3198
        %v3231 = vld [vmem:[%s3130 + $0x1] sm:$0xff]
        %v3232 = vld [vmem:[%s3130 + $0x11] sm:$0xff]
        %v3233 = vld [vmem:[%s3130 + $0x21] sm:$0xff]
        %v3234 = vld [vmem:[%s3130 + $0x31] sm:$0xff]
        %v3235 = vld [vmem:[%s3130 + $0x41] sm:$0xff]
        %v3236 = vld [vmem:[%s3130 + $0x51] sm:$0xff]
        %v3237 = vld [vmem:[%s3130 + $0x61] sm:$0xff]
        %v3238 = vld [vmem:[%s3130 + $0x71] sm:$0xff]
        %v3239 = vld [vmem:[%s3130 + $0xa1] sm:$0xff]
        %v3240 = vld [vmem:[%s3130 + $0xb1] sm:$0xff]
        %v3241 = vld [vmem:[%s3130 + $0xc1] sm:$0xff]
        %v3242 = vld [vmem:[%s3130 + $0xd1] sm:$0xff]
        %v3243 = vld [vmem:[%s3130 + $0xe1] sm:$0xff]
        %v3244 = vld [vmem:[%s3130 + $0xf1] sm:$0xff]
        %v3245 = vld [vmem:[%s3130 + $0x101] sm:$0xff]
        %v3246 = vld [vmem:[%s3130 + $0x111] sm:$0xff]
        %v3247 = vld [vmem:[%s3130 + $0x141] sm:$0xff]
        %v3248 = vld [vmem:[%s3130 + $0x151] sm:$0xff]
        %v3249 = vld [vmem:[%s3130 + $0x161] sm:$0xff]
        %v3250 = vld [vmem:[%s3130 + $0x171] sm:$0xff]
        %v3251 = vld [vmem:[%s3130 + $0x181] sm:$0xff]
        %v3252 = vld [vmem:[%s3130 + $0x191] sm:$0xff]
        %v3253 = vld [vmem:[%s3130 + $0x1a1] sm:$0xff]
        %v3254 = vld [vmem:[%s3130 + $0x1b1] sm:$0xff]
        %v3255 = vld [vmem:[%s3130 + $0x1e1] sm:$0xff]
        %v3256 = vld [vmem:[%s3130 + $0x1f1] sm:$0xff]
        %v3257 = vld [vmem:[%s3130 + $0x201] sm:$0xff]
        %v3258 = vld [vmem:[%s3130 + $0x211] sm:$0xff]
        %v3259 = vld [vmem:[%s3130 + $0x221] sm:$0xff]
        %v3260 = vld [vmem:[%s3130 + $0x231] sm:$0xff]
        %v3261 = vld [vmem:[%s3130 + $0x241] sm:$0xff]
        %v3262 = vld [vmem:[%s3130 + $0x251] sm:$0xff]
        %v3263 = vlaneseq
        %v3264 = vshrl.u32 %v3263, 7
        %v3265 = vsub.s32 6, %v3264
        %v3266 = vrot.slane %v1023, %v3265
        %v3267 = vmul.f32 %v3231, %v3266
        %v3268 = vmul.f32 %v3232, %v3266
        %v3269 = vmul.f32 %v3233, %v3266
        %v3270 = vmul.f32 %v3234, %v3266
        %v3271 = vmul.f32 %v3235, %v3266
        %v3272 = vmul.f32 %v3236, %v3266
        %v3273 = vmul.f32 %v3237, %v3266
        %v3274 = vmul.f32 %v3238, %v3266
        %v3275 = vmul.f32 %v3239, %v3266
        %v3276 = vmul.f32 %v3240, %v3266
        %v3277 = vmul.f32 %v3241, %v3266
        %v3278 = vmul.f32 %v3242, %v3266
        %v3279 = vmul.f32 %v3243, %v3266
        %v3280 = vmul.f32 %v3244, %v3266
        %v3281 = vmul.f32 %v3245, %v3266
        %v3282 = vmul.f32 %v3246, %v3266
        %v3283 = vmul.f32 %v3247, %v3266
        %v3284 = vmul.f32 %v3248, %v3266
        %v3285 = vmul.f32 %v3249, %v3266
        %v3286 = vmul.f32 %v3250, %v3266
        %v3287 = vmul.f32 %v3251, %v3266
        %v3288 = vmul.f32 %v3252, %v3266
        %v3289 = vmul.f32 %v3253, %v3266
        %v3290 = vmul.f32 %v3254, %v3266
        %v3291 = vmul.f32 %v3255, %v3266
        %v3292 = vmul.f32 %v3256, %v3266
        %v3293 = vmul.f32 %v3257, %v3266
        %v3294 = vmul.f32 %v3258, %v3266
        %v3295 = vmul.f32 %v3259, %v3266
        %v3296 = vmul.f32 %v3260, %v3266
        %v3297 = vmul.f32 %v3261, %v3266
        %v3298 = vmul.f32 %v3262, %v3266
        %v3299 = vadd.f32 %v3199, %v3267
        %v3300 = vadd.f32 %v3200, %v3268
        %v3301 = vadd.f32 %v3201, %v3269
        %v3302 = vadd.f32 %v3202, %v3270
        %v3303 = vadd.f32 %v3203, %v3271
        %v3304 = vadd.f32 %v3204, %v3272
        %v3305 = vadd.f32 %v3205, %v3273
        %v3306 = vadd.f32 %v3206, %v3274
        %v3307 = vadd.f32 %v3207, %v3275
        %v3308 = vadd.f32 %v3208, %v3276
        %v3309 = vadd.f32 %v3209, %v3277
        %v3310 = vadd.f32 %v3210, %v3278
        %v3311 = vadd.f32 %v3211, %v3279
        %v3312 = vadd.f32 %v3212, %v3280
        %v3313 = vadd.f32 %v3213, %v3281
        %v3314 = vadd.f32 %v3214, %v3282
        %v3315 = vadd.f32 %v3215, %v3283
        %v3316 = vadd.f32 %v3216, %v3284
        %v3317 = vadd.f32 %v3217, %v3285
        %v3318 = vadd.f32 %v3218, %v3286
        %v3319 = vadd.f32 %v3219, %v3287
        %v3320 = vadd.f32 %v3220, %v3288
        %v3321 = vadd.f32 %v3221, %v3289
        %v3322 = vadd.f32 %v3222, %v3290
        %v3323 = vadd.f32 %v3223, %v3291
        %v3324 = vadd.f32 %v3224, %v3292
        %v3325 = vadd.f32 %v3225, %v3293
        %v3326 = vadd.f32 %v3226, %v3294
        %v3327 = vadd.f32 %v3227, %v3295
        %v3328 = vadd.f32 %v3228, %v3296
        %v3329 = vadd.f32 %v3229, %v3297
        %v3330 = vadd.f32 %v3230, %v3298
        %v3331 = vld [vmem:[%s3130 + $0x2] sm:$0xff]
        %v3332 = vld [vmem:[%s3130 + $0x12] sm:$0xff]
        %v3333 = vld [vmem:[%s3130 + $0x22] sm:$0xff]
        %v3334 = vld [vmem:[%s3130 + $0x32] sm:$0xff]
        %v3335 = vld [vmem:[%s3130 + $0x42] sm:$0xff]
        %v3336 = vld [vmem:[%s3130 + $0x52] sm:$0xff]
        %v3337 = vld [vmem:[%s3130 + $0x62] sm:$0xff]
        %v3338 = vld [vmem:[%s3130 + $0x72] sm:$0xff]
        %v3339 = vld [vmem:[%s3130 + $0xa2] sm:$0xff]
        %v3340 = vld [vmem:[%s3130 + $0xb2] sm:$0xff]
        %v3341 = vld [vmem:[%s3130 + $0xc2] sm:$0xff]
        %v3342 = vld [vmem:[%s3130 + $0xd2] sm:$0xff]
        %v3343 = vld [vmem:[%s3130 + $0xe2] sm:$0xff]
        %v3344 = vld [vmem:[%s3130 + $0xf2] sm:$0xff]
        %v3345 = vld [vmem:[%s3130 + $0x102] sm:$0xff]
        %v3346 = vld [vmem:[%s3130 + $0x112] sm:$0xff]
        %v3347 = vld [vmem:[%s3130 + $0x142] sm:$0xff]
        %v3348 = vld [vmem:[%s3130 + $0x152] sm:$0xff]
        %v3349 = vld [vmem:[%s3130 + $0x162] sm:$0xff]
        %v3350 = vld [vmem:[%s3130 + $0x172] sm:$0xff]
        %v3351 = vld [vmem:[%s3130 + $0x182] sm:$0xff]
        %v3352 = vld [vmem:[%s3130 + $0x192] sm:$0xff]
        %v3353 = vld [vmem:[%s3130 + $0x1a2] sm:$0xff]
        %v3354 = vld [vmem:[%s3130 + $0x1b2] sm:$0xff]
        %v3355 = vld [vmem:[%s3130 + $0x1e2] sm:$0xff]
        %v3356 = vld [vmem:[%s3130 + $0x1f2] sm:$0xff]
        %v3357 = vld [vmem:[%s3130 + $0x202] sm:$0xff]
        %v3358 = vld [vmem:[%s3130 + $0x212] sm:$0xff]
        %v3359 = vld [vmem:[%s3130 + $0x222] sm:$0xff]
        %v3360 = vld [vmem:[%s3130 + $0x232] sm:$0xff]
        %v3361 = vld [vmem:[%s3130 + $0x242] sm:$0xff]
        %v3362 = vld [vmem:[%s3130 + $0x252] sm:$0xff]
        %v3363 = vlaneseq
        %v3364 = vshrl.u32 %v3363, 7
        %v3365 = vsub.s32 7, %v3364
        %v3366 = vrot.slane %v1023, %v3365
        %v3367 = vmul.f32 %v3331, %v3366
        %v3368 = vmul.f32 %v3332, %v3366
        %v3369 = vmul.f32 %v3333, %v3366
        %v3370 = vmul.f32 %v3334, %v3366
        %v3371 = vmul.f32 %v3335, %v3366
        %v3372 = vmul.f32 %v3336, %v3366
        %v3373 = vmul.f32 %v3337, %v3366
        %v3374 = vmul.f32 %v3338, %v3366
        %v3375 = vmul.f32 %v3339, %v3366
        %v3376 = vmul.f32 %v3340, %v3366
        %v3377 = vmul.f32 %v3341, %v3366
        %v3378 = vmul.f32 %v3342, %v3366
        %v3379 = vmul.f32 %v3343, %v3366
        %v3380 = vmul.f32 %v3344, %v3366
        %v3381 = vmul.f32 %v3345, %v3366
        %v3382 = vmul.f32 %v3346, %v3366
        %v3383 = vmul.f32 %v3347, %v3366
        %v3384 = vmul.f32 %v3348, %v3366
        %v3385 = vmul.f32 %v3349, %v3366
        %v3386 = vmul.f32 %v3350, %v3366
        %v3387 = vmul.f32 %v3351, %v3366
        %v3388 = vmul.f32 %v3352, %v3366
        %v3389 = vmul.f32 %v3353, %v3366
        %v3390 = vmul.f32 %v3354, %v3366
        %v3391 = vmul.f32 %v3355, %v3366
        %v3392 = vmul.f32 %v3356, %v3366
        %v3393 = vmul.f32 %v3357, %v3366
        %v3394 = vmul.f32 %v3358, %v3366
        %v3395 = vmul.f32 %v3359, %v3366
        %v3396 = vmul.f32 %v3360, %v3366
        %v3397 = vmul.f32 %v3361, %v3366
        %v3398 = vmul.f32 %v3362, %v3366
        %v3399 = vadd.f32 %v3299, %v3367
        %v3400 = vadd.f32 %v3300, %v3368
        %v3401 = vadd.f32 %v3301, %v3369
        %v3402 = vadd.f32 %v3302, %v3370
        %v3403 = vadd.f32 %v3303, %v3371
        %v3404 = vadd.f32 %v3304, %v3372
        %v3405 = vadd.f32 %v3305, %v3373
        %v3406 = vadd.f32 %v3306, %v3374
        %v3407 = vadd.f32 %v3307, %v3375
        %v3408 = vadd.f32 %v3308, %v3376
        %v3409 = vadd.f32 %v3309, %v3377
        %v3410 = vadd.f32 %v3310, %v3378
        %v3411 = vadd.f32 %v3311, %v3379
        %v3412 = vadd.f32 %v3312, %v3380
        %v3413 = vadd.f32 %v3313, %v3381
        %v3414 = vadd.f32 %v3314, %v3382
        %v3415 = vadd.f32 %v3315, %v3383
        %v3416 = vadd.f32 %v3316, %v3384
        %v3417 = vadd.f32 %v3317, %v3385
        %v3418 = vadd.f32 %v3318, %v3386
        %v3419 = vadd.f32 %v3319, %v3387
        %v3420 = vadd.f32 %v3320, %v3388
        %v3421 = vadd.f32 %v3321, %v3389
        %v3422 = vadd.f32 %v3322, %v3390
        %v3423 = vadd.f32 %v3323, %v3391
        %v3424 = vadd.f32 %v3324, %v3392
        %v3425 = vadd.f32 %v3325, %v3393
        %v3426 = vadd.f32 %v3326, %v3394
        %v3427 = vadd.f32 %v3327, %v3395
        %v3428 = vadd.f32 %v3328, %v3396
        %v3429 = vadd.f32 %v3329, %v3397
        %v3430 = vadd.f32 %v3330, %v3398
        %s3431 = scalar_lea.vmem [#allocation2], 352
        %v3432 = vld [vmem:[%s3431] sm:$0xff]
        %v3433 = vld [vmem:[%s3431 + $0x10] sm:$0xff]
        %v3434 = vld [vmem:[%s3431 + $0x20] sm:$0xff]
        %v3435 = vld [vmem:[%s3431 + $0x30] sm:$0xff]
        %v3436 = vld [vmem:[%s3431 + $0x40] sm:$0xff]
        %v3437 = vld [vmem:[%s3431 + $0x50] sm:$0xff]
        %v3438 = vld [vmem:[%s3431 + $0x60] sm:$0xff]
        %v3439 = vld [vmem:[%s3431 + $0x70] sm:$0xff]
        %v3440 = vld [vmem:[%s3431 + $0xa0] sm:$0xff]
        %v3441 = vld [vmem:[%s3431 + $0xb0] sm:$0xff]
        %v3442 = vld [vmem:[%s3431 + $0xc0] sm:$0xff]
        %v3443 = vld [vmem:[%s3431 + $0xd0] sm:$0xff]
        %v3444 = vld [vmem:[%s3431 + $0xe0] sm:$0xff]
        %v3445 = vld [vmem:[%s3431 + $0xf0] sm:$0xff]
        %v3446 = vld [vmem:[%s3431 + $0x100] sm:$0xff]
        %v3447 = vld [vmem:[%s3431 + $0x110] sm:$0xff]
        %v3448 = vld [vmem:[%s3431 + $0x140] sm:$0xff]
        %v3449 = vld [vmem:[%s3431 + $0x150] sm:$0xff]
        %v3450 = vld [vmem:[%s3431 + $0x160] sm:$0xff]
        %v3451 = vld [vmem:[%s3431 + $0x170] sm:$0xff]
        %v3452 = vld [vmem:[%s3431 + $0x180] sm:$0xff]
        %v3453 = vld [vmem:[%s3431 + $0x190] sm:$0xff]
        %v3454 = vld [vmem:[%s3431 + $0x1a0] sm:$0xff]
        %v3455 = vld [vmem:[%s3431 + $0x1b0] sm:$0xff]
        %v3456 = vld [vmem:[%s3431 + $0x1e0] sm:$0xff]
        %v3457 = vld [vmem:[%s3431 + $0x1f0] sm:$0xff]
        %v3458 = vld [vmem:[%s3431 + $0x200] sm:$0xff]
        %v3459 = vld [vmem:[%s3431 + $0x210] sm:$0xff]
        %v3460 = vld [vmem:[%s3431 + $0x220] sm:$0xff]
        %v3461 = vld [vmem:[%s3431 + $0x230] sm:$0xff]
        %v3462 = vld [vmem:[%s3431 + $0x240] sm:$0xff]
        %v3463 = vld [vmem:[%s3431 + $0x250] sm:$0xff]
        %v3464 = vlaneseq
        %v3465 = vshrl.u32 %v3464, 7
        %v3466 = vsub.s32 0, %v3465
        %v3467 = vrot.slane %v1024, %v3466
        %v3468 = vmul.f32 %v3432, %v3467
        %v3469 = vmul.f32 %v3433, %v3467
        %v3470 = vmul.f32 %v3434, %v3467
        %v3471 = vmul.f32 %v3435, %v3467
        %v3472 = vmul.f32 %v3436, %v3467
        %v3473 = vmul.f32 %v3437, %v3467
        %v3474 = vmul.f32 %v3438, %v3467
        %v3475 = vmul.f32 %v3439, %v3467
        %v3476 = vmul.f32 %v3440, %v3467
        %v3477 = vmul.f32 %v3441, %v3467
        %v3478 = vmul.f32 %v3442, %v3467
        %v3479 = vmul.f32 %v3443, %v3467
        %v3480 = vmul.f32 %v3444, %v3467
        %v3481 = vmul.f32 %v3445, %v3467
        %v3482 = vmul.f32 %v3446, %v3467
        %v3483 = vmul.f32 %v3447, %v3467
        %v3484 = vmul.f32 %v3448, %v3467
        %v3485 = vmul.f32 %v3449, %v3467
        %v3486 = vmul.f32 %v3450, %v3467
        %v3487 = vmul.f32 %v3451, %v3467
        %v3488 = vmul.f32 %v3452, %v3467
        %v3489 = vmul.f32 %v3453, %v3467
        %v3490 = vmul.f32 %v3454, %v3467
        %v3491 = vmul.f32 %v3455, %v3467
        %v3492 = vmul.f32 %v3456, %v3467
        %v3493 = vmul.f32 %v3457, %v3467
        %v3494 = vmul.f32 %v3458, %v3467
        %v3495 = vmul.f32 %v3459, %v3467
        %v3496 = vmul.f32 %v3460, %v3467
        %v3497 = vmul.f32 %v3461, %v3467
        %v3498 = vmul.f32 %v3462, %v3467
        %v3499 = vmul.f32 %v3463, %v3467
        %v3500 = vadd.f32 %v3399, %v3468
        %v3501 = vadd.f32 %v3400, %v3469
        %v3502 = vadd.f32 %v3401, %v3470
        %v3503 = vadd.f32 %v3402, %v3471
        %v3504 = vadd.f32 %v3403, %v3472
        %v3505 = vadd.f32 %v3404, %v3473
        %v3506 = vadd.f32 %v3405, %v3474
        %v3507 = vadd.f32 %v3406, %v3475
        %v3508 = vadd.f32 %v3407, %v3476
        %v3509 = vadd.f32 %v3408, %v3477
        %v3510 = vadd.f32 %v3409, %v3478
        %v3511 = vadd.f32 %v3410, %v3479
        %v3512 = vadd.f32 %v3411, %v3480
        %v3513 = vadd.f32 %v3412, %v3481
        %v3514 = vadd.f32 %v3413, %v3482
        %v3515 = vadd.f32 %v3414, %v3483
        %v3516 = vadd.f32 %v3415, %v3484
        %v3517 = vadd.f32 %v3416, %v3485
        %v3518 = vadd.f32 %v3417, %v3486
        %v3519 = vadd.f32 %v3418, %v3487
        %v3520 = vadd.f32 %v3419, %v3488
        %v3521 = vadd.f32 %v3420, %v3489
        %v3522 = vadd.f32 %v3421, %v3490
        %v3523 = vadd.f32 %v3422, %v3491
        %v3524 = vadd.f32 %v3423, %v3492
        %v3525 = vadd.f32 %v3424, %v3493
        %v3526 = vadd.f32 %v3425, %v3494
        %v3527 = vadd.f32 %v3426, %v3495
        %v3528 = vadd.f32 %v3427, %v3496
        %v3529 = vadd.f32 %v3428, %v3497
        %v3530 = vadd.f32 %v3429, %v3498
        %v3531 = vadd.f32 %v3430, %v3499
        %v3532 = vld [vmem:[%s3431 + $0x1] sm:$0xff]
        %v3533 = vld [vmem:[%s3431 + $0x11] sm:$0xff]
        %v3534 = vld [vmem:[%s3431 + $0x21] sm:$0xff]
        %v3535 = vld [vmem:[%s3431 + $0x31] sm:$0xff]
        %v3536 = vld [vmem:[%s3431 + $0x41] sm:$0xff]
        %v3537 = vld [vmem:[%s3431 + $0x51] sm:$0xff]
        %v3538 = vld [vmem:[%s3431 + $0x61] sm:$0xff]
        %v3539 = vld [vmem:[%s3431 + $0x71] sm:$0xff]
        %v3540 = vld [vmem:[%s3431 + $0xa1] sm:$0xff]
        %v3541 = vld [vmem:[%s3431 + $0xb1] sm:$0xff]
        %v3542 = vld [vmem:[%s3431 + $0xc1] sm:$0xff]
        %v3543 = vld [vmem:[%s3431 + $0xd1] sm:$0xff]
        %v3544 = vld [vmem:[%s3431 + $0xe1] sm:$0xff]
        %v3545 = vld [vmem:[%s3431 + $0xf1] sm:$0xff]
        %v3546 = vld [vmem:[%s3431 + $0x101] sm:$0xff]
        %v3547 = vld [vmem:[%s3431 + $0x111] sm:$0xff]
        %v3548 = vld [vmem:[%s3431 + $0x141] sm:$0xff]
        %v3549 = vld [vmem:[%s3431 + $0x151] sm:$0xff]
        %v3550 = vld [vmem:[%s3431 + $0x161] sm:$0xff]
        %v3551 = vld [vmem:[%s3431 + $0x171] sm:$0xff]
        %v3552 = vld [vmem:[%s3431 + $0x181] sm:$0xff]
        %v3553 = vld [vmem:[%s3431 + $0x191] sm:$0xff]
        %v3554 = vld [vmem:[%s3431 + $0x1a1] sm:$0xff]
        %v3555 = vld [vmem:[%s3431 + $0x1b1] sm:$0xff]
        %v3556 = vld [vmem:[%s3431 + $0x1e1] sm:$0xff]
        %v3557 = vld [vmem:[%s3431 + $0x1f1] sm:$0xff]
        %v3558 = vld [vmem:[%s3431 + $0x201] sm:$0xff]
        %v3559 = vld [vmem:[%s3431 + $0x211] sm:$0xff]
        %v3560 = vld [vmem:[%s3431 + $0x221] sm:$0xff]
        %v3561 = vld [vmem:[%s3431 + $0x231] sm:$0xff]
        %v3562 = vld [vmem:[%s3431 + $0x241] sm:$0xff]
        %v3563 = vld [vmem:[%s3431 + $0x251] sm:$0xff]
        %v3564 = vlaneseq
        %v3565 = vshrl.u32 %v3564, 7
        %v3566 = vsub.s32 1, %v3565
        %v3567 = vrot.slane %v1024, %v3566
        %v3568 = vmul.f32 %v3532, %v3567
        %v3569 = vmul.f32 %v3533, %v3567
        %v3570 = vmul.f32 %v3534, %v3567
        %v3571 = vmul.f32 %v3535, %v3567
        %v3572 = vmul.f32 %v3536, %v3567
        %v3573 = vmul.f32 %v3537, %v3567
        %v3574 = vmul.f32 %v3538, %v3567
        %v3575 = vmul.f32 %v3539, %v3567
        %v3576 = vmul.f32 %v3540, %v3567
        %v3577 = vmul.f32 %v3541, %v3567
        %v3578 = vmul.f32 %v3542, %v3567
        %v3579 = vmul.f32 %v3543, %v3567
        %v3580 = vmul.f32 %v3544, %v3567
        %v3581 = vmul.f32 %v3545, %v3567
        %v3582 = vmul.f32 %v3546, %v3567
        %v3583 = vmul.f32 %v3547, %v3567
        %v3584 = vmul.f32 %v3548, %v3567
        %v3585 = vmul.f32 %v3549, %v3567
        %v3586 = vmul.f32 %v3550, %v3567
        %v3587 = vmul.f32 %v3551, %v3567
        %v3588 = vmul.f32 %v3552, %v3567
        %v3589 = vmul.f32 %v3553, %v3567
        %v3590 = vmul.f32 %v3554, %v3567
        %v3591 = vmul.f32 %v3555, %v3567
        %v3592 = vmul.f32 %v3556, %v3567
        %v3593 = vmul.f32 %v3557, %v3567
        %v3594 = vmul.f32 %v3558, %v3567
        %v3595 = vmul.f32 %v3559, %v3567
        %v3596 = vmul.f32 %v3560, %v3567
        %v3597 = vmul.f32 %v3561, %v3567
        %v3598 = vmul.f32 %v3562, %v3567
        %v3599 = vmul.f32 %v3563, %v3567
        %v3600 = vadd.f32 %v3500, %v3568
        %v3601 = vadd.f32 %v3501, %v3569
        %v3602 = vadd.f32 %v3502, %v3570
        %v3603 = vadd.f32 %v3503, %v3571
        %v3604 = vadd.f32 %v3504, %v3572
        %v3605 = vadd.f32 %v3505, %v3573
        %v3606 = vadd.f32 %v3506, %v3574
        %v3607 = vadd.f32 %v3507, %v3575
        %v3608 = vadd.f32 %v3508, %v3576
        %v3609 = vadd.f32 %v3509, %v3577
        %v3610 = vadd.f32 %v3510, %v3578
        %v3611 = vadd.f32 %v3511, %v3579
        %v3612 = vadd.f32 %v3512, %v3580
        %v3613 = vadd.f32 %v3513, %v3581
        %v3614 = vadd.f32 %v3514, %v3582
        %v3615 = vadd.f32 %v3515, %v3583
        %v3616 = vadd.f32 %v3516, %v3584
        %v3617 = vadd.f32 %v3517, %v3585
        %v3618 = vadd.f32 %v3518, %v3586
        %v3619 = vadd.f32 %v3519, %v3587
        %v3620 = vadd.f32 %v3520, %v3588
        %v3621 = vadd.f32 %v3521, %v3589
        %v3622 = vadd.f32 %v3522, %v3590
        %v3623 = vadd.f32 %v3523, %v3591
        %v3624 = vadd.f32 %v3524, %v3592
        %v3625 = vadd.f32 %v3525, %v3593
        %v3626 = vadd.f32 %v3526, %v3594
        %v3627 = vadd.f32 %v3527, %v3595
        %v3628 = vadd.f32 %v3528, %v3596
        %v3629 = vadd.f32 %v3529, %v3597
        %v3630 = vadd.f32 %v3530, %v3598
        %v3631 = vadd.f32 %v3531, %v3599
        %v3632 = vld [vmem:[%s3431 + $0x2] sm:$0xff]
        %v3633 = vld [vmem:[%s3431 + $0x12] sm:$0xff]
        %v3634 = vld [vmem:[%s3431 + $0x22] sm:$0xff]
        %v3635 = vld [vmem:[%s3431 + $0x32] sm:$0xff]
        %v3636 = vld [vmem:[%s3431 + $0x42] sm:$0xff]
        %v3637 = vld [vmem:[%s3431 + $0x52] sm:$0xff]
        %v3638 = vld [vmem:[%s3431 + $0x62] sm:$0xff]
        %v3639 = vld [vmem:[%s3431 + $0x72] sm:$0xff]
        %v3640 = vld [vmem:[%s3431 + $0xa2] sm:$0xff]
        %v3641 = vld [vmem:[%s3431 + $0xb2] sm:$0xff]
        %v3642 = vld [vmem:[%s3431 + $0xc2] sm:$0xff]
        %v3643 = vld [vmem:[%s3431 + $0xd2] sm:$0xff]
        %v3644 = vld [vmem:[%s3431 + $0xe2] sm:$0xff]
        %v3645 = vld [vmem:[%s3431 + $0xf2] sm:$0xff]
        %v3646 = vld [vmem:[%s3431 + $0x102] sm:$0xff]
        %v3647 = vld [vmem:[%s3431 + $0x112] sm:$0xff]
        %v3648 = vld [vmem:[%s3431 + $0x142] sm:$0xff]
        %v3649 = vld [vmem:[%s3431 + $0x152] sm:$0xff]
        %v3650 = vld [vmem:[%s3431 + $0x162] sm:$0xff]
        %v3651 = vld [vmem:[%s3431 + $0x172] sm:$0xff]
        %v3652 = vld [vmem:[%s3431 + $0x182] sm:$0xff]
        %v3653 = vld [vmem:[%s3431 + $0x192] sm:$0xff]
        %v3654 = vld [vmem:[%s3431 + $0x1a2] sm:$0xff]
        %v3655 = vld [vmem:[%s3431 + $0x1b2] sm:$0xff]
        %v3656 = vld [vmem:[%s3431 + $0x1e2] sm:$0xff]
        %v3657 = vld [vmem:[%s3431 + $0x1f2] sm:$0xff]
        %v3658 = vld [vmem:[%s3431 + $0x202] sm:$0xff]
        %v3659 = vld [vmem:[%s3431 + $0x212] sm:$0xff]
        %v3660 = vld [vmem:[%s3431 + $0x222] sm:$0xff]
        %v3661 = vld [vmem:[%s3431 + $0x232] sm:$0xff]
        %v3662 = vld [vmem:[%s3431 + $0x242] sm:$0xff]
        %v3663 = vld [vmem:[%s3431 + $0x252] sm:$0xff]
        %v3664 = vlaneseq
        %v3665 = vshrl.u32 %v3664, 7
        %v3666 = vsub.s32 2, %v3665
        %v3667 = vrot.slane %v1024, %v3666
        %v3668 = vmul.f32 %v3632, %v3667
        %v3669 = vmul.f32 %v3633, %v3667
        %v3670 = vmul.f32 %v3634, %v3667
        %v3671 = vmul.f32 %v3635, %v3667
        %v3672 = vmul.f32 %v3636, %v3667
        %v3673 = vmul.f32 %v3637, %v3667
        %v3674 = vmul.f32 %v3638, %v3667
        %v3675 = vmul.f32 %v3639, %v3667
        %v3676 = vmul.f32 %v3640, %v3667
        %v3677 = vmul.f32 %v3641, %v3667
        %v3678 = vmul.f32 %v3642, %v3667
        %v3679 = vmul.f32 %v3643, %v3667
        %v3680 = vmul.f32 %v3644, %v3667
        %v3681 = vmul.f32 %v3645, %v3667
        %v3682 = vmul.f32 %v3646, %v3667
        %v3683 = vmul.f32 %v3647, %v3667
        %v3684 = vmul.f32 %v3648, %v3667
        %v3685 = vmul.f32 %v3649, %v3667
        %v3686 = vmul.f32 %v3650, %v3667
        %v3687 = vmul.f32 %v3651, %v3667
        %v3688 = vmul.f32 %v3652, %v3667
        %v3689 = vmul.f32 %v3653, %v3667
        %v3690 = vmul.f32 %v3654, %v3667
        %v3691 = vmul.f32 %v3655, %v3667
        %v3692 = vmul.f32 %v3656, %v3667
        %v3693 = vmul.f32 %v3657, %v3667
        %v3694 = vmul.f32 %v3658, %v3667
        %v3695 = vmul.f32 %v3659, %v3667
        %v3696 = vmul.f32 %v3660, %v3667
        %v3697 = vmul.f32 %v3661, %v3667
        %v3698 = vmul.f32 %v3662, %v3667
        %v3699 = vmul.f32 %v3663, %v3667
        %v3700 = vadd.f32 %v3600, %v3668
        %v3701 = vadd.f32 %v3601, %v3669
        %v3702 = vadd.f32 %v3602, %v3670
        %v3703 = vadd.f32 %v3603, %v3671
        %v3704 = vadd.f32 %v3604, %v3672
        %v3705 = vadd.f32 %v3605, %v3673
        %v3706 = vadd.f32 %v3606, %v3674
        %v3707 = vadd.f32 %v3607, %v3675
        %v3708 = vadd.f32 %v3608, %v3676
        %v3709 = vadd.f32 %v3609, %v3677
        %v3710 = vadd.f32 %v3610, %v3678
        %v3711 = vadd.f32 %v3611, %v3679
        %v3712 = vadd.f32 %v3612, %v3680
        %v3713 = vadd.f32 %v3613, %v3681
        %v3714 = vadd.f32 %v3614, %v3682
        %v3715 = vadd.f32 %v3615, %v3683
        %v3716 = vadd.f32 %v3616, %v3684
        %v3717 = vadd.f32 %v3617, %v3685
        %v3718 = vadd.f32 %v3618, %v3686
        %v3719 = vadd.f32 %v3619, %v3687
        %v3720 = vadd.f32 %v3620, %v3688
        %v3721 = vadd.f32 %v3621, %v3689
        %v3722 = vadd.f32 %v3622, %v3690
        %v3723 = vadd.f32 %v3623, %v3691
        %v3724 = vadd.f32 %v3624, %v3692
        %v3725 = vadd.f32 %v3625, %v3693
        %v3726 = vadd.f32 %v3626, %v3694
        %v3727 = vadd.f32 %v3627, %v3695
        %v3728 = vadd.f32 %v3628, %v3696
        %v3729 = vadd.f32 %v3629, %v3697
        %v3730 = vadd.f32 %v3630, %v3698
        %v3731 = vadd.f32 %v3631, %v3699
        %v3732 = vld [vmem:[%s4] sm:$0x1]
        %v3734 = vlaneseq
        %v3735 = vshrl.u32 %v3734, 7
        %v3736 = vsub.s32 0, %v3735
        %v3737 = vrot.slane %v3732, %v3736
        %v3739 = vadd.f32 %v3700, %v3737
        %v3740 = vadd.f32 %v3701, %v3737
        %v3741 = vadd.f32 %v3702, %v3737
        %v3742 = vadd.f32 %v3703, %v3737
        %v3743 = vadd.f32 %v3704, %v3737
        %v3744 = vadd.f32 %v3705, %v3737
        %v3745 = vadd.f32 %v3706, %v3737
        %v3746 = vadd.f32 %v3707, %v3737
        %v3747 = vadd.f32 %v3708, %v3737
        %v3748 = vadd.f32 %v3709, %v3737
        %v3749 = vadd.f32 %v3710, %v3737
        %v3750 = vadd.f32 %v3711, %v3737
        %v3751 = vadd.f32 %v3712, %v3737
        %v3752 = vadd.f32 %v3713, %v3737
        %v3753 = vadd.f32 %v3714, %v3737
        %v3754 = vadd.f32 %v3715, %v3737
        %v3755 = vadd.f32 %v3716, %v3737
        %v3756 = vadd.f32 %v3717, %v3737
        %v3757 = vadd.f32 %v3718, %v3737
        %v3758 = vadd.f32 %v3719, %v3737
        %v3759 = vadd.f32 %v3720, %v3737
        %v3760 = vadd.f32 %v3721, %v3737
        %v3761 = vadd.f32 %v3722, %v3737
        %v3762 = vadd.f32 %v3723, %v3737
        %v3763 = vadd.f32 %v3724, %v3737
        %v3764 = vadd.f32 %v3725, %v3737
        %v3765 = vadd.f32 %v3726, %v3737
        %v3766 = vadd.f32 %v3727, %v3737
        %v3767 = vadd.f32 %v3728, %v3737
        %v3768 = vadd.f32 %v3729, %v3737
        %v3769 = vadd.f32 %v3730, %v3737
        %v3770 = vadd.f32 %v3731, %v3737
        %v3771 = vsel %vm799, %v3739, 0.0
        %v3772 = vsel %vm799, %v3740, 0.0
        %v3773 = vadd.f32 %v3771, %v3772
        %v3774 = vsel %vm799, %v3741, 0.0
        %v3775 = vadd.f32 %v3773, %v3774
        %v3776 = vsel %vm799, %v3742, 0.0
        %v3777 = vadd.f32 %v3775, %v3776
        %v3778 = vsel %vm799, %v3743, 0.0
        %v3779 = vadd.f32 %v3777, %v3778
        %v3780 = vsel %vm799, %v3744, 0.0
        %v3781 = vadd.f32 %v3779, %v3780
        %v3782 = vsel %vm799, %v3745, 0.0
        %v3783 = vadd.f32 %v3781, %v3782
        %v3784 = vsel %vm799, %v3746, 0.0
        %v3785 = vadd.f32 %v3783, %v3784
        %v3786 = vsel %vm799, %v3747, 0.0
        %v3787 = vadd.f32 %v3785, %v3786
        %v3788 = vsel %vm799, %v3748, 0.0
        %v3789 = vadd.f32 %v3787, %v3788
        %v3790 = vsel %vm799, %v3749, 0.0
        %v3791 = vadd.f32 %v3789, %v3790
        %v3792 = vsel %vm799, %v3750, 0.0
        %v3793 = vadd.f32 %v3791, %v3792
        %v3794 = vsel %vm799, %v3751, 0.0
        %v3795 = vadd.f32 %v3793, %v3794
        %v3796 = vsel %vm799, %v3752, 0.0
        %v3797 = vadd.f32 %v3795, %v3796
        %v3798 = vsel %vm799, %v3753, 0.0
        %v3799 = vadd.f32 %v3797, %v3798
        %v3800 = vsel %vm799, %v3754, 0.0
        %v3801 = vadd.f32 %v3799, %v3800
        %v3802 = vsel %vm799, %v3755, 0.0
        %v3803 = vadd.f32 %v3801, %v3802
        %v3804 = vsel %vm799, %v3756, 0.0
        %v3805 = vadd.f32 %v3803, %v3804
        %v3806 = vsel %vm799, %v3757, 0.0
        %v3807 = vadd.f32 %v3805, %v3806
        %v3808 = vsel %vm799, %v3758, 0.0
        %v3809 = vadd.f32 %v3807, %v3808
        %v3810 = vsel %vm799, %v3759, 0.0
        %v3811 = vadd.f32 %v3809, %v3810
        %v3812 = vsel %vm799, %v3760, 0.0
        %v3813 = vadd.f32 %v3811, %v3812
        %v3814 = vsel %vm799, %v3761, 0.0
        %v3815 = vadd.f32 %v3813, %v3814
        %v3816 = vsel %vm799, %v3762, 0.0
        %v3817 = vadd.f32 %v3815, %v3816
        %v3818 = vsel %vm799, %v3763, 0.0
        %v3819 = vadd.f32 %v3817, %v3818
        %v3820 = vsel %vm799, %v3764, 0.0
        %v3821 = vadd.f32 %v3819, %v3820
        %v3822 = vsel %vm799, %v3765, 0.0
        %v3823 = vadd.f32 %v3821, %v3822
        %v3824 = vsel %vm799, %v3766, 0.0
        %v3825 = vadd.f32 %v3823, %v3824
        %v3826 = vsel %vm799, %v3767, 0.0
        %v3827 = vadd.f32 %v3825, %v3826
        %v3828 = vsel %vm799, %v3768, 0.0
        %v3829 = vadd.f32 %v3827, %v3828
        %v3830 = vsel %vm799, %v3769, 0.0
        %v3831 = vadd.f32 %v3829, %v3830
        %v3832 = vsel %vm799, %v3770, 0.0
        %v3833 = vadd.f32 %v3831, %v3832
        %v3834 = vrot.slane %v3833, 4
        %v3835 = vadd.f32 %v3833, %v3834
        %v3836 = vrot.slane %v3835, 2
        %v3837 = vadd.f32 %v3835, %v3836
        %v3838 = vrot.slane %v3837, 1
        %v3839 = vadd.f32 %v3837, %v3838
        %v3840 = vrcp.pop 256.0
        %v3841 = vmul.f32 %v3839, %v3840
        %v3842 = vld [vmem:[%s5] sm:$0xff]
        %v3843 = vmul.f32 %v3842, %v3841
        %v3844 = vsel %vm799, %v3843, 0.0
        %3845 = vadd.xlane.f32.xlu0 %v3844
        %v3846 = vpop.xlane.xlu0 %3845
        %v3847 = vld [vmem:[%s6] sm:$0xff]
        %v3848 = vadd.f32 %v3846, %v3847
        %v3849 = vmax.f32 %v3848, 0.0
        %v3850 = vld [vmem:[%s7] sm:$0xff]
        %3852 = vset.pattern.permute.xlu0 0
        %3853 = vperm.xlu0 %3852, %v3849
        %v3854 = vpop.permute.xlu0 %3853
        %v3856 = vmul.f32 %v3850, %v3854
        %v3857 = vsel %vm799, %v3856, 0.0
        %v3858 = vrot.slane %v3857, 4
        %v3859 = vadd.f32 %v3857, %v3858
        %v3860 = vrot.slane %v3859, 2
        %v3861 = vadd.f32 %v3859, %v3860
        %v3862 = vrot.slane %v3861, 1
        %v3863 = vadd.f32 %v3861, %v3862
        %v3864 = vld [vmem:[%s8] sm:$0x1]
        %v3865 = vadd.f32 %v3863, %v3864
        %v3866 = vxor.u32 %v3865, 2147483648
        %v3867 = vmul.f32 %v3866, 1.442695
        %v3868 = vpow.pop %v3867
        %v3869 = vadd.f32 %v3868, 1.0
        %v3870 = vrcp.pop %v3869
        %v3871 = vmul.f32 1.0, %v3870
        %v3872 = vlaneseq
        %v3873 = vshrl.u32 %v3872, 7
        %v3874 = vsub.s32 0, %v3873
        %v3875 = vrot.slane %v3871, %v3874
        %v3876 = vmul.f32 %v3739, %v3875
        %v3877 = vmul.f32 %v3740, %v3875
        %v3878 = vmul.f32 %v3741, %v3875
        %v3879 = vmul.f32 %v3742, %v3875
        %v3880 = vmul.f32 %v3743, %v3875
        %v3881 = vmul.f32 %v3744, %v3875
        %v3882 = vmul.f32 %v3745, %v3875
        %v3883 = vmul.f32 %v3746, %v3875
        %v3884 = vmul.f32 %v3747, %v3875
        %v3885 = vmul.f32 %v3748, %v3875
        %v3886 = vmul.f32 %v3749, %v3875
        %v3887 = vmul.f32 %v3750, %v3875
        %v3888 = vmul.f32 %v3751, %v3875
        %v3889 = vmul.f32 %v3752, %v3875
        %v3890 = vmul.f32 %v3753, %v3875
        %v3891 = vmul.f32 %v3754, %v3875
        %v3892 = vmul.f32 %v3755, %v3875
        %v3893 = vmul.f32 %v3756, %v3875
        %v3894 = vmul.f32 %v3757, %v3875
        %v3895 = vmul.f32 %v3758, %v3875
        %v3896 = vmul.f32 %v3759, %v3875
        %v3897 = vmul.f32 %v3760, %v3875
        %v3898 = vmul.f32 %v3761, %v3875
        %v3899 = vmul.f32 %v3762, %v3875
        %v3900 = vmul.f32 %v3763, %v3875
        %v3901 = vmul.f32 %v3764, %v3875
        %v3902 = vmul.f32 %v3765, %v3875
        %v3903 = vmul.f32 %v3766, %v3875
        %v3904 = vmul.f32 %v3767, %v3875
        %v3905 = vmul.f32 %v3768, %v3875
        %v3906 = vmul.f32 %v3769, %v3875
        %v3907 = vmul.f32 %v3770, %v3875
        %v3908 = vxor.u32 %v3876, 2147483648
        %v3909 = vxor.u32 %v3877, 2147483648
        %v3910 = vxor.u32 %v3878, 2147483648
        %v3911 = vxor.u32 %v3879, 2147483648
        %v3912 = vxor.u32 %v3880, 2147483648
        %v3913 = vxor.u32 %v3881, 2147483648
        %v3914 = vxor.u32 %v3882, 2147483648
        %v3915 = vxor.u32 %v3883, 2147483648
        %v3916 = vxor.u32 %v3884, 2147483648
        %v3917 = vxor.u32 %v3885, 2147483648
        %v3918 = vxor.u32 %v3886, 2147483648
        %v3919 = vxor.u32 %v3887, 2147483648
        %v3920 = vxor.u32 %v3888, 2147483648
        %v3921 = vxor.u32 %v3889, 2147483648
        %v3922 = vxor.u32 %v3890, 2147483648
        %v3923 = vxor.u32 %v3891, 2147483648
        %v3924 = vxor.u32 %v3892, 2147483648
        %v3925 = vxor.u32 %v3893, 2147483648
        %v3926 = vxor.u32 %v3894, 2147483648
        %v3927 = vxor.u32 %v3895, 2147483648
        %v3928 = vxor.u32 %v3896, 2147483648
        %v3929 = vxor.u32 %v3897, 2147483648
        %v3930 = vxor.u32 %v3898, 2147483648
        %v3931 = vxor.u32 %v3899, 2147483648
        %v3932 = vxor.u32 %v3900, 2147483648
        %v3933 = vxor.u32 %v3901, 2147483648
        %v3934 = vxor.u32 %v3902, 2147483648
        %v3935 = vxor.u32 %v3903, 2147483648
        %v3936 = vxor.u32 %v3904, 2147483648
        %v3937 = vxor.u32 %v3905, 2147483648
        %v3938 = vxor.u32 %v3906, 2147483648
        %v3939 = vxor.u32 %v3907, 2147483648
        %v3940 = vmul.f32 %v3908, 1.442695
        %v3941 = vpow.pop %v3940
        %v3942 = vmul.f32 %v3909, 1.442695
        %v3943 = vpow.pop %v3942
        %v3944 = vmul.f32 %v3910, 1.442695
        %v3945 = vpow.pop %v3944
        %v3946 = vmul.f32 %v3911, 1.442695
        %v3947 = vpow.pop %v3946
        %v3948 = vmul.f32 %v3912, 1.442695
        %v3949 = vpow.pop %v3948
        %v3950 = vmul.f32 %v3913, 1.442695
        %v3951 = vpow.pop %v3950
        %v3952 = vmul.f32 %v3914, 1.442695
        %v3953 = vpow.pop %v3952
        %v3954 = vmul.f32 %v3915, 1.442695
        %v3955 = vpow.pop %v3954
        %v3956 = vmul.f32 %v3916, 1.442695
        %v3957 = vpow.pop %v3956
        %v3958 = vmul.f32 %v3917, 1.442695
        %v3959 = vpow.pop %v3958
        %v3960 = vmul.f32 %v3918, 1.442695
        %v3961 = vpow.pop %v3960
        %v3962 = vmul.f32 %v3919, 1.442695
        %v3963 = vpow.pop %v3962
        %v3964 = vmul.f32 %v3920, 1.442695
        %v3965 = vpow.pop %v3964
        %v3966 = vmul.f32 %v3921, 1.442695
        %v3967 = vpow.pop %v3966
        %v3968 = vmul.f32 %v3922, 1.442695
        %v3969 = vpow.pop %v3968
        %v3970 = vmul.f32 %v3923, 1.442695
        %v3971 = vpow.pop %v3970
        %v3972 = vmul.f32 %v3924, 1.442695
        %v3973 = vpow.pop %v3972
        %v3974 = vmul.f32 %v3925, 1.442695
        %v3975 = vpow.pop %v3974
        %v3976 = vmul.f32 %v3926, 1.442695
        %v3977 = vpow.pop %v3976
        %v3978 = vmul.f32 %v3927, 1.442695
        %v3979 = vpow.pop %v3978
        %v3980 = vmul.f32 %v3928, 1.442695
        %v3981 = vpow.pop %v3980
        %v3982 = vmul.f32 %v3929, 1.442695
        %v3983 = vpow.pop %v3982
        %v3984 = vmul.f32 %v3930, 1.442695
        %v3985 = vpow.pop %v3984
        %v3986 = vmul.f32 %v3931, 1.442695
        %v3987 = vpow.pop %v3986
        %v3988 = vmul.f32 %v3932, 1.442695
        %v3989 = vpow.pop %v3988
        %v3990 = vmul.f32 %v3933, 1.442695
        %v3991 = vpow.pop %v3990
        %v3992 = vmul.f32 %v3934, 1.442695
        %v3993 = vpow.pop %v3992
        %v3994 = vmul.f32 %v3935, 1.442695
        %v3995 = vpow.pop %v3994
        %v3996 = vmul.f32 %v3936, 1.442695
        %v3997 = vpow.pop %v3996
        %v3998 = vmul.f32 %v3937, 1.442695
        %v3999 = vpow.pop %v3998
        %v4000 = vmul.f32 %v3938, 1.442695
        %v4001 = vpow.pop %v4000
        %v4002 = vmul.f32 %v3939, 1.442695
        %v4003 = vpow.pop %v4002
        %v4004 = vadd.f32 %v3941, 1.0
        %v4005 = vadd.f32 %v3943, 1.0
        %v4006 = vadd.f32 %v3945, 1.0
        %v4007 = vadd.f32 %v3947, 1.0
        %v4008 = vadd.f32 %v3949, 1.0
        %v4009 = vadd.f32 %v3951, 1.0
        %v4010 = vadd.f32 %v3953, 1.0
        %v4011 = vadd.f32 %v3955, 1.0
        %v4012 = vadd.f32 %v3957, 1.0
        %v4013 = vadd.f32 %v3959, 1.0
        %v4014 = vadd.f32 %v3961, 1.0
        %v4015 = vadd.f32 %v3963, 1.0
        %v4016 = vadd.f32 %v3965, 1.0
        %v4017 = vadd.f32 %v3967, 1.0
        %v4018 = vadd.f32 %v3969, 1.0
        %v4019 = vadd.f32 %v3971, 1.0
        %v4020 = vadd.f32 %v3973, 1.0
        %v4021 = vadd.f32 %v3975, 1.0
        %v4022 = vadd.f32 %v3977, 1.0
        %v4023 = vadd.f32 %v3979, 1.0
        %v4024 = vadd.f32 %v3981, 1.0
        %v4025 = vadd.f32 %v3983, 1.0
        %v4026 = vadd.f32 %v3985, 1.0
        %v4027 = vadd.f32 %v3987, 1.0
        %v4028 = vadd.f32 %v3989, 1.0
        %v4029 = vadd.f32 %v3991, 1.0
        %v4030 = vadd.f32 %v3993, 1.0
        %v4031 = vadd.f32 %v3995, 1.0
        %v4032 = vadd.f32 %v3997, 1.0
        %v4033 = vadd.f32 %v3999, 1.0
        %v4034 = vadd.f32 %v4001, 1.0
        %v4035 = vadd.f32 %v4003, 1.0
        %v4036 = vrcp.pop %v4004
        %v4037 = vmul.f32 1.0, %v4036
        %v4038 = vrcp.pop %v4005
        %v4039 = vmul.f32 1.0, %v4038
        %v4040 = vrcp.pop %v4006
        %v4041 = vmul.f32 1.0, %v4040
        %v4042 = vrcp.pop %v4007
        %v4043 = vmul.f32 1.0, %v4042
        %v4044 = vrcp.pop %v4008
        %v4045 = vmul.f32 1.0, %v4044
        %v4046 = vrcp.pop %v4009
        %v4047 = vmul.f32 1.0, %v4046
        %v4048 = vrcp.pop %v4010
        %v4049 = vmul.f32 1.0, %v4048
        %v4050 = vrcp.pop %v4011
        %v4051 = vmul.f32 1.0, %v4050
        %v4052 = vrcp.pop %v4012
        %v4053 = vmul.f32 1.0, %v4052
        %v4054 = vrcp.pop %v4013
        %v4055 = vmul.f32 1.0, %v4054
        %v4056 = vrcp.pop %v4014
        %v4057 = vmul.f32 1.0, %v4056
        %v4058 = vrcp.pop %v4015
        %v4059 = vmul.f32 1.0, %v4058
        %v4060 = vrcp.pop %v4016
        %v4061 = vmul.f32 1.0, %v4060
        %v4062 = vrcp.pop %v4017
        %v4063 = vmul.f32 1.0, %v4062
        %v4064 = vrcp.pop %v4018
        %v4065 = vmul.f32 1.0, %v4064
        %v4066 = vrcp.pop %v4019
        %v4067 = vmul.f32 1.0, %v4066
        %v4068 = vrcp.pop %v4020
        %v4069 = vmul.f32 1.0, %v4068
        %v4070 = vrcp.pop %v4021
        %v4071 = vmul.f32 1.0, %v4070
        %v4072 = vrcp.pop %v4022
        %v4073 = vmul.f32 1.0, %v4072
        %v4074 = vrcp.pop %v4023
        %v4075 = vmul.f32 1.0, %v4074
        %v4076 = vrcp.pop %v4024
        %v4077 = vmul.f32 1.0, %v4076
        %v4078 = vrcp.pop %v4025
        %v4079 = vmul.f32 1.0, %v4078
        %v4080 = vrcp.pop %v4026
        %v4081 = vmul.f32 1.0, %v4080
        %v4082 = vrcp.pop %v4027
        %v4083 = vmul.f32 1.0, %v4082
        %v4084 = vrcp.pop %v4028
        %v4085 = vmul.f32 1.0, %v4084
        %v4086 = vrcp.pop %v4029
        %v4087 = vmul.f32 1.0, %v4086
        %v4088 = vrcp.pop %v4030
        %v4089 = vmul.f32 1.0, %v4088
        %v4090 = vrcp.pop %v4031
        %v4091 = vmul.f32 1.0, %v4090
        %v4092 = vrcp.pop %v4032
        %v4093 = vmul.f32 1.0, %v4092
        %v4094 = vrcp.pop %v4033
        %v4095 = vmul.f32 1.0, %v4094
        %v4096 = vrcp.pop %v4034
        %v4097 = vmul.f32 1.0, %v4096
        %v4098 = vrcp.pop %v4035
        %v4099 = vmul.f32 1.0, %v4098
        %v4100 = vmul.f32 %v3876, %v4037
        %v4101 = vmul.f32 %v3877, %v4039
        %v4102 = vmul.f32 %v3878, %v4041
        %v4103 = vmul.f32 %v3879, %v4043
        %v4104 = vmul.f32 %v3880, %v4045
        %v4105 = vmul.f32 %v3881, %v4047
        %v4106 = vmul.f32 %v3882, %v4049
        %v4107 = vmul.f32 %v3883, %v4051
        %v4108 = vmul.f32 %v3884, %v4053
        %v4109 = vmul.f32 %v3885, %v4055
        %v4110 = vmul.f32 %v3886, %v4057
        %v4111 = vmul.f32 %v3887, %v4059
        %v4112 = vmul.f32 %v3888, %v4061
        %v4113 = vmul.f32 %v3889, %v4063
        %v4114 = vmul.f32 %v3890, %v4065
        %v4115 = vmul.f32 %v3891, %v4067
        %v4116 = vmul.f32 %v3892, %v4069
        %v4117 = vmul.f32 %v3893, %v4071
        %v4118 = vmul.f32 %v3894, %v4073
        %v4119 = vmul.f32 %v3895, %v4075
        %v4120 = vmul.f32 %v3896, %v4077
        %v4121 = vmul.f32 %v3897, %v4079
        %v4122 = vmul.f32 %v3898, %v4081
        %v4123 = vmul.f32 %v3899, %v4083
        %v4124 = vmul.f32 %v3900, %v4085
        %v4125 = vmul.f32 %v3901, %v4087
        %v4126 = vmul.f32 %v3902, %v4089
        %v4127 = vmul.f32 %v3903, %v4091
        %v4128 = vmul.f32 %v3904, %v4093
        %v4129 = vmul.f32 %v3905, %v4095
        %v4130 = vmul.f32 %v3906, %v4097
        %v4131 = vmul.f32 %v3907, %v4099
        %v4132 = vld [vmem:[%s9] sm:$0xff]
        %v4133 = vld [vmem:[%s9 + $0x8] sm:$0xff]
        %v4134 = vld [vmem:[%s10] sm:$0x1]
        %v4136 = vlaneseq
        %v4137 = vshrl.u32 %v4136, 7
        %v4138 = vsub.s32 0, %v4137
        %v4139 = vrot.slane %v4134, %v4138
        %v4142 = vsel %vm799, %v4100, 0
        %v4145 = vsel %vm799, %v4101, 0
        %v4148 = vsel %vm799, %v4102, 0
        %v4151 = vsel %vm799, %v4103, 0
        %v4154 = vsel %vm799, %v4104, 0
        %v4157 = vsel %vm799, %v4105, 0
        %v4160 = vsel %vm799, %v4106, 0
        %v4163 = vsel %vm799, %v4107, 0
        %v4166 = vsel %vm799, %v4108, 0
        %v4169 = vsel %vm799, %v4109, 0
        %v4172 = vsel %vm799, %v4110, 0
        %v4175 = vsel %vm799, %v4111, 0
        %v4178 = vsel %vm799, %v4112, 0
        %v4181 = vsel %vm799, %v4113, 0
        %v4184 = vsel %vm799, %v4114, 0
        %v4187 = vsel %vm799, %v4115, 0
        %v4190 = vsel %vm799, %v4116, 0
        %v4193 = vsel %vm799, %v4117, 0
        %v4196 = vsel %vm799, %v4118, 0
        %v4199 = vsel %vm799, %v4119, 0
        %v4202 = vsel %vm799, %v4120, 0
        %v4205 = vsel %vm799, %v4121, 0
        %v4208 = vsel %vm799, %v4122, 0
        %v4211 = vsel %vm799, %v4123, 0
        %v4214 = vsel %vm799, %v4124, 0
        %v4217 = vsel %vm799, %v4125, 0
        %v4220 = vsel %vm799, %v4126, 0
        %v4223 = vsel %vm799, %v4127, 0
        %v4226 = vsel %vm799, %v4128, 0
        %v4229 = vsel %vm799, %v4129, 0
        %v4232 = vsel %vm799, %v4130, 0
        %v4235 = vsel %vm799, %v4131, 0
        %4237 = vmatprep.subr.mxu0 0.0
        %4238 = vmatpush1.msra.mxu0 %v4132
        %4239 = vmatprep.subr.mxu0 0.0
        %4240 = vmatpush1.msra.mxu0 %v4133
        %4241 = vmatprep.subr.mxu0 0.0
        %4242 = vmatpush1.msra.mxu0 0.0
        %4243 = vmatprep.subr.mxu0 0.0
        %4244 = vmatpush1.msra.mxu0 0.0
        %4245 = vmatprep.subr.mxu0 0.0
        %4246 = vmatpush1.msra.mxu0 0.0
        %4247 = vmatprep.subr.mxu0 0.0
        %4248 = vmatpush1.msra.mxu0 0.0
        %4249 = vmatprep.subr.mxu0 0.0
        %4250 = vmatpush1.msra.mxu0 0.0
        %4251 = vmatprep.subr.mxu0 0.0
        %4252 = vmatpush1.msra.mxu0 0.0
        %4253 = vmatprep.subr.mxu0 0.0
        %4254 = vmatpush1.msra.mxu0 0.0
        %4255 = vmatprep.subr.mxu0 0.0
        %4256 = vmatpush1.msra.mxu0 0.0
        %4257 = vmatprep.subr.mxu0 0.0
        %4258 = vmatpush1.msra.mxu0 0.0
        %4259 = vmatprep.subr.mxu0 0.0
        %4260 = vmatpush1.msra.mxu0 0.0
        %4261 = vmatprep.subr.mxu0 0.0
        %4262 = vmatpush1.msra.mxu0 0.0
        %4263 = vmatprep.subr.mxu0 0.0
        %4264 = vmatpush1.msra.mxu0 0.0
        %4265 = vmatprep.subr.mxu0 0.0
        %4266 = vmatpush1.msra.mxu0 0.0
        %4267 = vmatprep.subr.mxu0 0.0
        %4268 = vmatpush1.msra.mxu0 0.0
        %4269 = vmatprep.subr.mxu0 0.0
        %4270 = vmatpush1.msra.mxu0 0.0
        %4271 = vmatprep.subr.mxu0 0.0
        %4272 = vmatpush1.msra.mxu0 0.0
        %4273 = vmatprep.subr.mxu0 0.0
        %4274 = vmatpush1.msra.mxu0 0.0
        %4275 = vmatprep.subr.mxu0 0.0
        %4276 = vmatpush1.msra.mxu0 0.0
        %4277 = vmatprep.subr.mxu0 0.0
        %4278 = vmatpush1.msra.mxu0 0.0
        %4279 = vmatprep.subr.mxu0 0.0
        %4280 = vmatpush1.msra.mxu0 0.0
        %4281 = vmatprep.subr.mxu0 0.0
        %4282 = vmatpush1.msra.mxu0 0.0
        %4283 = vmatprep.subr.mxu0 0.0
        %4284 = vmatpush1.msra.mxu0 0.0
        %4285 = vmatprep.subr.mxu0 0.0
        %4286 = vmatpush1.msra.mxu0 0.0
        %4287 = vmatprep.subr.mxu0 0.0
        %4288 = vmatpush1.msra.mxu0 0.0
        %4289 = vmatprep.subr.mxu0 0.0
        %4290 = vmatpush1.msra.mxu0 0.0
        %4291 = vmatprep.subr.mxu0 0.0
        %4292 = vmatpush1.msra.mxu0 0.0
        %4293 = vmatprep.subr.mxu0 0.0
        %4294 = vmatpush1.msra.mxu0 0.0
        %4295 = vmatprep.subr.mxu0 0.0
        %4296 = vmatpush1.msra.mxu0 0.0
        %4297 = vmatprep.subr.mxu0 0.0
        %4298 = vmatpush1.msra.mxu0 0.0
        %4299 = vmatprep.subr.mxu0 0.0
        %4300 = vmatpush1.msra.mxu0 0.0
        %4301 = vmatprep.mubr.f32.mxu0 0.0
        %4302 = vmatmul.mubr.f32.gmra.mrb[0].mxu0 %v4142
        %v4303 = vpop.f32.mrb[0].mxu0
        %v4304 = vadd.f32 %v4139, %v4303
        %v4305 = vpop.f32.mrb[0].mxu0
        %4306 = vmatprep.mubr.f32.mxu0 0.0
        %4307 = vmatmul.mubr.f32.gmra.mrb[0].mxu0 %v4145
        %v4308 = vpop.f32.mrb[0].mxu0
        %v4309 = vadd.f32 %v4139, %v4308
        %v4310 = vpop.f32.mrb[0].mxu0
        %4311 = vmatprep.mubr.f32.mxu0 0.0
        %4312 = vmatmul.mubr.f32.gmra.mrb[0].mxu0 %v4148
        %v4313 = vpop.f32.mrb[0].mxu0
        %v4314 = vadd.f32 %v4139, %v4313
        %v4315 = vpop.f32.mrb[0].mxu0
        %4316 = vmatprep.mubr.f32.mxu0 0.0
        %4317 = vmatmul.mubr.f32.gmra.mrb[0].mxu0 %v4151
        %v4318 = vpop.f32.mrb[0].mxu0
        %v4319 = vadd.f32 %v4139, %v4318
        %v4320 = vpop.f32.mrb[0].mxu0
        %4321 = vmatprep.mubr.f32.mxu0 0.0
        %4322 = vmatmul.mubr.f32.gmra.mrb[0].mxu0 %v4154
        %v4323 = vpop.f32.mrb[0].mxu0
        %v4324 = vadd.f32 %v4139, %v4323
        %v4325 = vpop.f32.mrb[0].mxu0
        %4326 = vmatprep.mubr.f32.mxu0 0.0
        %4327 = vmatmul.mubr.f32.gmra.mrb[0].mxu0 %v4157
        %v4328 = vpop.f32.mrb[0].mxu0
        %v4329 = vadd.f32 %v4139, %v4328
        %v4330 = vpop.f32.mrb[0].mxu0
        %4331 = vmatprep.mubr.f32.mxu0 0.0
        %4332 = vmatmul.mubr.f32.gmra.mrb[0].mxu0 %v4160
        %v4333 = vpop.f32.mrb[0].mxu0
        %v4334 = vadd.f32 %v4139, %v4333
        %v4335 = vpop.f32.mrb[0].mxu0
        %4336 = vmatprep.mubr.f32.mxu0 0.0
        %4337 = vmatmul.mubr.f32.gmra.mrb[0].mxu0 %v4163
        %v4338 = vpop.f32.mrb[0].mxu0
        %v4339 = vadd.f32 %v4139, %v4338
        %v4340 = vpop.f32.mrb[0].mxu0
        %4341 = vmatprep.mubr.f32.mxu0 0.0
        %4342 = vmatmul.mubr.f32.gmra.mrb[0].mxu0 %v4166
        %v4343 = vpop.f32.mrb[0].mxu0
        %v4344 = vadd.f32 %v4139, %v4343
        %v4345 = vpop.f32.mrb[0].mxu0
        %4346 = vmatprep.mubr.f32.mxu0 0.0
        %4347 = vmatmul.mubr.f32.gmra.mrb[0].mxu0 %v4169
        %v4348 = vpop.f32.mrb[0].mxu0
        %v4349 = vadd.f32 %v4139, %v4348
        %v4350 = vpop.f32.mrb[0].mxu0
        %4351 = vmatprep.mubr.f32.mxu0 0.0
        %4352 = vmatmul.mubr.f32.gmra.mrb[0].mxu0 %v4172
        %v4353 = vpop.f32.mrb[0].mxu0
        %v4354 = vadd.f32 %v4139, %v4353
        %v4355 = vpop.f32.mrb[0].mxu0
        %4356 = vmatprep.mubr.f32.mxu0 0.0
        %4357 = vmatmul.mubr.f32.gmra.mrb[0].mxu0 %v4175
        %v4358 = vpop.f32.mrb[0].mxu0
        %v4359 = vadd.f32 %v4139, %v4358
        %v4360 = vpop.f32.mrb[0].mxu0
        %4361 = vmatprep.mubr.f32.mxu0 0.0
        %4362 = vmatmul.mubr.f32.gmra.mrb[0].mxu0 %v4178
        %v4363 = vpop.f32.mrb[0].mxu0
        %v4364 = vadd.f32 %v4139, %v4363
        %v4365 = vpop.f32.mrb[0].mxu0
        %4366 = vmatprep.mubr.f32.mxu0 0.0
        %4367 = vmatmul.mubr.f32.gmra.mrb[0].mxu0 %v4181
        %v4368 = vpop.f32.mrb[0].mxu0
        %v4369 = vadd.f32 %v4139, %v4368
        %v4370 = vpop.f32.mrb[0].mxu0
        %4371 = vmatprep.mubr.f32.mxu0 0.0
        %4372 = vmatmul.mubr.f32.gmra.mrb[0].mxu0 %v4184
        %v4373 = vpop.f32.mrb[0].mxu0
        %v4374 = vadd.f32 %v4139, %v4373
        %v4375 = vpop.f32.mrb[0].mxu0
        %4376 = vmatprep.mubr.f32.mxu0 0.0
        %4377 = vmatmul.mubr.f32.gmra.mrb[0].mxu0 %v4187
        %v4378 = vpop.f32.mrb[0].mxu0
        %v4379 = vadd.f32 %v4139, %v4378
        %v4380 = vpop.f32.mrb[0].mxu0
        %4381 = vmatprep.mubr.f32.mxu0 0.0
        %4382 = vmatmul.mubr.f32.gmra.mrb[0].mxu0 %v4190
        %v4383 = vpop.f32.mrb[0].mxu0
        %v4384 = vadd.f32 %v4139, %v4383
        %v4385 = vpop.f32.mrb[0].mxu0
        %4386 = vmatprep.mubr.f32.mxu0 0.0
        %4387 = vmatmul.mubr.f32.gmra.mrb[0].mxu0 %v4193
        %v4388 = vpop.f32.mrb[0].mxu0
        %v4389 = vadd.f32 %v4139, %v4388
        %v4390 = vpop.f32.mrb[0].mxu0
        %4391 = vmatprep.mubr.f32.mxu0 0.0
        %4392 = vmatmul.mubr.f32.gmra.mrb[0].mxu0 %v4196
        %v4393 = vpop.f32.mrb[0].mxu0
        %v4394 = vadd.f32 %v4139, %v4393
        %v4395 = vpop.f32.mrb[0].mxu0
        %4396 = vmatprep.mubr.f32.mxu0 0.0
        %4397 = vmatmul.mubr.f32.gmra.mrb[0].mxu0 %v4199
        %v4398 = vpop.f32.mrb[0].mxu0
        %v4399 = vadd.f32 %v4139, %v4398
        %v4400 = vpop.f32.mrb[0].mxu0
        %4401 = vmatprep.mubr.f32.mxu0 0.0
        %4402 = vmatmul.mubr.f32.gmra.mrb[0].mxu0 %v4202
        %v4403 = vpop.f32.mrb[0].mxu0
        %v4404 = vadd.f32 %v4139, %v4403
        %v4405 = vpop.f32.mrb[0].mxu0
        %4406 = vmatprep.mubr.f32.mxu0 0.0
        %4407 = vmatmul.mubr.f32.gmra.mrb[0].mxu0 %v4205
        %v4408 = vpop.f32.mrb[0].mxu0
        %v4409 = vadd.f32 %v4139, %v4408
        %v4410 = vpop.f32.mrb[0].mxu0
        %4411 = vmatprep.mubr.f32.mxu0 0.0
        %4412 = vmatmul.mubr.f32.gmra.mrb[0].mxu0 %v4208
        %v4413 = vpop.f32.mrb[0].mxu0
        %v4414 = vadd.f32 %v4139, %v4413
        %v4415 = vpop.f32.mrb[0].mxu0
        %4416 = vmatprep.mubr.f32.mxu0 0.0
        %4417 = vmatmul.mubr.f32.gmra.mrb[0].mxu0 %v4211
        %v4418 = vpop.f32.mrb[0].mxu0
        %v4419 = vadd.f32 %v4139, %v4418
        %v4420 = vpop.f32.mrb[0].mxu0
        %4421 = vmatprep.mubr.f32.mxu0 0.0
        %4422 = vmatmul.mubr.f32.gmra.mrb[0].mxu0 %v4214
        %v4423 = vpop.f32.mrb[0].mxu0
        %v4424 = vadd.f32 %v4139, %v4423
        %v4425 = vpop.f32.mrb[0].mxu0
        %4426 = vmatprep.mubr.f32.mxu0 0.0
        %4427 = vmatmul.mubr.f32.gmra.mrb[0].mxu0 %v4217
        %v4428 = vpop.f32.mrb[0].mxu0
        %v4429 = vadd.f32 %v4139, %v4428
        %v4430 = vpop.f32.mrb[0].mxu0
        %4431 = vmatprep.mubr.f32.mxu0 0.0
        %4432 = vmatmul.mubr.f32.gmra.mrb[0].mxu0 %v4220
        %v4433 = vpop.f32.mrb[0].mxu0
        %v4434 = vadd.f32 %v4139, %v4433
        %v4435 = vpop.f32.mrb[0].mxu0
        %4436 = vmatprep.mubr.f32.mxu0 0.0
        %4437 = vmatmul.mubr.f32.gmra.mrb[0].mxu0 %v4223
        %v4438 = vpop.f32.mrb[0].mxu0
        %v4439 = vadd.f32 %v4139, %v4438
        %v4440 = vpop.f32.mrb[0].mxu0
        %4441 = vmatprep.mubr.f32.mxu0 0.0
        %4442 = vmatmul.mubr.f32.gmra.mrb[0].mxu0 %v4226
        %v4443 = vpop.f32.mrb[0].mxu0
        %v4444 = vadd.f32 %v4139, %v4443
        %v4445 = vpop.f32.mrb[0].mxu0
        %4446 = vmatprep.mubr.f32.mxu0 0.0
        %4447 = vmatmul.mubr.f32.gmra.mrb[0].mxu0 %v4229
        %v4448 = vpop.f32.mrb[0].mxu0
        %v4449 = vadd.f32 %v4139, %v4448
        %v4450 = vpop.f32.mrb[0].mxu0
        %4451 = vmatprep.mubr.f32.mxu0 0.0
        %4452 = vmatmul.mubr.f32.gmra.mrb[0].mxu0 %v4232
        %v4453 = vpop.f32.mrb[0].mxu0
        %v4454 = vadd.f32 %v4139, %v4453
        %v4455 = vpop.f32.mrb[0].mxu0
        %4456 = vmatprep.mubr.f32.mxu0 0.0
        %4457 = vmatmul.mubr.f32.gmra.mrb[0].mxu0 %v4235
        %v4458 = vpop.f32.mrb[0].mxu0
        %v4459 = vadd.f32 %v4139, %v4458
        %v4460 = vpop.f32.mrb[0].mxu0
        %4461 = vdwg.mxu0
        %v4462 = vadd.f32 %v4304, %v405
        %v4463 = vadd.f32 %v4309, %v406
        %v4464 = vadd.f32 %v4314, %v407
        %v4465 = vadd.f32 %v4319, %v408
        %v4466 = vadd.f32 %v4324, %v409
        %v4467 = vadd.f32 %v4329, %v410
        %v4468 = vadd.f32 %v4334, %v411
        %v4469 = vadd.f32 %v4339, %v412
        %v4470 = vadd.f32 %v4344, %v413
        %v4471 = vadd.f32 %v4349, %v414
        %v4472 = vadd.f32 %v4354, %v415
        %v4473 = vadd.f32 %v4359, %v416
        %v4474 = vadd.f32 %v4364, %v417
        %v4475 = vadd.f32 %v4369, %v418
        %v4476 = vadd.f32 %v4374, %v419
        %v4477 = vadd.f32 %v4379, %v420
        %v4478 = vadd.f32 %v4384, %v421
        %v4479 = vadd.f32 %v4389, %v422
        %v4480 = vadd.f32 %v4394, %v423
        %v4481 = vadd.f32 %v4399, %v424
        %v4482 = vadd.f32 %v4404, %v425
        %v4483 = vadd.f32 %v4409, %v426
        %v4484 = vadd.f32 %v4414, %v427
        %v4485 = vadd.f32 %v4419, %v428
        %v4486 = vadd.f32 %v4424, %v429
        %v4487 = vadd.f32 %v4429, %v430
        %v4488 = vadd.f32 %v4434, %v431
        %v4489 = vadd.f32 %v4439, %v432
        %v4490 = vadd.f32 %v4444, %v433
        %v4491 = vadd.f32 %v4449, %v434
        %v4492 = vadd.f32 %v4454, %v435
        %v4493 = vadd.f32 %v4459, %v436
        %v4494 = vmax.f32 %v4462, 0.0
        %v4495 = vmax.f32 %v4463, 0.0
        %v4496 = vmax.f32 %v4464, 0.0
        %v4497 = vmax.f32 %v4465, 0.0
        %v4498 = vmax.f32 %v4466, 0.0
        %v4499 = vmax.f32 %v4467, 0.0
        %v4500 = vmax.f32 %v4468, 0.0
        %v4501 = vmax.f32 %v4469, 0.0
        %v4502 = vmax.f32 %v4470, 0.0
        %v4503 = vmax.f32 %v4471, 0.0
        %v4504 = vmax.f32 %v4472, 0.0
        %v4505 = vmax.f32 %v4473, 0.0
        %v4506 = vmax.f32 %v4474, 0.0
        %v4507 = vmax.f32 %v4475, 0.0
        %v4508 = vmax.f32 %v4476, 0.0
        %v4509 = vmax.f32 %v4477, 0.0
        %v4510 = vmax.f32 %v4478, 0.0
        %v4511 = vmax.f32 %v4479, 0.0
        %v4512 = vmax.f32 %v4480, 0.0
        %v4513 = vmax.f32 %v4481, 0.0
        %v4514 = vmax.f32 %v4482, 0.0
        %v4515 = vmax.f32 %v4483, 0.0
        %v4516 = vmax.f32 %v4484, 0.0
        %v4517 = vmax.f32 %v4485, 0.0
        %v4518 = vmax.f32 %v4486, 0.0
        %v4519 = vmax.f32 %v4487, 0.0
        %v4520 = vmax.f32 %v4488, 0.0
        %v4521 = vmax.f32 %v4489, 0.0
        %v4522 = vmax.f32 %v4490, 0.0
        %v4523 = vmax.f32 %v4491, 0.0
        %v4524 = vmax.f32 %v4492, 0.0
        %v4525 = vmax.f32 %v4493, 0.0
        %4526 = vst.msk [vmem:[%s404] sm:$0xff] %vm445, %v4494
        %4527 = vst.msk [vmem:[%s404 + $0x8] sm:$0xff] %vm445, %v4495
        %4528 = vst.msk [vmem:[%s404 + $0x10] sm:$0xff] %vm445, %v4496
        %4529 = vst.msk [vmem:[%s404 + $0x18] sm:$0xff] %vm445, %v4497
        %4530 = vst.msk [vmem:[%s404 + $0x20] sm:$0xff] %vm445, %v4498
        %4531 = vst.msk [vmem:[%s404 + $0x28] sm:$0xff] %vm445, %v4499
        %4532 = vst.msk [vmem:[%s404 + $0x30] sm:$0xff] %vm445, %v4500
        %4533 = vst.msk [vmem:[%s404 + $0x38] sm:$0xff] %vm445, %v4501
        %4534 = vst.msk [vmem:[%s404 + $0x40] sm:$0xff] %vm445, %v4502
        %4535 = vst.msk [vmem:[%s404 + $0x48] sm:$0xff] %vm445, %v4503
        %4536 = vst.msk [vmem:[%s404 + $0x50] sm:$0xff] %vm445, %v4504
        %4537 = vst.msk [vmem:[%s404 + $0x58] sm:$0xff] %vm445, %v4505
        %4538 = vst.msk [vmem:[%s404 + $0x60] sm:$0xff] %vm445, %v4506
        %4539 = vst.msk [vmem:[%s404 + $0x68] sm:$0xff] %vm445, %v4507
        %4540 = vst.msk [vmem:[%s404 + $0x70] sm:$0xff] %vm445, %v4508
        %4541 = vst.msk [vmem:[%s404 + $0x78] sm:$0xff] %vm445, %v4509
        %4542 = vst.msk [vmem:[%s404 + $0x80] sm:$0xff] %vm445, %v4510
        %4543 = vst.msk [vmem:[%s404 + $0x88] sm:$0xff] %vm445, %v4511
        %4544 = vst.msk [vmem:[%s404 + $0x90] sm:$0xff] %vm445, %v4512
        %4545 = vst.msk [vmem:[%s404 + $0x98] sm:$0xff] %vm445, %v4513
        %4546 = vst.msk [vmem:[%s404 + $0xa0] sm:$0xff] %vm445, %v4514
        %4547 = vst.msk [vmem:[%s404 + $0xa8] sm:$0xff] %vm445, %v4515
        %4548 = vst.msk [vmem:[%s404 + $0xb0] sm:$0xff] %vm445, %v4516
        %4549 = vst.msk [vmem:[%s404 + $0xb8] sm:$0xff] %vm445, %v4517
        %4550 = vst.msk [vmem:[%s404 + $0xc0] sm:$0xff] %vm445, %v4518
        %4551 = vst.msk [vmem:[%s404 + $0xc8] sm:$0xff] %vm445, %v4519
        %4552 = vst.msk [vmem:[%s404 + $0xd0] sm:$0xff] %vm445, %v4520
        %4553 = vst.msk [vmem:[%s404 + $0xd8] sm:$0xff] %vm445, %v4521
        %4554 = vst.msk [vmem:[%s404 + $0xe0] sm:$0xff] %vm445, %v4522
        %4555 = vst.msk [vmem:[%s404 + $0xe8] sm:$0xff] %vm445, %v4523
        %4556 = vst.msk [vmem:[%s404 + $0xf0] sm:$0xff] %vm445, %v4524
        %4557 = vst.msk [vmem:[%s404 + $0xf8] sm:$0xff] %vm445, %v4525
        %s4558 = sand.u32 %s272, 1
        %s4559 = scalar_lea.sflag [#allocation5], %s4558
        %s4560 = sand.u32 %s272, 1
        %s4561 = smul.addr %s4560, 256
        %s4562 = scalar_lea.vmem [#allocation6], %s4561
        // Predicated region
        $region69: #{tpu_custom_call.1} parent=63 // pred_check
          %p4563 = pneg %p282
        $region70: #{tpu_custom_call.1} parent=63 // pred_check_branch
          %4565 = sbr.rel (%p4563) target = $region72
        $region71: #{tpu_custom_call.1} parent=63 // pred_region
          %s4567 = ssub.s32 4096, 4096
          %4568 = vsyncadd %s4559, %s4567
          %s4569 = smul.addr %s28, 32
          %s4570 = smul.addr %s4569, 128
          %s4571 = scalar_lea.hbm %s11, %s4570
          %s4572 = sshll.u32 %s4562, 4
          %s4573 = int_to_ptr.vmem [resolvable:$true] %s4572
          %4578 = dma.vmem_to_hbm [thread:$0]  %s4573, 4096, %s4571, %s4559, 128, 128, 8
        $region72: #{tpu_custom_call.1} parent=63 // pred_fallthru
          _
      $region64: #{tpu_custom_call.1} parent=5 // pred_fallthru
        _
      %p4579 = scmp.le.s32.totalorder 2, %s23
      // Predicated region
      $region73: #{tpu_custom_call.1} parent=5 // pred_check
        %p4580 = pneg %p4579
      $region74: #{tpu_custom_call.1} parent=5 // pred_check_branch
        %4582 = sbr.rel (%p4580) target = $region76
      $region75: #{tpu_custom_call.1} parent=5 // pred_region
        %s4583 = ssub.s32 %s23, 2
        // Predicated region
        $region77: #{tpu_custom_call.1} parent=75 // pred_check
          %p4584 = pneg %p288
        $region78: #{tpu_custom_call.1} parent=75 // pred_check_branch
          %4586 = sbr.rel (%p4584) target = $region80
        $region79: #{tpu_custom_call.1} parent=75 // pred_region
          %s4587 = sand.u32 %s273, 1
          %s4588 = scalar_lea.sflag [#allocation5], %s4587
          %s4589 = sand.u32 %s273, 1
          %s4590 = smul.addr %s4589, 256
          %s4591 = scalar_lea.vmem [#allocation6], %s4590
          %4592 = dma.done %s4588, 4096
        $region80: #{tpu_custom_call.1} parent=75 // pred_fallthru
          _
      $region76: #{tpu_custom_call.1} parent=5 // pred_fallthru
        _
    $region6: #{tpu_custom_call.1} parent=1 // loop_footer
      %s27 = sadd.s32 1, %s23
    $region7: #{tpu_custom_call.1} parent=1 // loop_footer_branch
      %22 = sbr.rel target = $region3
    $region8: #{tpu_custom_call.1} parent=1 // loop_exit
      _
    %4593 = vsyncpa [#allocation4], 1
    %s4594 = scalar_lea.sflag [#allocation4], 1
    %4595 = vsyncpa %s4594, 1
    %4596 = vsyncpa [#allocation5], 1
    %s4597 = scalar_lea.sflag [#allocation5], 1
    %4598 = vsyncpa %s4597, 1

</llo_original>
